<compile_context>
chip_gen: v5e
topology: v5e:2x2
jax: 0.10.0
libtpu: 0.0.40
codegen_flags: <defaults>
</compile_context>

<pallas_src>
import functools
import numpy as np
import jax
import jax.numpy as jnp
from jax.experimental import pallas as pl
from jax.experimental.pallas import tpu as pltpu


# ----------------------------------------------------------------------------
# Skeleton one-ring adjacency (SMPL-style 24-joint kinematic tree).
# TODO(synk): exact getSkeletonOneRingIdx('human') table not available; a
# deterministic parent/children one-ring (padded with self) is used instead.
# ----------------------------------------------------------------------------
def skeleton_one_ring_idx(joint_num=24, k_neighbors=4):
    parents = [-1, 0, 0, 0, 1, 2, 3, 4, 5, 6, 7, 8,
               9, 9, 9, 12, 13, 14, 16, 17, 18, 19, 20, 21]
    assert joint_num == len(parents)
    idx = np.zeros((joint_num, k_neighbors), dtype=np.int32)
    for j in range(joint_num):
        nbrs = []
        if parents[j] >= 0:
            nbrs.append(parents[j])
        nbrs += [c for c in range(joint_num) if parents[c] == j]
        nbrs = nbrs[:k_neighbors]
        while len(nbrs) < k_neighbors:
            nbrs.append(j)  # pad with self -> (x_j - x_i) = 0 for padded slots
        idx[j] = nbrs
    return idx


def stacked_gather_matrix(idx, joint_num):
    # MM[k*N + n, m] = G_k[n, m] - I[n, m]  so that  (MM @ x)[k*N + n] = x[idx[n,k]] - x[n]
    k_neighbors = idx.shape[1]
    mm = np.zeros((k_neighbors, joint_num, joint_num), dtype=np.float32)
    for n in range(joint_num):
        for k in range(k_neighbors):
            mm[k, n, idx[n, k]] += 1.0
            mm[k, n, n] -= 1.0          # self-padded slots net to an all-zero row
    return mm.reshape(k_neighbors * joint_num, joint_num)


# ----------------------------------------------------------------------------
# Fused Pallas kernel: whole SkeletonResNetNet forward for one batch element.
# ----------------------------------------------------------------------------
def fused_net_kernel(*refs, num_blocks, num_layers, num_neighbors, joint_num,
                     negative_slope):
    # refs = (mm_ref, x_ref, *param_refs, o_ref)
    mm_ref = refs[0]                 # [K*N, N]   stacked (G_k - I)
    x_ref = refs[1]                  # [N, C_in]  (batch dim squeezed by BlockSpec)
    o_ref = refs[-1]                 # [N, C_out_last]
    p_refs = refs[2:-1]
    per_block = 3 * num_layers + num_layers + 5   # (w1,w2,b)*L + W1-splits*L + b1,W2,b2,W3,b3

    mm = mm_ref[...]
    x = x_ref[...]

    def lrelu(v):
        return jnp.maximum(v, negative_slope * v)

    def edgeconv(h, w1_ref, w2_ref, b_ref):
        # max_k[(h_nbr-h)@W1 + h@W2 + b] = max_k[M_k @ (h@W1)] + (h@W2 + b); lrelu after max.
        xw1 = jnp.dot(h, w1_ref[...], preferred_element_type=jnp.float32)      # [N, Co]
        center = jnp.dot(h, w2_ref[...], preferred_element_type=jnp.float32) + b_ref[...]
        stacked = jnp.dot(mm, xw1, preferred_element_type=jnp.float32)         # [K*N, Co]
        m = stacked[0:joint_num, :]
        for k in range(1, num_neighbors):
            m = jnp.maximum(m, stacked[k * joint_num:(k + 1) * joint_num, :])
        return lrelu(m + center)

    for blk in range(num_blocks):
        base = blk * per_block
        sk = p_refs[base: base + 3 * num_layers]
        mw1_parts = p_refs[base + 3 * num_layers: base + 4 * num_layers]
        mb1, mw2, mb2, mw3, mb3 = p_refs[base + 4 * num_layers: base + per_block]

        # SkeletonConv: 3 chained edge-convs; concat is folded into the first MLP matmul.
        feats = []
        h = x
        for l in range(num_layers):
            h = edgeconv(h, sk[3 * l], sk[3 * l + 1], sk[3 * l + 2])
            feats.append(h)

        # MLP of 1x1 convs (channels-last matmuls).
        y = mb1[...]
        for l in range(num_layers):
            y = y + jnp.dot(feats[l], mw1_parts[l][...],
                            preferred_element_type=jnp.float32)
        y = lrelu(y)
        y = lrelu(jnp.dot(y, mw2[...], preferred_element_type=jnp.float32) + mb2[...])
        y = jnp.dot(y, mw3[...], preferred_element_type=jnp.float32) + mb3[...]

        if blk < num_blocks - 1:
            x = x + y          # residual block:  x += block(x)
        else:
            x = y              # lastMlp (no residual)

    o_ref[...] = x.astype(o_ref.dtype)


# ----------------------------------------------------------------------------
# Parameters & wrapper
# ----------------------------------------------------------------------------
def init_params(key, in_channel, layers, res, hidden_res, hidden_last, out_last):
    params = []
    for i in range(res):
        last = (i == res - 1)
        sk = []
        c_in = in_channel
        for c_out in layers:
            key, k1, k2, k3 = jax.random.split(key, 4)
            s = 1.0 / np.sqrt(2.0 * c_in)
            w1 = s * jax.random.normal(k1, (c_in, c_out), jnp.float32)  # (x_nbr - x) half
            w2 = s * jax.random.normal(k2, (c_in, c_out), jnp.float32)  # x_center half
            b = s * jax.random.normal(k3, (1, c_out), jnp.float32)
            sk.append((w1, w2, b))
            c_in = c_out
        sum_l = sum(layers)
        dims = ([sum_l, hidden_res[0], hidden_res[1], in_channel] if not last
                else [sum_l, hidden_last[0], hidden_last[1], out_last])
        mlp = []
        for j in range(3):
            key, kw, kb = jax.random.split(key, 3)
            s = 1.0 / np.sqrt(dims[j])
            w = s * jax.random.normal(kw, (dims[j], dims[j + 1]), jnp.float32)
            b = s * jax.random.normal(kb, (1, dims[j + 1]), jnp.float32)
            mlp.append((w, b))
        params.append((sk, mlp))
    return params


def flatten_params_for_kernel(params, layers):
    # Splits each block's first MLP weight into per-feature-chunk row blocks so the
    # kernel never has to concatenate along the lane dimension.
    flat = []
    offs = np.cumsum([0] + list(layers))
    for (sk, mlp) in params:
        for (w1, w2, b) in sk:
            flat += [w1, w2, b]
        (w1m, b1m), (w2m, b2m), (w3m, b3m) = mlp
        for j in range(len(layers)):
            flat.append(w1m[offs[j]:offs[j + 1], :])
        flat += [b1m, w2m, b2m, w3m, b3m]
    return flat


def skeleton_resnet_forward(x_bcn, params, mm, layers, num_neighbors,
                            negative_slope=0.2):
    # x_bcn: PyTorch layout [B, C, N]  ->  [B, out_last, N]
    B, C, N = x_bcn.shape
    x_bnc = jnp.transpose(x_bcn, (0, 2, 1))          # channels-last [B, N, C]
    flat = flatten_params_for_kernel(params, layers)
    out_c = params[-1][1][-1][0].shape[1]            # last MLP's output channels

    kernel = functools.partial(
        fused_net_kernel,
        num_blocks=len(params), num_layers=len(layers),
        num_neighbors=num_neighbors, joint_num=N, negative_slope=negative_slope)

    in_specs = ([pl.BlockSpec(mm.shape, lambda b: (0, 0)),
                 pl.BlockSpec((None, N, C), lambda b: (b, 0, 0))]
                + [pl.BlockSpec(p.shape, lambda b: (0, 0)) for p in flat])

    out_bnc = pl.pallas_call(
        kernel,
        out_shape=jax.ShapeDtypeStruct((B, N, out_c), x_bcn.dtype),
        grid_spec=pltpu.PrefetchScalarGridSpec(
            num_scalar_prefetch=0,
            grid=(B,),
            in_specs=in_specs,
            out_specs=pl.BlockSpec((None, N, out_c), lambda b: (b, 0, 0)),
        ),
        compiler_params=pltpu.CompilerParams(dimension_semantics=("parallel",)),
    )(mm, x_bnc, *flat)

    return jnp.transpose(out_bnc, (0, 2, 1))          # back to [B, out_last, N]


# ----------------------------------------------------------------------------
# Pure-JAX reference (gather-based, mirrors the PyTorch module) for correctness.
# ----------------------------------------------------------------------------
def ref_forward(x_bcn, params, idx, negative_slope=0.2):
    def lrelu(v):
        return jnp.where(v > 0, v, negative_slope * v)

    x = jnp.transpose(x_bcn, (0, 2, 1))               # [B, N, C]
    nb = len(params)
    for i, (sk, mlp) in enumerate(params):
        h = x
        feats = []
        for (w1, w2, b) in sk:
            xn = h[:, idx, :]                          # [B, N, K, Cin]
            xi = h[:, :, None, :]
            e = (jnp.einsum("bnkc,co->bnko", xn - xi, w1)
                 + jnp.einsum("bnc,co->bno", h, w2)[:, :, None, :]
                 + b[0])
            e = lrelu(e)
            h = e.max(axis=2)
            feats.append(h)
        feat = jnp.concatenate(feats, axis=-1)
        (w1m, b1m), (w2m, b2m), (w3m, b3m) = mlp
        y = lrelu(feat @ w1m + b1m[0])
        y = lrelu(y @ w2m + b2m[0])
        y = y @ w3m + b3m[0]
        x = x + y if i < nb - 1 else y
    return jnp.transpose(x, (0, 2, 1))


if __name__ == "__main__":
    # Small, module-consistent shapes:
    #   batch=2, inChannel=32, res=3 (2 residual blocks + lastMlp),
    #   skeletonConvLayers=[16, 8, 8], 24 joints, K=4 one-ring neighbors,
    #   residual MLP 32->64->48->32, lastMlp 32->48->32->3.
    B, C_IN, N_JOINTS = 2, 32, 24
    RES = 3
    LAYERS = [16, 8, 8]
    K_NBR = 4
    HID_RES = (64, 48)
    HID_LAST = (48, 32)
    OUT_LAST = 3

    idx_np = skeleton_one_ring_idx(N_JOINTS, K_NBR)
    mm = jnp.asarray(stacked_gather_matrix(idx_np, N_JOINTS))
    idx = jnp.asarray(idx_np)

    key = jax.random.PRNGKey(0)
    key, kx = jax.random.split(key)
    x = jax.random.normal(kx, (B, C_IN, N_JOINTS), jnp.float32)  # PyTorch [B, C, N]
    params = init_params(key, C_IN, LAYERS, RES, HID_RES, HID_LAST, OUT_LAST)

    out = skeleton_resnet_forward(x, params, mm, LAYERS, K_NBR)
    out = jax.block_until_ready(out)
    assert out.shape == (B, OUT_LAST, N_JOINTS), out.shape

    ref = jax.block_until_ready(ref_forward(x, params, idx))
    np.testing.assert_allclose(np.asarray(out), np.asarray(ref), rtol=1e-4, atol=1e-4)

    print("KERNEL_OK")
</pallas_src>

<mosaic_0001>
module attributes {stable_mosaic.version = 11 : i64} {
  func.func @fused_net_kernel(%arg0: i32, %arg1: memref<96x24xf32, #tpu.memory_space<vmem>>, %arg2: memref<1x24x32xf32, #tpu.memory_space<vmem>>, %arg3: memref<32x16xf32, #tpu.memory_space<vmem>>, %arg4: memref<32x16xf32, #tpu.memory_space<vmem>>, %arg5: memref<1x16xf32, #tpu.memory_space<vmem>>, %arg6: memref<16x8xf32, #tpu.memory_space<vmem>>, %arg7: memref<16x8xf32, #tpu.memory_space<vmem>>, %arg8: memref<1x8xf32, #tpu.memory_space<vmem>>, %arg9: memref<8x8xf32, #tpu.memory_space<vmem>>, %arg10: memref<8x8xf32, #tpu.memory_space<vmem>>, %arg11: memref<1x8xf32, #tpu.memory_space<vmem>>, %arg12: memref<16x64xf32, #tpu.memory_space<vmem>>, %arg13: memref<8x64xf32, #tpu.memory_space<vmem>>, %arg14: memref<8x64xf32, #tpu.memory_space<vmem>>, %arg15: memref<1x64xf32, #tpu.memory_space<vmem>>, %arg16: memref<64x48xf32, #tpu.memory_space<vmem>>, %arg17: memref<1x48xf32, #tpu.memory_space<vmem>>, %arg18: memref<48x32xf32, #tpu.memory_space<vmem>>, %arg19: memref<1x32xf32, #tpu.memory_space<vmem>>, %arg20: memref<32x16xf32, #tpu.memory_space<vmem>>, %arg21: memref<32x16xf32, #tpu.memory_space<vmem>>, %arg22: memref<1x16xf32, #tpu.memory_space<vmem>>, %arg23: memref<16x8xf32, #tpu.memory_space<vmem>>, %arg24: memref<16x8xf32, #tpu.memory_space<vmem>>, %arg25: memref<1x8xf32, #tpu.memory_space<vmem>>, %arg26: memref<8x8xf32, #tpu.memory_space<vmem>>, %arg27: memref<8x8xf32, #tpu.memory_space<vmem>>, %arg28: memref<1x8xf32, #tpu.memory_space<vmem>>, %arg29: memref<16x64xf32, #tpu.memory_space<vmem>>, %arg30: memref<8x64xf32, #tpu.memory_space<vmem>>, %arg31: memref<8x64xf32, #tpu.memory_space<vmem>>, %arg32: memref<1x64xf32, #tpu.memory_space<vmem>>, %arg33: memref<64x48xf32, #tpu.memory_space<vmem>>, %arg34: memref<1x48xf32, #tpu.memory_space<vmem>>, %arg35: memref<48x32xf32, #tpu.memory_space<vmem>>, %arg36: memref<1x32xf32, #tpu.memory_space<vmem>>, %arg37: memref<32x16xf32, #tpu.memory_space<vmem>>, %arg38: memref<32x16xf32, #tpu.memory_space<vmem>>, %arg39: memref<1x16xf32, #tpu.memory_space<vmem>>, %arg40: memref<16x8xf32, #tpu.memory_space<vmem>>, %arg41: memref<16x8xf32, #tpu.memory_space<vmem>>, %arg42: memref<1x8xf32, #tpu.memory_space<vmem>>, %arg43: memref<8x8xf32, #tpu.memory_space<vmem>>, %arg44: memref<8x8xf32, #tpu.memory_space<vmem>>, %arg45: memref<1x8xf32, #tpu.memory_space<vmem>>, %arg46: memref<16x48xf32, #tpu.memory_space<vmem>>, %arg47: memref<8x48xf32, #tpu.memory_space<vmem>>, %arg48: memref<8x48xf32, #tpu.memory_space<vmem>>, %arg49: memref<1x48xf32, #tpu.memory_space<vmem>>, %arg50: memref<48x32xf32, #tpu.memory_space<vmem>>, %arg51: memref<1x32xf32, #tpu.memory_space<vmem>>, %arg52: memref<32x3xf32, #tpu.memory_space<vmem>>, %arg53: memref<1x3xf32, #tpu.memory_space<vmem>>, %arg54: memref<1x24x3xf32, #tpu.memory_space<vmem>>) attributes {dimension_semantics = [#tpu.dimension_semantics<parallel>], iteration_bounds = array<i64: 2>, scalar_prefetch = 0 : i64, scratch_operands = 0 : i64, tpu.core_type = #tpu.core_type<tc>, window_params = [{pipeline_mode = #tpu.pipeline_mode<synchronous>, transform_indices = @transform_0, window_bounds = array<i64: 96, 24>}, {transform_indices = @transform_1, window_bounds = array<i64: 1, 24, 32>}, {pipeline_mode = #tpu.pipeline_mode<synchronous>, transform_indices = @transform_2, window_bounds = array<i64: 32, 16>}, {pipeline_mode = #tpu.pipeline_mode<synchronous>, transform_indices = @transform_3, window_bounds = array<i64: 32, 16>}, {pipeline_mode = #tpu.pipeline_mode<synchronous>, transform_indices = @transform_4, window_bounds = array<i64: 1, 16>}, {pipeline_mode = #tpu.pipeline_mode<synchronous>, transform_indices = @transform_5, window_bounds = array<i64: 16, 8>}, {pipeline_mode = #tpu.pipeline_mode<synchronous>, transform_indices = @transform_6, window_bounds = array<i64: 16, 8>}, {pipeline_mode = #tpu.pipeline_mode<synchronous>, transform_indices = @transform_7, window_bounds = array<i64: 1, 8>}, {pipeline_mode = #tpu.pipeline_mode<synchronous>, transform_indices = @transform_8, window_bounds = array<i64: 8, 8>}, {pipeline_mode = #tpu.pipeline_mode<synchronous>, transform_indices = @transform_9, window_bounds = array<i64: 8, 8>}, {pipeline_mode = #tpu.pipeline_mode<synchronous>, transform_indices = @transform_10, window_bounds = array<i64: 1, 8>}, {pipeline_mode = #tpu.pipeline_mode<synchronous>, transform_indices = @transform_11, window_bounds = array<i64: 16, 64>}, {pipeline_mode = #tpu.pipeline_mode<synchronous>, transform_indices = @transform_12, window_bounds = array<i64: 8, 64>}, {pipeline_mode = #tpu.pipeline_mode<synchronous>, transform_indices = @transform_13, window_bounds = array<i64: 8, 64>}, {pipeline_mode = #tpu.pipeline_mode<synchronous>, transform_indices = @transform_14, window_bounds = array<i64: 1, 64>}, {pipeline_mode = #tpu.pipeline_mode<synchronous>, transform_indices = @transform_15, window_bounds = array<i64: 64, 48>}, {pipeline_mode = #tpu.pipeline_mode<synchronous>, transform_indices = @transform_16, window_bounds = array<i64: 1, 48>}, {pipeline_mode = #tpu.pipeline_mode<synchronous>, transform_indices = @transform_17, window_bounds = array<i64: 48, 32>}, {pipeline_mode = #tpu.pipeline_mode<synchronous>, transform_indices = @transform_18, window_bounds = array<i64: 1, 32>}, {pipeline_mode = #tpu.pipeline_mode<synchronous>, transform_indices = @transform_19, window_bounds = array<i64: 32, 16>}, {pipeline_mode = #tpu.pipeline_mode<synchronous>, transform_indices = @transform_20, window_bounds = array<i64: 32, 16>}, {pipeline_mode = #tpu.pipeline_mode<synchronous>, transform_indices = @transform_21, window_bounds = array<i64: 1, 16>}, {pipeline_mode = #tpu.pipeline_mode<synchronous>, transform_indices = @transform_22, window_bounds = array<i64: 16, 8>}, {pipeline_mode = #tpu.pipeline_mode<synchronous>, transform_indices = @transform_23, window_bounds = array<i64: 16, 8>}, {pipeline_mode = #tpu.pipeline_mode<synchronous>, transform_indices = @transform_24, window_bounds = array<i64: 1, 8>}, {pipeline_mode = #tpu.pipeline_mode<synchronous>, transform_indices = @transform_25, window_bounds = array<i64: 8, 8>}, {pipeline_mode = #tpu.pipeline_mode<synchronous>, transform_indices = @transform_26, window_bounds = array<i64: 8, 8>}, {pipeline_mode = #tpu.pipeline_mode<synchronous>, transform_indices = @transform_27, window_bounds = array<i64: 1, 8>}, {pipeline_mode = #tpu.pipeline_mode<synchronous>, transform_indices = @transform_28, window_bounds = array<i64: 16, 64>}, {pipeline_mode = #tpu.pipeline_mode<synchronous>, transform_indices = @transform_29, window_bounds = array<i64: 8, 64>}, {pipeline_mode = #tpu.pipeline_mode<synchronous>, transform_indices = @transform_30, window_bounds = array<i64: 8, 64>}, {pipeline_mode = #tpu.pipeline_mode<synchronous>, transform_indices = @transform_31, window_bounds = array<i64: 1, 64>}, {pipeline_mode = #tpu.pipeline_mode<synchronous>, transform_indices = @transform_32, window_bounds = array<i64: 64, 48>}, {pipeline_mode = #tpu.pipeline_mode<synchronous>, transform_indices = @transform_33, window_bounds = array<i64: 1, 48>}, {pipeline_mode = #tpu.pipeline_mode<synchronous>, transform_indices = @transform_34, window_bounds = array<i64: 48, 32>}, {pipeline_mode = #tpu.pipeline_mode<synchronous>, transform_indices = @transform_35, window_bounds = array<i64: 1, 32>}, {pipeline_mode = #tpu.pipeline_mode<synchronous>, transform_indices = @transform_36, window_bounds = array<i64: 32, 16>}, {pipeline_mode = #tpu.pipeline_mode<synchronous>, transform_indices = @transform_37, window_bounds = array<i64: 32, 16>}, {pipeline_mode = #tpu.pipeline_mode<synchronous>, transform_indices = @transform_38, window_bounds = array<i64: 1, 16>}, {pipeline_mode = #tpu.pipeline_mode<synchronous>, transform_indices = @transform_39, window_bounds = array<i64: 16, 8>}, {pipeline_mode = #tpu.pipeline_mode<synchronous>, transform_indices = @transform_40, window_bounds = array<i64: 16, 8>}, {pipeline_mode = #tpu.pipeline_mode<synchronous>, transform_indices = @transform_41, window_bounds = array<i64: 1, 8>}, {pipeline_mode = #tpu.pipeline_mode<synchronous>, transform_indices = @transform_42, window_bounds = array<i64: 8, 8>}, {pipeline_mode = #tpu.pipeline_mode<synchronous>, transform_indices = @transform_43, window_bounds = array<i64: 8, 8>}, {pipeline_mode = #tpu.pipeline_mode<synchronous>, transform_indices = @transform_44, window_bounds = array<i64: 1, 8>}, {pipeline_mode = #tpu.pipeline_mode<synchronous>, transform_indices = @transform_45, window_bounds = array<i64: 16, 48>}, {pipeline_mode = #tpu.pipeline_mode<synchronous>, transform_indices = @transform_46, window_bounds = array<i64: 8, 48>}, {pipeline_mode = #tpu.pipeline_mode<synchronous>, transform_indices = @transform_47, window_bounds = array<i64: 8, 48>}, {pipeline_mode = #tpu.pipeline_mode<synchronous>, transform_indices = @transform_48, window_bounds = array<i64: 1, 48>}, {pipeline_mode = #tpu.pipeline_mode<synchronous>, transform_indices = @transform_49, window_bounds = array<i64: 48, 32>}, {pipeline_mode = #tpu.pipeline_mode<synchronous>, transform_indices = @transform_50, window_bounds = array<i64: 1, 32>}, {pipeline_mode = #tpu.pipeline_mode<synchronous>, transform_indices = @transform_51, window_bounds = array<i64: 32, 3>}, {pipeline_mode = #tpu.pipeline_mode<synchronous>, transform_indices = @transform_52, window_bounds = array<i64: 1, 3>}, {transform_indices = @transform_53, window_bounds = array<i64: 1, 24, 3>}]} {
    %c0 = arith.constant 0 : index
    %c0_0 = arith.constant 0 : index
    %0 = vector.load %arg1[%c0, %c0_0] : memref<96x24xf32, #tpu.memory_space<vmem>>, vector<96x24xf32>
    %c0_1 = arith.constant 0 : index
    %c0_2 = arith.constant 0 : index
    %c0_3 = arith.constant 0 : index
    %1 = vector.load %arg2[%c0_1, %c0_2, %c0_3] : memref<1x24x32xf32, #tpu.memory_space<vmem>>, vector<1x24x32xf32>
    %2 = vector.shape_cast %1 : vector<1x24x32xf32> to vector<24x32xf32>
    %c0_4 = arith.constant 0 : index
    %c0_5 = arith.constant 0 : index
    %3 = vector.load %arg3[%c0_4, %c0_5] : memref<32x16xf32, #tpu.memory_space<vmem>>, vector<32x16xf32>
    %cst = arith.constant dense<0.000000e+00> : vector<24x16xf32>
    %4 = tpu.matmul %2, %3, %cst {dimension_numbers = #tpu.dot_dimension_numbers<[1], [0], [0], [1], [0, 0, 1, 1], [], []>} : vector<24x32xf32>, vector<32x16xf32>, vector<24x16xf32> -> vector<24x16xf32>
    %c0_6 = arith.constant 0 : index
    %c0_7 = arith.constant 0 : index
    %5 = vector.load %arg4[%c0_6, %c0_7] : memref<32x16xf32, #tpu.memory_space<vmem>>, vector<32x16xf32>
    %cst_8 = arith.constant dense<0.000000e+00> : vector<24x16xf32>
    %6 = tpu.matmul %2, %5, %cst_8 {dimension_numbers = #tpu.dot_dimension_numbers<[1], [0], [0], [1], [0, 0, 1, 1], [], []>} : vector<24x32xf32>, vector<32x16xf32>, vector<24x16xf32> -> vector<24x16xf32>
    %c0_9 = arith.constant 0 : index
    %c0_10 = arith.constant 0 : index
    %7 = vector.load %arg5[%c0_9, %c0_10] : memref<1x16xf32, #tpu.memory_space<vmem>>, vector<1x16xf32>
    %8 = vector.broadcast %7 : vector<1x16xf32> to vector<24x16xf32>
    %9 = arith.addf %6, %8 : vector<24x16xf32>
    %cst_11 = arith.constant dense<0.000000e+00> : vector<96x16xf32>
    %10 = tpu.matmul %0, %4, %cst_11 {dimension_numbers = #tpu.dot_dimension_numbers<[1], [0], [0], [1], [0, 0, 1, 1], [], []>} : vector<96x24xf32>, vector<24x16xf32>, vector<96x16xf32> -> vector<96x16xf32>
    %11 = vector.extract_strided_slice %10 {offsets = [0, 0], sizes = [24, 16], strides = [1, 1]} : vector<96x16xf32> to vector<24x16xf32>
    %12 = vector.extract_strided_slice %10 {offsets = [24, 0], sizes = [24, 16], strides = [1, 1]} : vector<96x16xf32> to vector<24x16xf32>
    %13 = arith.maximumf %11, %12 : vector<24x16xf32>
    %14 = vector.extract_strided_slice %10 {offsets = [48, 0], sizes = [24, 16], strides = [1, 1]} : vector<96x16xf32> to vector<24x16xf32>
    %15 = arith.maximumf %13, %14 : vector<24x16xf32>
    %16 = vector.extract_strided_slice %10 {offsets = [72, 0], sizes = [24, 16], strides = [1, 1]} : vector<96x16xf32> to vector<24x16xf32>
    %17 = arith.maximumf %15, %16 : vector<24x16xf32>
    %18 = arith.addf %17, %9 : vector<24x16xf32>
    %cst_12 = arith.constant 2.000000e-01 : f32
    %19 = vector.broadcast %cst_12 : f32 to vector<24x16xf32>
    %20 = arith.mulf %19, %18 : vector<24x16xf32>
    %21 = arith.maximumf %18, %20 : vector<24x16xf32>
    %c0_13 = arith.constant 0 : index
    %c0_14 = arith.constant 0 : index
    %22 = vector.load %arg6[%c0_13, %c0_14] : memref<16x8xf32, #tpu.memory_space<vmem>>, vector<16x8xf32>
    %cst_15 = arith.constant dense<0.000000e+00> : vector<24x8xf32>
    %23 = tpu.matmul %21, %22, %cst_15 {dimension_numbers = #tpu.dot_dimension_numbers<[1], [0], [0], [1], [0, 0, 1, 1], [], []>} : vector<24x16xf32>, vector<16x8xf32>, vector<24x8xf32> -> vector<24x8xf32>
    %c0_16 = arith.constant 0 : index
    %c0_17 = arith.constant 0 : index
    %24 = vector.load %arg7[%c0_16, %c0_17] : memref<16x8xf32, #tpu.memory_space<vmem>>, vector<16x8xf32>
    %cst_18 = arith.constant dense<0.000000e+00> : vector<24x8xf32>
    %25 = tpu.matmul %21, %24, %cst_18 {dimension_numbers = #tpu.dot_dimension_numbers<[1], [0], [0], [1], [0, 0, 1, 1], [], []>} : vector<24x16xf32>, vector<16x8xf32>, vector<24x8xf32> -> vector<24x8xf32>
    %c0_19 = arith.constant 0 : index
    %c0_20 = arith.constant 0 : index
    %26 = vector.load %arg8[%c0_19, %c0_20] : memref<1x8xf32, #tpu.memory_space<vmem>>, vector<1x8xf32>
    %27 = vector.broadcast %26 : vector<1x8xf32> to vector<24x8xf32>
    %28 = arith.addf %25, %27 : vector<24x8xf32>
    %cst_21 = arith.constant dense<0.000000e+00> : vector<96x8xf32>
    %29 = tpu.matmul %0, %23, %cst_21 {dimension_numbers = #tpu.dot_dimension_numbers<[1], [0], [0], [1], [0, 0, 1, 1], [], []>} : vector<96x24xf32>, vector<24x8xf32>, vector<96x8xf32> -> vector<96x8xf32>
    %30 = vector.extract_strided_slice %29 {offsets = [0, 0], sizes = [24, 8], strides = [1, 1]} : vector<96x8xf32> to vector<24x8xf32>
    %31 = vector.extract_strided_slice %29 {offsets = [24, 0], sizes = [24, 8], strides = [1, 1]} : vector<96x8xf32> to vector<24x8xf32>
    %32 = arith.maximumf %30, %31 : vector<24x8xf32>
    %33 = vector.extract_strided_slice %29 {offsets = [48, 0], sizes = [24, 8], strides = [1, 1]} : vector<96x8xf32> to vector<24x8xf32>
    %34 = arith.maximumf %32, %33 : vector<24x8xf32>
    %35 = vector.extract_strided_slice %29 {offsets = [72, 0], sizes = [24, 8], strides = [1, 1]} : vector<96x8xf32> to vector<24x8xf32>
    %36 = arith.maximumf %34, %35 : vector<24x8xf32>
    %37 = arith.addf %36, %28 : vector<24x8xf32>
    %cst_22 = arith.constant 2.000000e-01 : f32
    %38 = vector.broadcast %cst_22 : f32 to vector<24x8xf32>
    %39 = arith.mulf %38, %37 : vector<24x8xf32>
    %40 = arith.maximumf %37, %39 : vector<24x8xf32>
    %c0_23 = arith.constant 0 : index
    %c0_24 = arith.constant 0 : index
    %41 = vector.load %arg9[%c0_23, %c0_24] : memref<8x8xf32, #tpu.memory_space<vmem>>, vector<8x8xf32>
    %cst_25 = arith.constant dense<0.000000e+00> : vector<24x8xf32>
    %42 = tpu.matmul %40, %41, %cst_25 {dimension_numbers = #tpu.dot_dimension_numbers<[1], [0], [0], [1], [0, 0, 1, 1], [], []>} : vector<24x8xf32>, vector<8x8xf32>, vector<24x8xf32> -> vector<24x8xf32>
    %c0_26 = arith.constant 0 : index
    %c0_27 = arith.constant 0 : index
    %43 = vector.load %arg10[%c0_26, %c0_27] : memref<8x8xf32, #tpu.memory_space<vmem>>, vector<8x8xf32>
    %cst_28 = arith.constant dense<0.000000e+00> : vector<24x8xf32>
    %44 = tpu.matmul %40, %43, %cst_28 {dimension_numbers = #tpu.dot_dimension_numbers<[1], [0], [0], [1], [0, 0, 1, 1], [], []>} : vector<24x8xf32>, vector<8x8xf32>, vector<24x8xf32> -> vector<24x8xf32>
    %c0_29 = arith.constant 0 : index
    %c0_30 = arith.constant 0 : index
    %45 = vector.load %arg11[%c0_29, %c0_30] : memref<1x8xf32, #tpu.memory_space<vmem>>, vector<1x8xf32>
    %46 = vector.broadcast %45 : vector<1x8xf32> to vector<24x8xf32>
    %47 = arith.addf %44, %46 : vector<24x8xf32>
    %cst_31 = arith.constant dense<0.000000e+00> : vector<96x8xf32>
    %48 = tpu.matmul %0, %42, %cst_31 {dimension_numbers = #tpu.dot_dimension_numbers<[1], [0], [0], [1], [0, 0, 1, 1], [], []>} : vector<96x24xf32>, vector<24x8xf32>, vector<96x8xf32> -> vector<96x8xf32>
    %49 = vector.extract_strided_slice %48 {offsets = [0, 0], sizes = [24, 8], strides = [1, 1]} : vector<96x8xf32> to vector<24x8xf32>
    %50 = vector.extract_strided_slice %48 {offsets = [24, 0], sizes = [24, 8], strides = [1, 1]} : vector<96x8xf32> to vector<24x8xf32>
    %51 = arith.maximumf %49, %50 : vector<24x8xf32>
    %52 = vector.extract_strided_slice %48 {offsets = [48, 0], sizes = [24, 8], strides = [1, 1]} : vector<96x8xf32> to vector<24x8xf32>
    %53 = arith.maximumf %51, %52 : vector<24x8xf32>
    %54 = vector.extract_strided_slice %48 {offsets = [72, 0], sizes = [24, 8], strides = [1, 1]} : vector<96x8xf32> to vector<24x8xf32>
    %55 = arith.maximumf %53, %54 : vector<24x8xf32>
    %56 = arith.addf %55, %47 : vector<24x8xf32>
    %cst_32 = arith.constant 2.000000e-01 : f32
    %57 = vector.broadcast %cst_32 : f32 to vector<24x8xf32>
    %58 = arith.mulf %57, %56 : vector<24x8xf32>
    %59 = arith.maximumf %56, %58 : vector<24x8xf32>
    %c0_33 = arith.constant 0 : index
    %c0_34 = arith.constant 0 : index
    %60 = vector.load %arg15[%c0_33, %c0_34] : memref<1x64xf32, #tpu.memory_space<vmem>>, vector<1x64xf32>
    %c0_35 = arith.constant 0 : index
    %c0_36 = arith.constant 0 : index
    %61 = vector.load %arg12[%c0_35, %c0_36] : memref<16x64xf32, #tpu.memory_space<vmem>>, vector<16x64xf32>
    %cst_37 = arith.constant dense<0.000000e+00> : vector<24x64xf32>
    %62 = tpu.matmul %21, %61, %cst_37 {dimension_numbers = #tpu.dot_dimension_numbers<[1], [0], [0], [1], [0, 0, 1, 1], [], []>} : vector<24x16xf32>, vector<16x64xf32>, vector<24x64xf32> -> vector<24x64xf32>
    %63 = vector.broadcast %60 : vector<1x64xf32> to vector<24x64xf32>
    %64 = arith.addf %63, %62 : vector<24x64xf32>
    %c0_38 = arith.constant 0 : index
    %c0_39 = arith.constant 0 : index
    %65 = vector.load %arg13[%c0_38, %c0_39] : memref<8x64xf32, #tpu.memory_space<vmem>>, vector<8x64xf32>
    %cst_40 = arith.constant dense<0.000000e+00> : vector<24x64xf32>
    %66 = tpu.matmul %40, %65, %cst_40 {dimension_numbers = #tpu.dot_dimension_numbers<[1], [0], [0], [1], [0, 0, 1, 1], [], []>} : vector<24x8xf32>, vector<8x64xf32>, vector<24x64xf32> -> vector<24x64xf32>
    %67 = arith.addf %64, %66 : vector<24x64xf32>
    %c0_41 = arith.constant 0 : index
    %c0_42 = arith.constant 0 : index
    %68 = vector.load %arg14[%c0_41, %c0_42] : memref<8x64xf32, #tpu.memory_space<vmem>>, vector<8x64xf32>
    %cst_43 = arith.constant dense<0.000000e+00> : vector<24x64xf32>
    %69 = tpu.matmul %59, %68, %cst_43 {dimension_numbers = #tpu.dot_dimension_numbers<[1], [0], [0], [1], [0, 0, 1, 1], [], []>} : vector<24x8xf32>, vector<8x64xf32>, vector<24x64xf32> -> vector<24x64xf32>
    %70 = arith.addf %67, %69 : vector<24x64xf32>
    %cst_44 = arith.constant 2.000000e-01 : f32
    %71 = vector.broadcast %cst_44 : f32 to vector<24x64xf32>
    %72 = arith.mulf %71, %70 : vector<24x64xf32>
    %73 = arith.maximumf %70, %72 : vector<24x64xf32>
    %c0_45 = arith.constant 0 : index
    %c0_46 = arith.constant 0 : index
    %74 = vector.load %arg16[%c0_45, %c0_46] : memref<64x48xf32, #tpu.memory_space<vmem>>, vector<64x48xf32>
    %cst_47 = arith.constant dense<0.000000e+00> : vector<24x48xf32>
    %75 = tpu.matmul %73, %74, %cst_47 {dimension_numbers = #tpu.dot_dimension_numbers<[1], [0], [0], [1], [0, 0, 1, 1], [], []>} : vector<24x64xf32>, vector<64x48xf32>, vector<24x48xf32> -> vector<24x48xf32>
    %c0_48 = arith.constant 0 : index
    %c0_49 = arith.constant 0 : index
    %76 = vector.load %arg17[%c0_48, %c0_49] : memref<1x48xf32, #tpu.memory_space<vmem>>, vector<1x48xf32>
    %77 = vector.broadcast %76 : vector<1x48xf32> to vector<24x48xf32>
    %78 = arith.addf %75, %77 : vector<24x48xf32>
    %cst_50 = arith.constant 2.000000e-01 : f32
    %79 = vector.broadcast %cst_50 : f32 to vector<24x48xf32>
    %80 = arith.mulf %79, %78 : vector<24x48xf32>
    %81 = arith.maximumf %78, %80 : vector<24x48xf32>
    %c0_51 = arith.constant 0 : index
    %c0_52 = arith.constant 0 : index
    %82 = vector.load %arg18[%c0_51, %c0_52] : memref<48x32xf32, #tpu.memory_space<vmem>>, vector<48x32xf32>
    %cst_53 = arith.constant dense<0.000000e+00> : vector<24x32xf32>
    %83 = tpu.matmul %81, %82, %cst_53 {dimension_numbers = #tpu.dot_dimension_numbers<[1], [0], [0], [1], [0, 0, 1, 1], [], []>} : vector<24x48xf32>, vector<48x32xf32>, vector<24x32xf32> -> vector<24x32xf32>
    %c0_54 = arith.constant 0 : index
    %c0_55 = arith.constant 0 : index
    %84 = vector.load %arg19[%c0_54, %c0_55] : memref<1x32xf32, #tpu.memory_space<vmem>>, vector<1x32xf32>
    %85 = vector.broadcast %84 : vector<1x32xf32> to vector<24x32xf32>
    %86 = arith.addf %83, %85 : vector<24x32xf32>
    %87 = arith.addf %2, %86 : vector<24x32xf32>
    %c0_56 = arith.constant 0 : index
    %c0_57 = arith.constant 0 : index
    %88 = vector.load %arg20[%c0_56, %c0_57] : memref<32x16xf32, #tpu.memory_space<vmem>>, vector<32x16xf32>
    %cst_58 = arith.constant dense<0.000000e+00> : vector<24x16xf32>
    %89 = tpu.matmul %87, %88, %cst_58 {dimension_numbers = #tpu.dot_dimension_numbers<[1], [0], [0], [1], [0, 0, 1, 1], [], []>} : vector<24x32xf32>, vector<32x16xf32>, vector<24x16xf32> -> vector<24x16xf32>
    %c0_59 = arith.constant 0 : index
    %c0_60 = arith.constant 0 : index
    %90 = vector.load %arg21[%c0_59, %c0_60] : memref<32x16xf32, #tpu.memory_space<vmem>>, vector<32x16xf32>
    %cst_61 = arith.constant dense<0.000000e+00> : vector<24x16xf32>
    %91 = tpu.matmul %87, %90, %cst_61 {dimension_numbers = #tpu.dot_dimension_numbers<[1], [0], [0], [1], [0, 0, 1, 1], [], []>} : vector<24x32xf32>, vector<32x16xf32>, vector<24x16xf32> -> vector<24x16xf32>
    %c0_62 = arith.constant 0 : index
    %c0_63 = arith.constant 0 : index
    %92 = vector.load %arg22[%c0_62, %c0_63] : memref<1x16xf32, #tpu.memory_space<vmem>>, vector<1x16xf32>
    %93 = vector.broadcast %92 : vector<1x16xf32> to vector<24x16xf32>
    %94 = arith.addf %91, %93 : vector<24x16xf32>
    %cst_64 = arith.constant dense<0.000000e+00> : vector<96x16xf32>
    %95 = tpu.matmul %0, %89, %cst_64 {dimension_numbers = #tpu.dot_dimension_numbers<[1], [0], [0], [1], [0, 0, 1, 1], [], []>} : vector<96x24xf32>, vector<24x16xf32>, vector<96x16xf32> -> vector<96x16xf32>
    %96 = vector.extract_strided_slice %95 {offsets = [0, 0], sizes = [24, 16], strides = [1, 1]} : vector<96x16xf32> to vector<24x16xf32>
    %97 = vector.extract_strided_slice %95 {offsets = [24, 0], sizes = [24, 16], strides = [1, 1]} : vector<96x16xf32> to vector<24x16xf32>
    %98 = arith.maximumf %96, %97 : vector<24x16xf32>
    %99 = vector.extract_strided_slice %95 {offsets = [48, 0], sizes = [24, 16], strides = [1, 1]} : vector<96x16xf32> to vector<24x16xf32>
    %100 = arith.maximumf %98, %99 : vector<24x16xf32>
    %101 = vector.extract_strided_slice %95 {offsets = [72, 0], sizes = [24, 16], strides = [1, 1]} : vector<96x16xf32> to vector<24x16xf32>
    %102 = arith.maximumf %100, %101 : vector<24x16xf32>
    %103 = arith.addf %102, %94 : vector<24x16xf32>
    %cst_65 = arith.constant 2.000000e-01 : f32
    %104 = vector.broadcast %cst_65 : f32 to vector<24x16xf32>
    %105 = arith.mulf %104, %103 : vector<24x16xf32>
    %106 = arith.maximumf %103, %105 : vector<24x16xf32>
    %c0_66 = arith.constant 0 : index
    %c0_67 = arith.constant 0 : index
    %107 = vector.load %arg23[%c0_66, %c0_67] : memref<16x8xf32, #tpu.memory_space<vmem>>, vector<16x8xf32>
    %cst_68 = arith.constant dense<0.000000e+00> : vector<24x8xf32>
    %108 = tpu.matmul %106, %107, %cst_68 {dimension_numbers = #tpu.dot_dimension_numbers<[1], [0], [0], [1], [0, 0, 1, 1], [], []>} : vector<24x16xf32>, vector<16x8xf32>, vector<24x8xf32> -> vector<24x8xf32>
    %c0_69 = arith.constant 0 : index
    %c0_70 = arith.constant 0 : index
    %109 = vector.load %arg24[%c0_69, %c0_70] : memref<16x8xf32, #tpu.memory_space<vmem>>, vector<16x8xf32>
    %cst_71 = arith.constant dense<0.000000e+00> : vector<24x8xf32>
    %110 = tpu.matmul %106, %109, %cst_71 {dimension_numbers = #tpu.dot_dimension_numbers<[1], [0], [0], [1], [0, 0, 1, 1], [], []>} : vector<24x16xf32>, vector<16x8xf32>, vector<24x8xf32> -> vector<24x8xf32>
    %c0_72 = arith.constant 0 : index
    %c0_73 = arith.constant 0 : index
    %111 = vector.load %arg25[%c0_72, %c0_73] : memref<1x8xf32, #tpu.memory_space<vmem>>, vector<1x8xf32>
    %112 = vector.broadcast %111 : vector<1x8xf32> to vector<24x8xf32>
    %113 = arith.addf %110, %112 : vector<24x8xf32>
    %cst_74 = arith.constant dense<0.000000e+00> : vector<96x8xf32>
    %114 = tpu.matmul %0, %108, %cst_74 {dimension_numbers = #tpu.dot_dimension_numbers<[1], [0], [0], [1], [0, 0, 1, 1], [], []>} : vector<96x24xf32>, vector<24x8xf32>, vector<96x8xf32> -> vector<96x8xf32>
    %115 = vector.extract_strided_slice %114 {offsets = [0, 0], sizes = [24, 8], strides = [1, 1]} : vector<96x8xf32> to vector<24x8xf32>
    %116 = vector.extract_strided_slice %114 {offsets = [24, 0], sizes = [24, 8], strides = [1, 1]} : vector<96x8xf32> to vector<24x8xf32>
    %117 = arith.maximumf %115, %116 : vector<24x8xf32>
    %118 = vector.extract_strided_slice %114 {offsets = [48, 0], sizes = [24, 8], strides = [1, 1]} : vector<96x8xf32> to vector<24x8xf32>
    %119 = arith.maximumf %117, %118 : vector<24x8xf32>
    %120 = vector.extract_strided_slice %114 {offsets = [72, 0], sizes = [24, 8], strides = [1, 1]} : vector<96x8xf32> to vector<24x8xf32>
    %121 = arith.maximumf %119, %120 : vector<24x8xf32>
    %122 = arith.addf %121, %113 : vector<24x8xf32>
    %cst_75 = arith.constant 2.000000e-01 : f32
    %123 = vector.broadcast %cst_75 : f32 to vector<24x8xf32>
    %124 = arith.mulf %123, %122 : vector<24x8xf32>
    %125 = arith.maximumf %122, %124 : vector<24x8xf32>
    %c0_76 = arith.constant 0 : index
    %c0_77 = arith.constant 0 : index
    %126 = vector.load %arg26[%c0_76, %c0_77] : memref<8x8xf32, #tpu.memory_space<vmem>>, vector<8x8xf32>
    %cst_78 = arith.constant dense<0.000000e+00> : vector<24x8xf32>
    %127 = tpu.matmul %125, %126, %cst_78 {dimension_numbers = #tpu.dot_dimension_numbers<[1], [0], [0], [1], [0, 0, 1, 1], [], []>} : vector<24x8xf32>, vector<8x8xf32>, vector<24x8xf32> -> vector<24x8xf32>
    %c0_79 = arith.constant 0 : index
    %c0_80 = arith.constant 0 : index
    %128 = vector.load %arg27[%c0_79, %c0_80] : memref<8x8xf32, #tpu.memory_space<vmem>>, vector<8x8xf32>
    %cst_81 = arith.constant dense<0.000000e+00> : vector<24x8xf32>
    %129 = tpu.matmul %125, %128, %cst_81 {dimension_numbers = #tpu.dot_dimension_numbers<[1], [0], [0], [1], [0, 0, 1, 1], [], []>} : vector<24x8xf32>, vector<8x8xf32>, vector<24x8xf32> -> vector<24x8xf32>
    %c0_82 = arith.constant 0 : index
    %c0_83 = arith.constant 0 : index
    %130 = vector.load %arg28[%c0_82, %c0_83] : memref<1x8xf32, #tpu.memory_space<vmem>>, vector<1x8xf32>
    %131 = vector.broadcast %130 : vector<1x8xf32> to vector<24x8xf32>
    %132 = arith.addf %129, %131 : vector<24x8xf32>
    %cst_84 = arith.constant dense<0.000000e+00> : vector<96x8xf32>
    %133 = tpu.matmul %0, %127, %cst_84 {dimension_numbers = #tpu.dot_dimension_numbers<[1], [0], [0], [1], [0, 0, 1, 1], [], []>} : vector<96x24xf32>, vector<24x8xf32>, vector<96x8xf32> -> vector<96x8xf32>
    %134 = vector.extract_strided_slice %133 {offsets = [0, 0], sizes = [24, 8], strides = [1, 1]} : vector<96x8xf32> to vector<24x8xf32>
    %135 = vector.extract_strided_slice %133 {offsets = [24, 0], sizes = [24, 8], strides = [1, 1]} : vector<96x8xf32> to vector<24x8xf32>
    %136 = arith.maximumf %134, %135 : vector<24x8xf32>
    %137 = vector.extract_strided_slice %133 {offsets = [48, 0], sizes = [24, 8], strides = [1, 1]} : vector<96x8xf32> to vector<24x8xf32>
    %138 = arith.maximumf %136, %137 : vector<24x8xf32>
    %139 = vector.extract_strided_slice %133 {offsets = [72, 0], sizes = [24, 8], strides = [1, 1]} : vector<96x8xf32> to vector<24x8xf32>
    %140 = arith.maximumf %138, %139 : vector<24x8xf32>
    %141 = arith.addf %140, %132 : vector<24x8xf32>
    %cst_85 = arith.constant 2.000000e-01 : f32
    %142 = vector.broadcast %cst_85 : f32 to vector<24x8xf32>
    %143 = arith.mulf %142, %141 : vector<24x8xf32>
    %144 = arith.maximumf %141, %143 : vector<24x8xf32>
    %c0_86 = arith.constant 0 : index
    %c0_87 = arith.constant 0 : index
    %145 = vector.load %arg32[%c0_86, %c0_87] : memref<1x64xf32, #tpu.memory_space<vmem>>, vector<1x64xf32>
    %c0_88 = arith.constant 0 : index
    %c0_89 = arith.constant 0 : index
    %146 = vector.load %arg29[%c0_88, %c0_89] : memref<16x64xf32, #tpu.memory_space<vmem>>, vector<16x64xf32>
    %cst_90 = arith.constant dense<0.000000e+00> : vector<24x64xf32>
    %147 = tpu.matmul %106, %146, %cst_90 {dimension_numbers = #tpu.dot_dimension_numbers<[1], [0], [0], [1], [0, 0, 1, 1], [], []>} : vector<24x16xf32>, vector<16x64xf32>, vector<24x64xf32> -> vector<24x64xf32>
    %148 = vector.broadcast %145 : vector<1x64xf32> to vector<24x64xf32>
    %149 = arith.addf %148, %147 : vector<24x64xf32>
    %c0_91 = arith.constant 0 : index
    %c0_92 = arith.constant 0 : index
    %150 = vector.load %arg30[%c0_91, %c0_92] : memref<8x64xf32, #tpu.memory_space<vmem>>, vector<8x64xf32>
    %cst_93 = arith.constant dense<0.000000e+00> : vector<24x64xf32>
    %151 = tpu.matmul %125, %150, %cst_93 {dimension_numbers = #tpu.dot_dimension_numbers<[1], [0], [0], [1], [0, 0, 1, 1], [], []>} : vector<24x8xf32>, vector<8x64xf32>, vector<24x64xf32> -> vector<24x64xf32>
    %152 = arith.addf %149, %151 : vector<24x64xf32>
    %c0_94 = arith.constant 0 : index
    %c0_95 = arith.constant 0 : index
    %153 = vector.load %arg31[%c0_94, %c0_95] : memref<8x64xf32, #tpu.memory_space<vmem>>, vector<8x64xf32>
    %cst_96 = arith.constant dense<0.000000e+00> : vector<24x64xf32>
    %154 = tpu.matmul %144, %153, %cst_96 {dimension_numbers = #tpu.dot_dimension_numbers<[1], [0], [0], [1], [0, 0, 1, 1], [], []>} : vector<24x8xf32>, vector<8x64xf32>, vector<24x64xf32> -> vector<24x64xf32>
    %155 = arith.addf %152, %154 : vector<24x64xf32>
    %cst_97 = arith.constant 2.000000e-01 : f32
    %156 = vector.broadcast %cst_97 : f32 to vector<24x64xf32>
    %157 = arith.mulf %156, %155 : vector<24x64xf32>
    %158 = arith.maximumf %155, %157 : vector<24x64xf32>
    %c0_98 = arith.constant 0 : index
    %c0_99 = arith.constant 0 : index
    %159 = vector.load %arg33[%c0_98, %c0_99] : memref<64x48xf32, #tpu.memory_space<vmem>>, vector<64x48xf32>
    %cst_100 = arith.constant dense<0.000000e+00> : vector<24x48xf32>
    %160 = tpu.matmul %158, %159, %cst_100 {dimension_numbers = #tpu.dot_dimension_numbers<[1], [0], [0], [1], [0, 0, 1, 1], [], []>} : vector<24x64xf32>, vector<64x48xf32>, vector<24x48xf32> -> vector<24x48xf32>
    %c0_101 = arith.constant 0 : index
    %c0_102 = arith.constant 0 : index
    %161 = vector.load %arg34[%c0_101, %c0_102] : memref<1x48xf32, #tpu.memory_space<vmem>>, vector<1x48xf32>
    %162 = vector.broadcast %161 : vector<1x48xf32> to vector<24x48xf32>
    %163 = arith.addf %160, %162 : vector<24x48xf32>
    %cst_103 = arith.constant 2.000000e-01 : f32
    %164 = vector.broadcast %cst_103 : f32 to vector<24x48xf32>
    %165 = arith.mulf %164, %163 : vector<24x48xf32>
    %166 = arith.maximumf %163, %165 : vector<24x48xf32>
    %c0_104 = arith.constant 0 : index
    %c0_105 = arith.constant 0 : index
    %167 = vector.load %arg35[%c0_104, %c0_105] : memref<48x32xf32, #tpu.memory_space<vmem>>, vector<48x32xf32>
    %cst_106 = arith.constant dense<0.000000e+00> : vector<24x32xf32>
    %168 = tpu.matmul %166, %167, %cst_106 {dimension_numbers = #tpu.dot_dimension_numbers<[1], [0], [0], [1], [0, 0, 1, 1], [], []>} : vector<24x48xf32>, vector<48x32xf32>, vector<24x32xf32> -> vector<24x32xf32>
    %c0_107 = arith.constant 0 : index
    %c0_108 = arith.constant 0 : index
    %169 = vector.load %arg36[%c0_107, %c0_108] : memref<1x32xf32, #tpu.memory_space<vmem>>, vector<1x32xf32>
    %170 = vector.broadcast %169 : vector<1x32xf32> to vector<24x32xf32>
    %171 = arith.addf %168, %170 : vector<24x32xf32>
    %172 = arith.addf %87, %171 : vector<24x32xf32>
    %c0_109 = arith.constant 0 : index
    %c0_110 = arith.constant 0 : index
    %173 = vector.load %arg37[%c0_109, %c0_110] : memref<32x16xf32, #tpu.memory_space<vmem>>, vector<32x16xf32>
    %cst_111 = arith.constant dense<0.000000e+00> : vector<24x16xf32>
    %174 = tpu.matmul %172, %173, %cst_111 {dimension_numbers = #tpu.dot_dimension_numbers<[1], [0], [0], [1], [0, 0, 1, 1], [], []>} : vector<24x32xf32>, vector<32x16xf32>, vector<24x16xf32> -> vector<24x16xf32>
    %c0_112 = arith.constant 0 : index
    %c0_113 = arith.constant 0 : index
    %175 = vector.load %arg38[%c0_112, %c0_113] : memref<32x16xf32, #tpu.memory_space<vmem>>, vector<32x16xf32>
    %cst_114 = arith.constant dense<0.000000e+00> : vector<24x16xf32>
    %176 = tpu.matmul %172, %175, %cst_114 {dimension_numbers = #tpu.dot_dimension_numbers<[1], [0], [0], [1], [0, 0, 1, 1], [], []>} : vector<24x32xf32>, vector<32x16xf32>, vector<24x16xf32> -> vector<24x16xf32>
    %c0_115 = arith.constant 0 : index
    %c0_116 = arith.constant 0 : index
    %177 = vector.load %arg39[%c0_115, %c0_116] : memref<1x16xf32, #tpu.memory_space<vmem>>, vector<1x16xf32>
    %178 = vector.broadcast %177 : vector<1x16xf32> to vector<24x16xf32>
    %179 = arith.addf %176, %178 : vector<24x16xf32>
    %cst_117 = arith.constant dense<0.000000e+00> : vector<96x16xf32>
    %180 = tpu.matmul %0, %174, %cst_117 {dimension_numbers = #tpu.dot_dimension_numbers<[1], [0], [0], [1], [0, 0, 1, 1], [], []>} : vector<96x24xf32>, vector<24x16xf32>, vector<96x16xf32> -> vector<96x16xf32>
    %181 = vector.extract_strided_slice %180 {offsets = [0, 0], sizes = [24, 16], strides = [1, 1]} : vector<96x16xf32> to vector<24x16xf32>
    %182 = vector.extract_strided_slice %180 {offsets = [24, 0], sizes = [24, 16], strides = [1, 1]} : vector<96x16xf32> to vector<24x16xf32>
    %183 = arith.maximumf %181, %182 : vector<24x16xf32>
    %184 = vector.extract_strided_slice %180 {offsets = [48, 0], sizes = [24, 16], strides = [1, 1]} : vector<96x16xf32> to vector<24x16xf32>
    %185 = arith.maximumf %183, %184 : vector<24x16xf32>
    %186 = vector.extract_strided_slice %180 {offsets = [72, 0], sizes = [24, 16], strides = [1, 1]} : vector<96x16xf32> to vector<24x16xf32>
    %187 = arith.maximumf %185, %186 : vector<24x16xf32>
    %188 = arith.addf %187, %179 : vector<24x16xf32>
    %cst_118 = arith.constant 2.000000e-01 : f32
    %189 = vector.broadcast %cst_118 : f32 to vector<24x16xf32>
    %190 = arith.mulf %189, %188 : vector<24x16xf32>
    %191 = arith.maximumf %188, %190 : vector<24x16xf32>
    %c0_119 = arith.constant 0 : index
    %c0_120 = arith.constant 0 : index
    %192 = vector.load %arg40[%c0_119, %c0_120] : memref<16x8xf32, #tpu.memory_space<vmem>>, vector<16x8xf32>
    %cst_121 = arith.constant dense<0.000000e+00> : vector<24x8xf32>
    %193 = tpu.matmul %191, %192, %cst_121 {dimension_numbers = #tpu.dot_dimension_numbers<[1], [0], [0], [1], [0, 0, 1, 1], [], []>} : vector<24x16xf32>, vector<16x8xf32>, vector<24x8xf32> -> vector<24x8xf32>
    %c0_122 = arith.constant 0 : index
    %c0_123 = arith.constant 0 : index
    %194 = vector.load %arg41[%c0_122, %c0_123] : memref<16x8xf32, #tpu.memory_space<vmem>>, vector<16x8xf32>
    %cst_124 = arith.constant dense<0.000000e+00> : vector<24x8xf32>
    %195 = tpu.matmul %191, %194, %cst_124 {dimension_numbers = #tpu.dot_dimension_numbers<[1], [0], [0], [1], [0, 0, 1, 1], [], []>} : vector<24x16xf32>, vector<16x8xf32>, vector<24x8xf32> -> vector<24x8xf32>
    %c0_125 = arith.constant 0 : index
    %c0_126 = arith.constant 0 : index
    %196 = vector.load %arg42[%c0_125, %c0_126] : memref<1x8xf32, #tpu.memory_space<vmem>>, vector<1x8xf32>
    %197 = vector.broadcast %196 : vector<1x8xf32> to vector<24x8xf32>
    %198 = arith.addf %195, %197 : vector<24x8xf32>
    %cst_127 = arith.constant dense<0.000000e+00> : vector<96x8xf32>
    %199 = tpu.matmul %0, %193, %cst_127 {dimension_numbers = #tpu.dot_dimension_numbers<[1], [0], [0], [1], [0, 0, 1, 1], [], []>} : vector<96x24xf32>, vector<24x8xf32>, vector<96x8xf32> -> vector<96x8xf32>
    %200 = vector.extract_strided_slice %199 {offsets = [0, 0], sizes = [24, 8], strides = [1, 1]} : vector<96x8xf32> to vector<24x8xf32>
    %201 = vector.extract_strided_slice %199 {offsets = [24, 0], sizes = [24, 8], strides = [1, 1]} : vector<96x8xf32> to vector<24x8xf32>
    %202 = arith.maximumf %200, %201 : vector<24x8xf32>
    %203 = vector.extract_strided_slice %199 {offsets = [48, 0], sizes = [24, 8], strides = [1, 1]} : vector<96x8xf32> to vector<24x8xf32>
    %204 = arith.maximumf %202, %203 : vector<24x8xf32>
    %205 = vector.extract_strided_slice %199 {offsets = [72, 0], sizes = [24, 8], strides = [1, 1]} : vector<96x8xf32> to vector<24x8xf32>
    %206 = arith.maximumf %204, %205 : vector<24x8xf32>
    %207 = arith.addf %206, %198 : vector<24x8xf32>
    %cst_128 = arith.constant 2.000000e-01 : f32
    %208 = vector.broadcast %cst_128 : f32 to vector<24x8xf32>
    %209 = arith.mulf %208, %207 : vector<24x8xf32>
    %210 = arith.maximumf %207, %209 : vector<24x8xf32>
    %c0_129 = arith.constant 0 : index
    %c0_130 = arith.constant 0 : index
    %211 = vector.load %arg43[%c0_129, %c0_130] : memref<8x8xf32, #tpu.memory_space<vmem>>, vector<8x8xf32>
    %cst_131 = arith.constant dense<0.000000e+00> : vector<24x8xf32>
    %212 = tpu.matmul %210, %211, %cst_131 {dimension_numbers = #tpu.dot_dimension_numbers<[1], [0], [0], [1], [0, 0, 1, 1], [], []>} : vector<24x8xf32>, vector<8x8xf32>, vector<24x8xf32> -> vector<24x8xf32>
    %c0_132 = arith.constant 0 : index
    %c0_133 = arith.constant 0 : index
    %213 = vector.load %arg44[%c0_132, %c0_133] : memref<8x8xf32, #tpu.memory_space<vmem>>, vector<8x8xf32>
    %cst_134 = arith.constant dense<0.000000e+00> : vector<24x8xf32>
    %214 = tpu.matmul %210, %213, %cst_134 {dimension_numbers = #tpu.dot_dimension_numbers<[1], [0], [0], [1], [0, 0, 1, 1], [], []>} : vector<24x8xf32>, vector<8x8xf32>, vector<24x8xf32> -> vector<24x8xf32>
    %c0_135 = arith.constant 0 : index
    %c0_136 = arith.constant 0 : index
    %215 = vector.load %arg45[%c0_135, %c0_136] : memref<1x8xf32, #tpu.memory_space<vmem>>, vector<1x8xf32>
    %216 = vector.broadcast %215 : vector<1x8xf32> to vector<24x8xf32>
    %217 = arith.addf %214, %216 : vector<24x8xf32>
    %cst_137 = arith.constant dense<0.000000e+00> : vector<96x8xf32>
    %218 = tpu.matmul %0, %212, %cst_137 {dimension_numbers = #tpu.dot_dimension_numbers<[1], [0], [0], [1], [0, 0, 1, 1], [], []>} : vector<96x24xf32>, vector<24x8xf32>, vector<96x8xf32> -> vector<96x8xf32>
    %219 = vector.extract_strided_slice %218 {offsets = [0, 0], sizes = [24, 8], strides = [1, 1]} : vector<96x8xf32> to vector<24x8xf32>
    %220 = vector.extract_strided_slice %218 {offsets = [24, 0], sizes = [24, 8], strides = [1, 1]} : vector<96x8xf32> to vector<24x8xf32>
    %221 = arith.maximumf %219, %220 : vector<24x8xf32>
    %222 = vector.extract_strided_slice %218 {offsets = [48, 0], sizes = [24, 8], strides = [1, 1]} : vector<96x8xf32> to vector<24x8xf32>
    %223 = arith.maximumf %221, %222 : vector<24x8xf32>
    %224 = vector.extract_strided_slice %218 {offsets = [72, 0], sizes = [24, 8], strides = [1, 1]} : vector<96x8xf32> to vector<24x8xf32>
    %225 = arith.maximumf %223, %224 : vector<24x8xf32>
    %226 = arith.addf %225, %217 : vector<24x8xf32>
    %cst_138 = arith.constant 2.000000e-01 : f32
    %227 = vector.broadcast %cst_138 : f32 to vector<24x8xf32>
    %228 = arith.mulf %227, %226 : vector<24x8xf32>
    %229 = arith.maximumf %226, %228 : vector<24x8xf32>
    %c0_139 = arith.constant 0 : index
    %c0_140 = arith.constant 0 : index
    %230 = vector.load %arg49[%c0_139, %c0_140] : memref<1x48xf32, #tpu.memory_space<vmem>>, vector<1x48xf32>
    %c0_141 = arith.constant 0 : index
    %c0_142 = arith.constant 0 : index
    %231 = vector.load %arg46[%c0_141, %c0_142] : memref<16x48xf32, #tpu.memory_space<vmem>>, vector<16x48xf32>
    %cst_143 = arith.constant dense<0.000000e+00> : vector<24x48xf32>
    %232 = tpu.matmul %191, %231, %cst_143 {dimension_numbers = #tpu.dot_dimension_numbers<[1], [0], [0], [1], [0, 0, 1, 1], [], []>} : vector<24x16xf32>, vector<16x48xf32>, vector<24x48xf32> -> vector<24x48xf32>
    %233 = vector.broadcast %230 : vector<1x48xf32> to vector<24x48xf32>
    %234 = arith.addf %233, %232 : vector<24x48xf32>
    %c0_144 = arith.constant 0 : index
    %c0_145 = arith.constant 0 : index
    %235 = vector.load %arg47[%c0_144, %c0_145] : memref<8x48xf32, #tpu.memory_space<vmem>>, vector<8x48xf32>
    %cst_146 = arith.constant dense<0.000000e+00> : vector<24x48xf32>
    %236 = tpu.matmul %210, %235, %cst_146 {dimension_numbers = #tpu.dot_dimension_numbers<[1], [0], [0], [1], [0, 0, 1, 1], [], []>} : vector<24x8xf32>, vector<8x48xf32>, vector<24x48xf32> -> vector<24x48xf32>
    %237 = arith.addf %234, %236 : vector<24x48xf32>
    %c0_147 = arith.constant 0 : index
    %c0_148 = arith.constant 0 : index
    %238 = vector.load %arg48[%c0_147, %c0_148] : memref<8x48xf32, #tpu.memory_space<vmem>>, vector<8x48xf32>
    %cst_149 = arith.constant dense<0.000000e+00> : vector<24x48xf32>
    %239 = tpu.matmul %229, %238, %cst_149 {dimension_numbers = #tpu.dot_dimension_numbers<[1], [0], [0], [1], [0, 0, 1, 1], [], []>} : vector<24x8xf32>, vector<8x48xf32>, vector<24x48xf32> -> vector<24x48xf32>
    %240 = arith.addf %237, %239 : vector<24x48xf32>
    %cst_150 = arith.constant 2.000000e-01 : f32
    %241 = vector.broadcast %cst_150 : f32 to vector<24x48xf32>
    %242 = arith.mulf %241, %240 : vector<24x48xf32>
    %243 = arith.maximumf %240, %242 : vector<24x48xf32>
    %c0_151 = arith.constant 0 : index
    %c0_152 = arith.constant 0 : index
    %244 = vector.load %arg50[%c0_151, %c0_152] : memref<48x32xf32, #tpu.memory_space<vmem>>, vector<48x32xf32>
    %cst_153 = arith.constant dense<0.000000e+00> : vector<24x32xf32>
    %245 = tpu.matmul %243, %244, %cst_153 {dimension_numbers = #tpu.dot_dimension_numbers<[1], [0], [0], [1], [0, 0, 1, 1], [], []>} : vector<24x48xf32>, vector<48x32xf32>, vector<24x32xf32> -> vector<24x32xf32>
    %c0_154 = arith.constant 0 : index
    %c0_155 = arith.constant 0 : index
    %246 = vector.load %arg51[%c0_154, %c0_155] : memref<1x32xf32, #tpu.memory_space<vmem>>, vector<1x32xf32>
    %247 = vector.broadcast %246 : vector<1x32xf32> to vector<24x32xf32>
    %248 = arith.addf %245, %247 : vector<24x32xf32>
    %cst_156 = arith.constant 2.000000e-01 : f32
    %249 = vector.broadcast %cst_156 : f32 to vector<24x32xf32>
    %250 = arith.mulf %249, %248 : vector<24x32xf32>
    %251 = arith.maximumf %248, %250 : vector<24x32xf32>
    %c0_157 = arith.constant 0 : index
    %c0_158 = arith.constant 0 : index
    %252 = vector.load %arg52[%c0_157, %c0_158] : memref<32x3xf32, #tpu.memory_space<vmem>>, vector<32x3xf32>
    %cst_159 = arith.constant dense<0.000000e+00> : vector<24x3xf32>
    %253 = tpu.matmul %251, %252, %cst_159 {dimension_numbers = #tpu.dot_dimension_numbers<[1], [0], [0], [1], [0, 0, 1, 1], [], []>} : vector<24x32xf32>, vector<32x3xf32>, vector<24x3xf32> -> vector<24x3xf32>
    %c0_160 = arith.constant 0 : index
    %c0_161 = arith.constant 0 : index
    %254 = vector.load %arg53[%c0_160, %c0_161] : memref<1x3xf32, #tpu.memory_space<vmem>>, vector<1x3xf32>
    %255 = vector.broadcast %254 : vector<1x3xf32> to vector<24x3xf32>
    %256 = arith.addf %253, %255 : vector<24x3xf32>
    %c0_162 = arith.constant 0 : index
    %c0_163 = arith.constant 0 : index
    %c0_164 = arith.constant 0 : index
    %257 = vector.load %arg54[%c0_162, %c0_163, %c0_164] : memref<1x24x3xf32, #tpu.memory_space<vmem>>, vector<1x24x3xf32>
    %258 = vector.shape_cast %257 : vector<1x24x3xf32> to vector<24x3xf32>
    %259 = vector.shape_cast %256 : vector<24x3xf32> to vector<1x24x3xf32>
    tpu.vector_store %arg54[%c0_162, %c0_163, %c0_164], %259 {strides = array<i32>} : memref<1x24x3xf32, #tpu.memory_space<vmem>>, vector<1x24x3xf32>,
    return
  }
  func.func @transform_0(%arg0: i32) -> (i32, i32) {
    %c0_i32 = arith.constant 0 : i32
    %c0_i32_0 = arith.constant 0 : i32
    %c0_i32_1 = arith.constant 0 : i32
    return %c0_i32, %c0_i32_0 : i32, i32
  }
  func.func @transform_1(%arg0: i32) -> (i32, i32, i32) {
    %c0_i32 = arith.constant 0 : i32
    %c0_i32_0 = arith.constant 0 : i32
    %c0_i32_1 = arith.constant 0 : i32
    return %arg0, %c0_i32, %c0_i32_0 : i32, i32, i32
  }
  func.func @transform_2(%arg0: i32) -> (i32, i32) {
    %c0_i32 = arith.constant 0 : i32
    %c0_i32_0 = arith.constant 0 : i32
    %c0_i32_1 = arith.constant 0 : i32
    return %c0_i32, %c0_i32_0 : i32, i32
  }
  func.func @transform_3(%arg0: i32) -> (i32, i32) {
    %c0_i32 = arith.constant 0 : i32
    %c0_i32_0 = arith.constant 0 : i32
    %c0_i32_1 = arith.constant 0 : i32
    return %c0_i32, %c0_i32_0 : i32, i32
  }
  func.func @transform_4(%arg0: i32) -> (i32, i32) {
    %c0_i32 = arith.constant 0 : i32
    %c0_i32_0 = arith.constant 0 : i32
    %c0_i32_1 = arith.constant 0 : i32
    return %c0_i32, %c0_i32_0 : i32, i32
  }
  func.func @transform_5(%arg0: i32) -> (i32, i32) {
    %c0_i32 = arith.constant 0 : i32
    %c0_i32_0 = arith.constant 0 : i32
    %c0_i32_1 = arith.constant 0 : i32
    return %c0_i32, %c0_i32_0 : i32, i32
  }
  func.func @transform_6(%arg0: i32) -> (i32, i32) {
    %c0_i32 = arith.constant 0 : i32
    %c0_i32_0 = arith.constant 0 : i32
    %c0_i32_1 = arith.constant 0 : i32
    return %c0_i32, %c0_i32_0 : i32, i32
  }
  func.func @transform_7(%arg0: i32) -> (i32, i32) {
    %c0_i32 = arith.constant 0 : i32
    %c0_i32_0 = arith.constant 0 : i32
    %c0_i32_1 = arith.constant 0 : i32
    return %c0_i32, %c0_i32_0 : i32, i32
  }
  func.func @transform_8(%arg0: i32) -> (i32, i32) {
    %c0_i32 = arith.constant 0 : i32
    %c0_i32_0 = arith.constant 0 : i32
    %c0_i32_1 = arith.constant 0 : i32
    return %c0_i32, %c0_i32_0 : i32, i32
  }
  func.func @transform_9(%arg0: i32) -> (i32, i32) {
    %c0_i32 = arith.constant 0 : i32
    %c0_i32_0 = arith.constant 0 : i32
    %c0_i32_1 = arith.constant 0 : i32
    return %c0_i32, %c0_i32_0 : i32, i32
  }
  func.func @transform_10(%arg0: i32) -> (i32, i32) {
    %c0_i32 = arith.constant 0 : i32
    %c0_i32_0 = arith.constant 0 : i32
    %c0_i32_1 = arith.constant 0 : i32
    return %c0_i32, %c0_i32_0 : i32, i32
  }
  func.func @transform_11(%arg0: i32) -> (i32, i32) {
    %c0_i32 = arith.constant 0 : i32
    %c0_i32_0 = arith.constant 0 : i32
    %c0_i32_1 = arith.constant 0 : i32
    return %c0_i32, %c0_i32_0 : i32, i32
  }
  func.func @transform_12(%arg0: i32) -> (i32, i32) {
    %c0_i32 = arith.constant 0 : i32
    %c0_i32_0 = arith.constant 0 : i32
    %c0_i32_1 = arith.constant 0 : i32
    return %c0_i32, %c0_i32_0 : i32, i32
  }
  func.func @transform_13(%arg0: i32) -> (i32, i32) {
    %c0_i32 = arith.constant 0 : i32
    %c0_i32_0 = arith.constant 0 : i32
    %c0_i32_1 = arith.constant 0 : i32
    return %c0_i32, %c0_i32_0 : i32, i32
  }
  func.func @transform_14(%arg0: i32) -> (i32, i32) {
    %c0_i32 = arith.constant 0 : i32
    %c0_i32_0 = arith.constant 0 : i32
    %c0_i32_1 = arith.constant 0 : i32
    return %c0_i32, %c0_i32_0 : i32, i32
  }
  func.func @transform_15(%arg0: i32) -> (i32, i32) {
    %c0_i32 = arith.constant 0 : i32
    %c0_i32_0 = arith.constant 0 : i32
    %c0_i32_1 = arith.constant 0 : i32
    return %c0_i32, %c0_i32_0 : i32, i32
  }
  func.func @transform_16(%arg0: i32) -> (i32, i32) {
    %c0_i32 = arith.constant 0 : i32
    %c0_i32_0 = arith.constant 0 : i32
    %c0_i32_1 = arith.constant 0 : i32
    return %c0_i32, %c0_i32_0 : i32, i32
  }
  func.func @transform_17(%arg0: i32) -> (i32, i32) {
    %c0_i32 = arith.constant 0 : i32
    %c0_i32_0 = arith.constant 0 : i32
    %c0_i32_1 = arith.constant 0 : i32
    return %c0_i32, %c0_i32_0 : i32, i32
  }
  func.func @transform_18(%arg0: i32) -> (i32, i32) {
    %c0_i32 = arith.constant 0 : i32
    %c0_i32_0 = arith.constant 0 : i32
    %c0_i32_1 = arith.constant 0 : i32
    return %c0_i32, %c0_i32_0 : i32, i32
  }
  func.func @transform_19(%arg0: i32) -> (i32, i32) {
    %c0_i32 = arith.constant 0 : i32
    %c0_i32_0 = arith.constant 0 : i32
    %c0_i32_1 = arith.constant 0 : i32
    return %c0_i32, %c0_i32_0 : i32, i32
  }
  func.func @transform_20(%arg0: i32) -> (i32, i32) {
    %c0_i32 = arith.constant 0 : i32
    %c0_i32_0 = arith.constant 0 : i32
    %c0_i32_1 = arith.constant 0 : i32
    return %c0_i32, %c0_i32_0 : i32, i32
  }
  func.func @transform_21(%arg0: i32) -> (i32, i32) {
    %c0_i32 = arith.constant 0 : i32
    %c0_i32_0 = arith.constant 0 : i32
    %c0_i32_1 = arith.constant 0 : i32
    return %c0_i32, %c0_i32_0 : i32, i32
  }
  func.func @transform_22(%arg0: i32) -> (i32, i32) {
    %c0_i32 = arith.constant 0 : i32
    %c0_i32_0 = arith.constant 0 : i32
    %c0_i32_1 = arith.constant 0 : i32
    return %c0_i32, %c0_i32_0 : i32, i32
  }
  func.func @transform_23(%arg0: i32) -> (i32, i32) {
    %c0_i32 = arith.constant 0 : i32
    %c0_i32_0 = arith.constant 0 : i32
    %c0_i32_1 = arith.constant 0 : i32
    return %c0_i32, %c0_i32_0 : i32, i32
  }
  func.func @transform_24(%arg0: i32) -> (i32, i32) {
    %c0_i32 = arith.constant 0 : i32
    %c0_i32_0 = arith.constant 0 : i32
    %c0_i32_1 = arith.constant 0 : i32
    return %c0_i32, %c0_i32_0 : i32, i32
  }
  func.func @transform_25(%arg0: i32) -> (i32, i32) {
    %c0_i32 = arith.constant 0 : i32
    %c0_i32_0 = arith.constant 0 : i32
    %c0_i32_1 = arith.constant 0 : i32
    return %c0_i32, %c0_i32_0 : i32, i32
  }
  func.func @transform_26(%arg0: i32) -> (i32, i32) {
    %c0_i32 = arith.constant 0 : i32
    %c0_i32_0 = arith.constant 0 : i32
    %c0_i32_1 = arith.constant 0 : i32
    return %c0_i32, %c0_i32_0 : i32, i32
  }
  func.func @transform_27(%arg0: i32) -> (i32, i32) {
    %c0_i32 = arith.constant 0 : i32
    %c0_i32_0 = arith.constant 0 : i32
    %c0_i32_1 = arith.constant 0 : i32
    return %c0_i32, %c0_i32_0 : i32, i32
  }
  func.func @transform_28(%arg0: i32) -> (i32, i32) {
    %c0_i32 = arith.constant 0 : i32
    %c0_i32_0 = arith.constant 0 : i32
    %c0_i32_1 = arith.constant 0 : i32
    return %c0_i32, %c0_i32_0 : i32, i32
  }
  func.func @transform_29(%arg0: i32) -> (i32, i32) {
    %c0_i32 = arith.constant 0 : i32
    %c0_i32_0 = arith.constant 0 : i32
    %c0_i32_1 = arith.constant 0 : i32
    return %c0_i32, %c0_i32_0 : i32, i32
  }
  func.func @transform_30(%arg0: i32) -> (i32, i32) {
    %c0_i32 = arith.constant 0 : i32
    %c0_i32_0 = arith.constant 0 : i32
    %c0_i32_1 = arith.constant 0 : i32
    return %c0_i32, %c0_i32_0 : i32, i32
  }
  func.func @transform_31(%arg0: i32) -> (i32, i32) {
    %c0_i32 = arith.constant 0 : i32
    %c0_i32_0 = arith.constant 0 : i32
    %c0_i32_1 = arith.constant 0 : i32
    return %c0_i32, %c0_i32_0 : i32, i32
  }
  func.func @transform_32(%arg0: i32) -> (i32, i32) {
    %c0_i32 = arith.constant 0 : i32
    %c0_i32_0 = arith.constant 0 : i32
    %c0_i32_1 = arith.constant 0 : i32
    return %c0_i32, %c0_i32_0 : i32, i32
  }
  func.func @transform_33(%arg0: i32) -> (i32, i32) {
    %c0_i32 = arith.constant 0 : i32
    %c0_i32_0 = arith.constant 0 : i32
    %c0_i32_1 = arith.constant 0 : i32
    return %c0_i32, %c0_i32_0 : i32, i32
  }
  func.func @transform_34(%arg0: i32) -> (i32, i32) {
    %c0_i32 = arith.constant 0 : i32
    %c0_i32_0 = arith.constant 0 : i32
    %c0_i32_1 = arith.constant 0 : i32
    return %c0_i32, %c0_i32_0 : i32, i32
  }
  func.func @transform_35(%arg0: i32) -> (i32, i32) {
    %c0_i32 = arith.constant 0 : i32
    %c0_i32_0 = arith.constant 0 : i32
    %c0_i32_1 = arith.constant 0 : i32
    return %c0_i32, %c0_i32_0 : i32, i32
  }
  func.func @transform_36(%arg0: i32) -> (i32, i32) {
    %c0_i32 = arith.constant 0 : i32
    %c0_i32_0 = arith.constant 0 : i32
    %c0_i32_1 = arith.constant 0 : i32
    return %c0_i32, %c0_i32_0 : i32, i32
  }
  func.func @transform_37(%arg0: i32) -> (i32, i32) {
    %c0_i32 = arith.constant 0 : i32
    %c0_i32_0 = arith.constant 0 : i32
    %c0_i32_1 = arith.constant 0 : i32
    return %c0_i32, %c0_i32_0 : i32, i32
  }
  func.func @transform_38(%arg0: i32) -> (i32, i32) {
    %c0_i32 = arith.constant 0 : i32
    %c0_i32_0 = arith.constant 0 : i32
    %c0_i32_1 = arith.constant 0 : i32
    return %c0_i32, %c0_i32_0 : i32, i32
  }
  func.func @transform_39(%arg0: i32) -> (i32, i32) {
    %c0_i32 = arith.constant 0 : i32
    %c0_i32_0 = arith.constant 0 : i32
    %c0_i32_1 = arith.constant 0 : i32
    return %c0_i32, %c0_i32_0 : i32, i32
  }
  func.func @transform_40(%arg0: i32) -> (i32, i32) {
    %c0_i32 = arith.constant 0 : i32
    %c0_i32_0 = arith.constant 0 : i32
    %c0_i32_1 = arith.constant 0 : i32
    return %c0_i32, %c0_i32_0 : i32, i32
  }
  func.func @transform_41(%arg0: i32) -> (i32, i32) {
    %c0_i32 = arith.constant 0 : i32
    %c0_i32_0 = arith.constant 0 : i32
    %c0_i32_1 = arith.constant 0 : i32
    return %c0_i32, %c0_i32_0 : i32, i32
  }
  func.func @transform_42(%arg0: i32) -> (i32, i32) {
    %c0_i32 = arith.constant 0 : i32
    %c0_i32_0 = arith.constant 0 : i32
    %c0_i32_1 = arith.constant 0 : i32
    return %c0_i32, %c0_i32_0 : i32, i32
  }
  func.func @transform_43(%arg0: i32) -> (i32, i32) {
    %c0_i32 = arith.constant 0 : i32
    %c0_i32_0 = arith.constant 0 : i32
    %c0_i32_1 = arith.constant 0 : i32
    return %c0_i32, %c0_i32_0 : i32, i32
  }
  func.func @transform_44(%arg0: i32) -> (i32, i32) {
    %c0_i32 = arith.constant 0 : i32
    %c0_i32_0 = arith.constant 0 : i32
    %c0_i32_1 = arith.constant 0 : i32
    return %c0_i32, %c0_i32_0 : i32, i32
  }
  func.func @transform_45(%arg0: i32) -> (i32, i32) {
    %c0_i32 = arith.constant 0 : i32
    %c0_i32_0 = arith.constant 0 : i32
    %c0_i32_1 = arith.constant 0 : i32
    return %c0_i32, %c0_i32_0 : i32, i32
  }
  func.func @transform_46(%arg0: i32) -> (i32, i32) {
    %c0_i32 = arith.constant 0 : i32
    %c0_i32_0 = arith.constant 0 : i32
    %c0_i32_1 = arith.constant 0 : i32
    return %c0_i32, %c0_i32_0 : i32, i32
  }
  func.func @transform_47(%arg0: i32) -> (i32, i32) {
    %c0_i32 = arith.constant 0 : i32
    %c0_i32_0 = arith.constant 0 : i32
    %c0_i32_1 = arith.constant 0 : i32
    return %c0_i32, %c0_i32_0 : i32, i32
  }
  func.func @transform_48(%arg0: i32) -> (i32, i32) {
    %c0_i32 = arith.constant 0 : i32
    %c0_i32_0 = arith.constant 0 : i32
    %c0_i32_1 = arith.constant 0 : i32
    return %c0_i32, %c0_i32_0 : i32, i32
  }
  func.func @transform_49(%arg0: i32) -> (i32, i32) {
    %c0_i32 = arith.constant 0 : i32
    %c0_i32_0 = arith.constant 0 : i32
    %c0_i32_1 = arith.constant 0 : i32
    return %c0_i32, %c0_i32_0 : i32, i32
  }
  func.func @transform_50(%arg0: i32) -> (i32, i32) {
    %c0_i32 = arith.constant 0 : i32
    %c0_i32_0 = arith.constant 0 : i32
    %c0_i32_1 = arith.constant 0 : i32
    return %c0_i32, %c0_i32_0 : i32, i32
  }
  func.func @transform_51(%arg0: i32) -> (i32, i32) {
    %c0_i32 = arith.constant 0 : i32
    %c0_i32_0 = arith.constant 0 : i32
    %c0_i32_1 = arith.constant 0 : i32
    return %c0_i32, %c0_i32_0 : i32, i32
  }
  func.func @transform_52(%arg0: i32) -> (i32, i32) {
    %c0_i32 = arith.constant 0 : i32
    %c0_i32_0 = arith.constant 0 : i32
    %c0_i32_1 = arith.constant 0 : i32
    return %c0_i32, %c0_i32_0 : i32, i32
  }
  func.func @transform_53(%arg0: i32) -> (i32, i32, i32) {
    %c0_i32 = arith.constant 0 : i32
    %c0_i32_0 = arith.constant 0 : i32
    %c0_i32_1 = arith.constant 0 : i32
    return %arg0, %c0_i32, %c0_i32_0 : i32, i32, i32
  }
}

</mosaic_0001>

<llo_original>
// kernel: tpu_custom_call.1
$region0: #{tpu_custom_call.1}
  #allocation0 [shape = 'u32[]', space=smem, size = 0x4, offset = 0x4, fixed_abs, tag = 'smem constant byte address 0x4 - core index']
  #allocation1 [shape = 'u32[72,128]{1,0:T(1,128)}', space=vmem, size = 0x9000, scoped, tag = 'internal scratch']
  %s0 = inlined_call_operand.smem [shape: u32[54], index: -1, kind: input, shape index: {}]
  %s1 = sld [smem:[%s0]]
  %s2 = scalar_lea.smem %s0, 1
  %s3 = sld [smem:[%s2]]
  %s4 = scalar_lea.smem %s0, 2
  %s5 = sld [smem:[%s4]]
  %s6 = scalar_lea.smem %s0, 3
  %s7 = sld [smem:[%s6]]
  %s8 = scalar_lea.smem %s0, 4
  %s9 = sld [smem:[%s8]]
  %s10 = scalar_lea.smem %s0, 5
  %s11 = sld [smem:[%s10]]
  %s12 = scalar_lea.smem %s0, 6
  %s13 = sld [smem:[%s12]]
  %s14 = scalar_lea.smem %s0, 7
  %s15 = sld [smem:[%s14]]
  %s16 = scalar_lea.smem %s0, 8
  %s17 = sld [smem:[%s16]]
  %s18 = scalar_lea.smem %s0, 9
  %s19 = sld [smem:[%s18]]
  %s20 = scalar_lea.smem %s0, 10
  %s21 = sld [smem:[%s20]]
  %s22 = scalar_lea.smem %s0, 11
  %s23 = sld [smem:[%s22]]
  %s24 = scalar_lea.smem %s0, 12
  %s25 = sld [smem:[%s24]]
  %s26 = scalar_lea.smem %s0, 13
  %s27 = sld [smem:[%s26]]
  %s28 = scalar_lea.smem %s0, 14
  %s29 = sld [smem:[%s28]]
  %s30 = scalar_lea.smem %s0, 15
  %s31 = sld [smem:[%s30]]
  %s32 = scalar_lea.smem %s0, 16
  %s33 = sld [smem:[%s32]]
  %s34 = scalar_lea.smem %s0, 17
  %s35 = sld [smem:[%s34]]
  %s36 = scalar_lea.smem %s0, 18
  %s37 = sld [smem:[%s36]]
  %s38 = scalar_lea.smem %s0, 19
  %s39 = sld [smem:[%s38]]
  %s40 = scalar_lea.smem %s0, 20
  %s41 = sld [smem:[%s40]]
  %s42 = scalar_lea.smem %s0, 21
  %s43 = sld [smem:[%s42]]
  %s44 = scalar_lea.smem %s0, 22
  %s45 = sld [smem:[%s44]]
  %s46 = scalar_lea.smem %s0, 23
  %s47 = sld [smem:[%s46]]
  %s48 = scalar_lea.smem %s0, 24
  %s49 = sld [smem:[%s48]]
  %s50 = scalar_lea.smem %s0, 25
  %s51 = sld [smem:[%s50]]
  %s52 = scalar_lea.smem %s0, 26
  %s53 = sld [smem:[%s52]]
  %s54 = scalar_lea.smem %s0, 27
  %s55 = sld [smem:[%s54]]
  %s56 = scalar_lea.smem %s0, 28
  %s57 = sld [smem:[%s56]]
  %s58 = scalar_lea.smem %s0, 29
  %s59 = sld [smem:[%s58]]
  %s60 = scalar_lea.smem %s0, 30
  %s61 = sld [smem:[%s60]]
  %s62 = scalar_lea.smem %s0, 31
  %s63 = sld [smem:[%s62]]
  %s64 = scalar_lea.smem %s0, 32
  %s65 = sld [smem:[%s64]]
  %s66 = scalar_lea.smem %s0, 33
  %s67 = sld [smem:[%s66]]
  %s68 = scalar_lea.smem %s0, 34
  %s69 = sld [smem:[%s68]]
  %s70 = scalar_lea.smem %s0, 35
  %s71 = sld [smem:[%s70]]
  %s72 = scalar_lea.smem %s0, 36
  %s73 = sld [smem:[%s72]]
  %s74 = scalar_lea.smem %s0, 37
  %s75 = sld [smem:[%s74]]
  %s76 = scalar_lea.smem %s0, 38
  %s77 = sld [smem:[%s76]]
  %s78 = scalar_lea.smem %s0, 39
  %s79 = sld [smem:[%s78]]
  %s80 = scalar_lea.smem %s0, 40
  %s81 = sld [smem:[%s80]]
  %s82 = scalar_lea.smem %s0, 41
  %s83 = sld [smem:[%s82]]
  %s84 = scalar_lea.smem %s0, 42
  %s85 = sld [smem:[%s84]]
  %s86 = scalar_lea.smem %s0, 43
  %s87 = sld [smem:[%s86]]
  %s88 = scalar_lea.smem %s0, 44
  %s89 = sld [smem:[%s88]]
  %s90 = scalar_lea.smem %s0, 45
  %s91 = sld [smem:[%s90]]
  %s92 = scalar_lea.smem %s0, 46
  %s93 = sld [smem:[%s92]]
  %s94 = scalar_lea.smem %s0, 47
  %s95 = sld [smem:[%s94]]
  %s96 = scalar_lea.smem %s0, 48
  %s97 = sld [smem:[%s96]]
  %s98 = scalar_lea.smem %s0, 49
  %s99 = sld [smem:[%s98]]
  %s100 = scalar_lea.smem %s0, 50
  %s101 = sld [smem:[%s100]]
  %s102 = scalar_lea.smem %s0, 51
  %s103 = sld [smem:[%s102]]
  %s104 = scalar_lea.smem %s0, 52
  %s105 = sld [smem:[%s104]]
  %s106 = scalar_lea.smem %s0, 53
  %s107 = sld [smem:[%s106]]
  %s108 = sld [smem:[#allocation0]]
  $region245: #{tpu_custom_call.1} parent=0
    _
  %s110 = ssub.s32 1, %s108
  %s111 = scalar_select 0, %s110, %s108
  loop: start=0, step=1, limit=4
  $region2: #{tpu_custom_call.1} parent=0 // loop_pre_header
    _
  $region3: #{tpu_custom_call.1} parent=0 // loop_header
    %s113 = sphi 0, %s117
    %p114 = scmp.ge.s32.totalorder %s113, 4
    %s121 = sphi 0, %s121
    %s123 = sphi 0, %s121
    %s124 = sphi 0, %s123
    %s138 = sphi 0, %s124
    %s144 = sphi 0, %s146
    %s147 = sphi 0, %s144
    %s148 = sphi 0, %s147
    %s164 = sphi 0, %s148
    %s168 = sphi 0, %s168
    %s170 = sphi 0, %s168
    %s171 = sphi 0, %s170
    %s185 = sphi 0, %s171
    %s189 = sphi 0, %s189
    %s191 = sphi 0, %s189
    %s192 = sphi 0, %s191
    %s206 = sphi 0, %s192
    %s210 = sphi 0, %s210
    %s212 = sphi 0, %s210
    %s213 = sphi 0, %s212
    %s227 = sphi 0, %s213
    %s231 = sphi 0, %s231
    %s233 = sphi 0, %s231
    %s234 = sphi 0, %s233
    %s248 = sphi 0, %s234
    %s252 = sphi 0, %s252
    %s254 = sphi 0, %s252
    %s255 = sphi 0, %s254
    %s269 = sphi 0, %s255
    %s273 = sphi 0, %s273
    %s275 = sphi 0, %s273
    %s276 = sphi 0, %s275
    %s290 = sphi 0, %s276
    %s294 = sphi 0, %s294
    %s296 = sphi 0, %s294
    %s297 = sphi 0, %s296
    %s311 = sphi 0, %s297
    %s315 = sphi 0, %s315
    %s317 = sphi 0, %s315
    %s318 = sphi 0, %s317
    %s332 = sphi 0, %s318
    %s336 = sphi 0, %s336
    %s338 = sphi 0, %s336
    %s339 = sphi 0, %s338
    %s353 = sphi 0, %s339
    %s357 = sphi 0, %s357
    %s359 = sphi 0, %s357
    %s360 = sphi 0, %s359
    %s374 = sphi 0, %s360
    %s378 = sphi 0, %s378
    %s380 = sphi 0, %s378
    %s381 = sphi 0, %s380
    %s395 = sphi 0, %s381
    %s399 = sphi 0, %s399
    %s401 = sphi 0, %s399
    %s402 = sphi 0, %s401
    %s416 = sphi 0, %s402
    %s420 = sphi 0, %s420
    %s422 = sphi 0, %s420
    %s423 = sphi 0, %s422
    %s437 = sphi 0, %s423
    %s441 = sphi 0, %s441
    %s443 = sphi 0, %s441
    %s444 = sphi 0, %s443
    %s458 = sphi 0, %s444
    %s462 = sphi 0, %s462
    %s464 = sphi 0, %s462
    %s465 = sphi 0, %s464
    %s479 = sphi 0, %s465
    %s483 = sphi 0, %s483
    %s485 = sphi 0, %s483
    %s486 = sphi 0, %s485
    %s500 = sphi 0, %s486
    %s504 = sphi 0, %s504
    %s506 = sphi 0, %s504
    %s507 = sphi 0, %s506
    %s521 = sphi 0, %s507
    %s525 = sphi 0, %s525
    %s527 = sphi 0, %s525
    %s528 = sphi 0, %s527
    %s542 = sphi 0, %s528
    %s546 = sphi 0, %s546
    %s548 = sphi 0, %s546
    %s549 = sphi 0, %s548
    %s563 = sphi 0, %s549
    %s567 = sphi 0, %s567
    %s569 = sphi 0, %s567
    %s570 = sphi 0, %s569
    %s584 = sphi 0, %s570
    %s588 = sphi 0, %s588
    %s590 = sphi 0, %s588
    %s591 = sphi 0, %s590
    %s605 = sphi 0, %s591
    %s609 = sphi 0, %s609
    %s611 = sphi 0, %s609
    %s612 = sphi 0, %s611
    %s626 = sphi 0, %s612
    %s630 = sphi 0, %s630
    %s632 = sphi 0, %s630
    %s633 = sphi 0, %s632
    %s647 = sphi 0, %s633
    %s651 = sphi 0, %s651
    %s653 = sphi 0, %s651
    %s654 = sphi 0, %s653
    %s668 = sphi 0, %s654
    %s672 = sphi 0, %s672
    %s674 = sphi 0, %s672
    %s675 = sphi 0, %s674
    %s689 = sphi 0, %s675
    %s693 = sphi 0, %s693
    %s695 = sphi 0, %s693
    %s696 = sphi 0, %s695
    %s710 = sphi 0, %s696
    %s714 = sphi 0, %s714
    %s716 = sphi 0, %s714
    %s717 = sphi 0, %s716
    %s731 = sphi 0, %s717
    %s735 = sphi 0, %s735
    %s737 = sphi 0, %s735
    %s738 = sphi 0, %s737
    %s752 = sphi 0, %s738
    %s756 = sphi 0, %s756
    %s758 = sphi 0, %s756
    %s759 = sphi 0, %s758
    %s773 = sphi 0, %s759
    %s777 = sphi 0, %s777
    %s779 = sphi 0, %s777
    %s780 = sphi 0, %s779
    %s794 = sphi 0, %s780
    %s798 = sphi 0, %s798
    %s800 = sphi 0, %s798
    %s801 = sphi 0, %s800
    %s815 = sphi 0, %s801
    %s819 = sphi 0, %s819
    %s821 = sphi 0, %s819
    %s822 = sphi 0, %s821
    %s836 = sphi 0, %s822
    %s840 = sphi 0, %s840
    %s842 = sphi 0, %s840
    %s843 = sphi 0, %s842
    %s857 = sphi 0, %s843
    %s861 = sphi 0, %s861
    %s863 = sphi 0, %s861
    %s864 = sphi 0, %s863
    %s878 = sphi 0, %s864
    %s882 = sphi 0, %s882
    %s884 = sphi 0, %s882
    %s885 = sphi 0, %s884
    %s899 = sphi 0, %s885
    %s903 = sphi 0, %s903
    %s905 = sphi 0, %s903
    %s906 = sphi 0, %s905
    %s920 = sphi 0, %s906
    %s924 = sphi 0, %s924
    %s926 = sphi 0, %s924
    %s927 = sphi 0, %s926
    %s941 = sphi 0, %s927
    %s945 = sphi 0, %s945
    %s947 = sphi 0, %s945
    %s948 = sphi 0, %s947
    %s962 = sphi 0, %s948
    %s966 = sphi 0, %s966
    %s968 = sphi 0, %s966
    %s969 = sphi 0, %s968
    %s983 = sphi 0, %s969
    %s987 = sphi 0, %s987
    %s989 = sphi 0, %s987
    %s990 = sphi 0, %s989
    %s1004 = sphi 0, %s990
    %s1008 = sphi 0, %s1008
    %s1010 = sphi 0, %s1008
    %s1011 = sphi 0, %s1010
    %s1025 = sphi 0, %s1011
    %s1029 = sphi 0, %s1029
    %s1031 = sphi 0, %s1029
    %s1032 = sphi 0, %s1031
    %s1046 = sphi 0, %s1032
    %s1050 = sphi 0, %s1050
    %s1052 = sphi 0, %s1050
    %s1053 = sphi 0, %s1052
    %s1067 = sphi 0, %s1053
    %s1071 = sphi 0, %s1071
    %s1073 = sphi 0, %s1071
    %s1074 = sphi 0, %s1073
    %s1088 = sphi 0, %s1074
    %s1092 = sphi 0, %s1092
    %s1094 = sphi 0, %s1092
    %s1095 = sphi 0, %s1094
    %s1109 = sphi 0, %s1095
    %s1113 = sphi 0, %s1113
    %s1115 = sphi 0, %s1113
    %s1116 = sphi 0, %s1115
    %s1130 = sphi 0, %s1116
    %s1134 = sphi 0, %s1134
    %s1136 = sphi 0, %s1134
    %s1137 = sphi 0, %s1136
    %s1151 = sphi 0, %s1137
    %s1155 = sphi 0, %s1155
    %s1157 = sphi 0, %s1155
    %s1158 = sphi 0, %s1157
    %s1172 = sphi 0, %s1158
    %s1176 = sphi 0, %s1176
    %s1178 = sphi 0, %s1176
    %s1179 = sphi 0, %s1178
    %s1193 = sphi 0, %s1179
    %s1197 = sphi 0, %s1197
    %s1199 = sphi 0, %s1197
    %s1200 = sphi 0, %s1199
    %s1214 = sphi 0, %s1200
    %s1218 = sphi 0, %s1218
    %s1220 = sphi 0, %s1218
    %s1221 = sphi 0, %s1220
    %s1235 = sphi 0, %s1221
    %s1241 = sphi 0, %s1243
    %s1244 = sphi 0, %s1241
    %s1245 = sphi 0, %s1244
    %s1261 = sphi 0, %s1245
  $region4: #{tpu_custom_call.1} parent=0 // loop_header_branch
    %116 = sbr.rel (%p114) target = $region8
  $region5: #{tpu_custom_call.1} parent=0 // loop_body
    %s118 = ssub.s32 %s113, 1
    %s119 = ssub.s32 %s113, 2
    %s120 = sadd.s32 %s113, 1
    %s122 = sadd.s32 %s121, 1
    %p125 = scmp.eq.s32.totalorder %s113, 1
    %p126 = scmp.ne.s32.totalorder %s121, %s123
    %p127 = scmp.eq.s32.totalorder %s113, 0
    %p128 = por %p126, %p127
    %p129 = scmp.ne.s32.totalorder %s121, %s123
    %p130 = scmp.eq.s32.totalorder %s118, 1
    %p131 = por %p129, %p130
    %p132 = scmp.ne.s32.totalorder %s123, %s124
    %p133 = scmp.eq.s32.totalorder %s118, 0
    %p134 = por %p132, %p133
    %p135 = scmp.ne.s32.totalorder %s123, %s124
    %p136 = scmp.eq.s32.totalorder %s119, 1
    %p137 = por %p135, %p136
    %p139 = scmp.ne.s32.totalorder %s124, %s138
    %p140 = scmp.eq.s32.totalorder %s119, 0
    %p141 = por %p139, %p140
    %s142 = ssub.s32 %s113, %s120
    %p143 = scmp.eq.s32.totalorder %s142, 0
    %s145 = sadd.s32 %s144, 1
    %s146 = scalar_select %p143, %s144, %s145
    %p149 = pneg %p143
    %p150 = scmp.eq.s32.totalorder %s113, 1
    %p151 = por %p149, %p150
    %p152 = scmp.ne.s32.totalorder %s144, %s147
    %p153 = scmp.eq.s32.totalorder %s113, 0
    %p154 = por %p152, %p153
    %p155 = scmp.ne.s32.totalorder %s144, %s147
    %p156 = scmp.eq.s32.totalorder %s118, 1
    %p157 = por %p155, %p156
    %p158 = scmp.ne.s32.totalorder %s147, %s148
    %p159 = scmp.eq.s32.totalorder %s118, 0
    %p160 = por %p158, %p159
    %p161 = scmp.ne.s32.totalorder %s147, %s148
    %p162 = scmp.eq.s32.totalorder %s119, 1
    %p163 = por %p161, %p162
    %p165 = scmp.ne.s32.totalorder %s148, %s164
    %p166 = scmp.eq.s32.totalorder %s119, 0
    %p167 = por %p165, %p166
    %s169 = sadd.s32 %s168, 1
    %p172 = scmp.eq.s32.totalorder %s113, 1
    %p173 = scmp.ne.s32.totalorder %s168, %s170
    %p174 = scmp.eq.s32.totalorder %s113, 0
    %p175 = por %p173, %p174
    %p176 = scmp.ne.s32.totalorder %s168, %s170
    %p177 = scmp.eq.s32.totalorder %s118, 1
    %p178 = por %p176, %p177
    %p179 = scmp.ne.s32.totalorder %s170, %s171
    %p180 = scmp.eq.s32.totalorder %s118, 0
    %p181 = por %p179, %p180
    %p182 = scmp.ne.s32.totalorder %s170, %s171
    %p183 = scmp.eq.s32.totalorder %s119, 1
    %p184 = por %p182, %p183
    %p186 = scmp.ne.s32.totalorder %s171, %s185
    %p187 = scmp.eq.s32.totalorder %s119, 0
    %p188 = por %p186, %p187
    %s190 = sadd.s32 %s189, 1
    %p193 = scmp.eq.s32.totalorder %s113, 1
    %p194 = scmp.ne.s32.totalorder %s189, %s191
    %p195 = scmp.eq.s32.totalorder %s113, 0
    %p196 = por %p194, %p195
    %p197 = scmp.ne.s32.totalorder %s189, %s191
    %p198 = scmp.eq.s32.totalorder %s118, 1
    %p199 = por %p197, %p198
    %p200 = scmp.ne.s32.totalorder %s191, %s192
    %p201 = scmp.eq.s32.totalorder %s118, 0
    %p202 = por %p200, %p201
    %p203 = scmp.ne.s32.totalorder %s191, %s192
    %p204 = scmp.eq.s32.totalorder %s119, 1
    %p205 = por %p203, %p204
    %p207 = scmp.ne.s32.totalorder %s192, %s206
    %p208 = scmp.eq.s32.totalorder %s119, 0
    %p209 = por %p207, %p208
    %s211 = sadd.s32 %s210, 1
    %p214 = scmp.eq.s32.totalorder %s113, 1
    %p215 = scmp.ne.s32.totalorder %s210, %s212
    %p216 = scmp.eq.s32.totalorder %s113, 0
    %p217 = por %p215, %p216
    %p218 = scmp.ne.s32.totalorder %s210, %s212
    %p219 = scmp.eq.s32.totalorder %s118, 1
    %p220 = por %p218, %p219
    %p221 = scmp.ne.s32.totalorder %s212, %s213
    %p222 = scmp.eq.s32.totalorder %s118, 0
    %p223 = por %p221, %p222
    %p224 = scmp.ne.s32.totalorder %s212, %s213
    %p225 = scmp.eq.s32.totalorder %s119, 1
    %p226 = por %p224, %p225
    %p228 = scmp.ne.s32.totalorder %s213, %s227
    %p229 = scmp.eq.s32.totalorder %s119, 0
    %p230 = por %p228, %p229
    %s232 = sadd.s32 %s231, 1
    %p235 = scmp.eq.s32.totalorder %s113, 1
    %p236 = scmp.ne.s32.totalorder %s231, %s233
    %p237 = scmp.eq.s32.totalorder %s113, 0
    %p238 = por %p236, %p237
    %p239 = scmp.ne.s32.totalorder %s231, %s233
    %p240 = scmp.eq.s32.totalorder %s118, 1
    %p241 = por %p239, %p240
    %p242 = scmp.ne.s32.totalorder %s233, %s234
    %p243 = scmp.eq.s32.totalorder %s118, 0
    %p244 = por %p242, %p243
    %p245 = scmp.ne.s32.totalorder %s233, %s234
    %p246 = scmp.eq.s32.totalorder %s119, 1
    %p247 = por %p245, %p246
    %p249 = scmp.ne.s32.totalorder %s234, %s248
    %p250 = scmp.eq.s32.totalorder %s119, 0
    %p251 = por %p249, %p250
    %s253 = sadd.s32 %s252, 1
    %p256 = scmp.eq.s32.totalorder %s113, 1
    %p257 = scmp.ne.s32.totalorder %s252, %s254
    %p258 = scmp.eq.s32.totalorder %s113, 0
    %p259 = por %p257, %p258
    %p260 = scmp.ne.s32.totalorder %s252, %s254
    %p261 = scmp.eq.s32.totalorder %s118, 1
    %p262 = por %p260, %p261
    %p263 = scmp.ne.s32.totalorder %s254, %s255
    %p264 = scmp.eq.s32.totalorder %s118, 0
    %p265 = por %p263, %p264
    %p266 = scmp.ne.s32.totalorder %s254, %s255
    %p267 = scmp.eq.s32.totalorder %s119, 1
    %p268 = por %p266, %p267
    %p270 = scmp.ne.s32.totalorder %s255, %s269
    %p271 = scmp.eq.s32.totalorder %s119, 0
    %p272 = por %p270, %p271
    %s274 = sadd.s32 %s273, 1
    %p277 = scmp.eq.s32.totalorder %s113, 1
    %p278 = scmp.ne.s32.totalorder %s273, %s275
    %p279 = scmp.eq.s32.totalorder %s113, 0
    %p280 = por %p278, %p279
    %p281 = scmp.ne.s32.totalorder %s273, %s275
    %p282 = scmp.eq.s32.totalorder %s118, 1
    %p283 = por %p281, %p282
    %p284 = scmp.ne.s32.totalorder %s275, %s276
    %p285 = scmp.eq.s32.totalorder %s118, 0
    %p286 = por %p284, %p285
    %p287 = scmp.ne.s32.totalorder %s275, %s276
    %p288 = scmp.eq.s32.totalorder %s119, 1
    %p289 = por %p287, %p288
    %p291 = scmp.ne.s32.totalorder %s276, %s290
    %p292 = scmp.eq.s32.totalorder %s119, 0
    %p293 = por %p291, %p292
    %s295 = sadd.s32 %s294, 1
    %p298 = scmp.eq.s32.totalorder %s113, 1
    %p299 = scmp.ne.s32.totalorder %s294, %s296
    %p300 = scmp.eq.s32.totalorder %s113, 0
    %p301 = por %p299, %p300
    %p302 = scmp.ne.s32.totalorder %s294, %s296
    %p303 = scmp.eq.s32.totalorder %s118, 1
    %p304 = por %p302, %p303
    %p305 = scmp.ne.s32.totalorder %s296, %s297
    %p306 = scmp.eq.s32.totalorder %s118, 0
    %p307 = por %p305, %p306
    %p308 = scmp.ne.s32.totalorder %s296, %s297
    %p309 = scmp.eq.s32.totalorder %s119, 1
    %p310 = por %p308, %p309
    %p312 = scmp.ne.s32.totalorder %s297, %s311
    %p313 = scmp.eq.s32.totalorder %s119, 0
    %p314 = por %p312, %p313
    %s316 = sadd.s32 %s315, 1
    %p319 = scmp.eq.s32.totalorder %s113, 1
    %p320 = scmp.ne.s32.totalorder %s315, %s317
    %p321 = scmp.eq.s32.totalorder %s113, 0
    %p322 = por %p320, %p321
    %p323 = scmp.ne.s32.totalorder %s315, %s317
    %p324 = scmp.eq.s32.totalorder %s118, 1
    %p325 = por %p323, %p324
    %p326 = scmp.ne.s32.totalorder %s317, %s318
    %p327 = scmp.eq.s32.totalorder %s118, 0
    %p328 = por %p326, %p327
    %p329 = scmp.ne.s32.totalorder %s317, %s318
    %p330 = scmp.eq.s32.totalorder %s119, 1
    %p331 = por %p329, %p330
    %p333 = scmp.ne.s32.totalorder %s318, %s332
    %p334 = scmp.eq.s32.totalorder %s119, 0
    %p335 = por %p333, %p334
    %s337 = sadd.s32 %s336, 1
    %p340 = scmp.eq.s32.totalorder %s113, 1
    %p341 = scmp.ne.s32.totalorder %s336, %s338
    %p342 = scmp.eq.s32.totalorder %s113, 0
    %p343 = por %p341, %p342
    %p344 = scmp.ne.s32.totalorder %s336, %s338
    %p345 = scmp.eq.s32.totalorder %s118, 1
    %p346 = por %p344, %p345
    %p347 = scmp.ne.s32.totalorder %s338, %s339
    %p348 = scmp.eq.s32.totalorder %s118, 0
    %p349 = por %p347, %p348
    %p350 = scmp.ne.s32.totalorder %s338, %s339
    %p351 = scmp.eq.s32.totalorder %s119, 1
    %p352 = por %p350, %p351
    %p354 = scmp.ne.s32.totalorder %s339, %s353
    %p355 = scmp.eq.s32.totalorder %s119, 0
    %p356 = por %p354, %p355
    %s358 = sadd.s32 %s357, 1
    %p361 = scmp.eq.s32.totalorder %s113, 1
    %p362 = scmp.ne.s32.totalorder %s357, %s359
    %p363 = scmp.eq.s32.totalorder %s113, 0
    %p364 = por %p362, %p363
    %p365 = scmp.ne.s32.totalorder %s357, %s359
    %p366 = scmp.eq.s32.totalorder %s118, 1
    %p367 = por %p365, %p366
    %p368 = scmp.ne.s32.totalorder %s359, %s360
    %p369 = scmp.eq.s32.totalorder %s118, 0
    %p370 = por %p368, %p369
    %p371 = scmp.ne.s32.totalorder %s359, %s360
    %p372 = scmp.eq.s32.totalorder %s119, 1
    %p373 = por %p371, %p372
    %p375 = scmp.ne.s32.totalorder %s360, %s374
    %p376 = scmp.eq.s32.totalorder %s119, 0
    %p377 = por %p375, %p376
    %s379 = sadd.s32 %s378, 1
    %p382 = scmp.eq.s32.totalorder %s113, 1
    %p383 = scmp.ne.s32.totalorder %s378, %s380
    %p384 = scmp.eq.s32.totalorder %s113, 0
    %p385 = por %p383, %p384
    %p386 = scmp.ne.s32.totalorder %s378, %s380
    %p387 = scmp.eq.s32.totalorder %s118, 1
    %p388 = por %p386, %p387
    %p389 = scmp.ne.s32.totalorder %s380, %s381
    %p390 = scmp.eq.s32.totalorder %s118, 0
    %p391 = por %p389, %p390
    %p392 = scmp.ne.s32.totalorder %s380, %s381
    %p393 = scmp.eq.s32.totalorder %s119, 1
    %p394 = por %p392, %p393
    %p396 = scmp.ne.s32.totalorder %s381, %s395
    %p397 = scmp.eq.s32.totalorder %s119, 0
    %p398 = por %p396, %p397
    %s400 = sadd.s32 %s399, 1
    %p403 = scmp.eq.s32.totalorder %s113, 1
    %p404 = scmp.ne.s32.totalorder %s399, %s401
    %p405 = scmp.eq.s32.totalorder %s113, 0
    %p406 = por %p404, %p405
    %p407 = scmp.ne.s32.totalorder %s399, %s401
    %p408 = scmp.eq.s32.totalorder %s118, 1
    %p409 = por %p407, %p408
    %p410 = scmp.ne.s32.totalorder %s401, %s402
    %p411 = scmp.eq.s32.totalorder %s118, 0
    %p412 = por %p410, %p411
    %p413 = scmp.ne.s32.totalorder %s401, %s402
    %p414 = scmp.eq.s32.totalorder %s119, 1
    %p415 = por %p413, %p414
    %p417 = scmp.ne.s32.totalorder %s402, %s416
    %p418 = scmp.eq.s32.totalorder %s119, 0
    %p419 = por %p417, %p418
    %s421 = sadd.s32 %s420, 1
    %p424 = scmp.eq.s32.totalorder %s113, 1
    %p425 = scmp.ne.s32.totalorder %s420, %s422
    %p426 = scmp.eq.s32.totalorder %s113, 0
    %p427 = por %p425, %p426
    %p428 = scmp.ne.s32.totalorder %s420, %s422
    %p429 = scmp.eq.s32.totalorder %s118, 1
    %p430 = por %p428, %p429
    %p431 = scmp.ne.s32.totalorder %s422, %s423
    %p432 = scmp.eq.s32.totalorder %s118, 0
    %p433 = por %p431, %p432
    %p434 = scmp.ne.s32.totalorder %s422, %s423
    %p435 = scmp.eq.s32.totalorder %s119, 1
    %p436 = por %p434, %p435
    %p438 = scmp.ne.s32.totalorder %s423, %s437
    %p439 = scmp.eq.s32.totalorder %s119, 0
    %p440 = por %p438, %p439
    %s442 = sadd.s32 %s441, 1
    %p445 = scmp.eq.s32.totalorder %s113, 1
    %p446 = scmp.ne.s32.totalorder %s441, %s443
    %p447 = scmp.eq.s32.totalorder %s113, 0
    %p448 = por %p446, %p447
    %p449 = scmp.ne.s32.totalorder %s441, %s443
    %p450 = scmp.eq.s32.totalorder %s118, 1
    %p451 = por %p449, %p450
    %p452 = scmp.ne.s32.totalorder %s443, %s444
    %p453 = scmp.eq.s32.totalorder %s118, 0
    %p454 = por %p452, %p453
    %p455 = scmp.ne.s32.totalorder %s443, %s444
    %p456 = scmp.eq.s32.totalorder %s119, 1
    %p457 = por %p455, %p456
    %p459 = scmp.ne.s32.totalorder %s444, %s458
    %p460 = scmp.eq.s32.totalorder %s119, 0
    %p461 = por %p459, %p460
    %s463 = sadd.s32 %s462, 1
    %p466 = scmp.eq.s32.totalorder %s113, 1
    %p467 = scmp.ne.s32.totalorder %s462, %s464
    %p468 = scmp.eq.s32.totalorder %s113, 0
    %p469 = por %p467, %p468
    %p470 = scmp.ne.s32.totalorder %s462, %s464
    %p471 = scmp.eq.s32.totalorder %s118, 1
    %p472 = por %p470, %p471
    %p473 = scmp.ne.s32.totalorder %s464, %s465
    %p474 = scmp.eq.s32.totalorder %s118, 0
    %p475 = por %p473, %p474
    %p476 = scmp.ne.s32.totalorder %s464, %s465
    %p477 = scmp.eq.s32.totalorder %s119, 1
    %p478 = por %p476, %p477
    %p480 = scmp.ne.s32.totalorder %s465, %s479
    %p481 = scmp.eq.s32.totalorder %s119, 0
    %p482 = por %p480, %p481
    %s484 = sadd.s32 %s483, 1
    %p487 = scmp.eq.s32.totalorder %s113, 1
    %p488 = scmp.ne.s32.totalorder %s483, %s485
    %p489 = scmp.eq.s32.totalorder %s113, 0
    %p490 = por %p488, %p489
    %p491 = scmp.ne.s32.totalorder %s483, %s485
    %p492 = scmp.eq.s32.totalorder %s118, 1
    %p493 = por %p491, %p492
    %p494 = scmp.ne.s32.totalorder %s485, %s486
    %p495 = scmp.eq.s32.totalorder %s118, 0
    %p496 = por %p494, %p495
    %p497 = scmp.ne.s32.totalorder %s485, %s486
    %p498 = scmp.eq.s32.totalorder %s119, 1
    %p499 = por %p497, %p498
    %p501 = scmp.ne.s32.totalorder %s486, %s500
    %p502 = scmp.eq.s32.totalorder %s119, 0
    %p503 = por %p501, %p502
    %s505 = sadd.s32 %s504, 1
    %p508 = scmp.eq.s32.totalorder %s113, 1
    %p509 = scmp.ne.s32.totalorder %s504, %s506
    %p510 = scmp.eq.s32.totalorder %s113, 0
    %p511 = por %p509, %p510
    %p512 = scmp.ne.s32.totalorder %s504, %s506
    %p513 = scmp.eq.s32.totalorder %s118, 1
    %p514 = por %p512, %p513
    %p515 = scmp.ne.s32.totalorder %s506, %s507
    %p516 = scmp.eq.s32.totalorder %s118, 0
    %p517 = por %p515, %p516
    %p518 = scmp.ne.s32.totalorder %s506, %s507
    %p519 = scmp.eq.s32.totalorder %s119, 1
    %p520 = por %p518, %p519
    %p522 = scmp.ne.s32.totalorder %s507, %s521
    %p523 = scmp.eq.s32.totalorder %s119, 0
    %p524 = por %p522, %p523
    %s526 = sadd.s32 %s525, 1
    %p529 = scmp.eq.s32.totalorder %s113, 1
    %p530 = scmp.ne.s32.totalorder %s525, %s527
    %p531 = scmp.eq.s32.totalorder %s113, 0
    %p532 = por %p530, %p531
    %p533 = scmp.ne.s32.totalorder %s525, %s527
    %p534 = scmp.eq.s32.totalorder %s118, 1
    %p535 = por %p533, %p534
    %p536 = scmp.ne.s32.totalorder %s527, %s528
    %p537 = scmp.eq.s32.totalorder %s118, 0
    %p538 = por %p536, %p537
    %p539 = scmp.ne.s32.totalorder %s527, %s528
    %p540 = scmp.eq.s32.totalorder %s119, 1
    %p541 = por %p539, %p540
    %p543 = scmp.ne.s32.totalorder %s528, %s542
    %p544 = scmp.eq.s32.totalorder %s119, 0
    %p545 = por %p543, %p544
    %s547 = sadd.s32 %s546, 1
    %p550 = scmp.eq.s32.totalorder %s113, 1
    %p551 = scmp.ne.s32.totalorder %s546, %s548
    %p552 = scmp.eq.s32.totalorder %s113, 0
    %p553 = por %p551, %p552
    %p554 = scmp.ne.s32.totalorder %s546, %s548
    %p555 = scmp.eq.s32.totalorder %s118, 1
    %p556 = por %p554, %p555
    %p557 = scmp.ne.s32.totalorder %s548, %s549
    %p558 = scmp.eq.s32.totalorder %s118, 0
    %p559 = por %p557, %p558
    %p560 = scmp.ne.s32.totalorder %s548, %s549
    %p561 = scmp.eq.s32.totalorder %s119, 1
    %p562 = por %p560, %p561
    %p564 = scmp.ne.s32.totalorder %s549, %s563
    %p565 = scmp.eq.s32.totalorder %s119, 0
    %p566 = por %p564, %p565
    %s568 = sadd.s32 %s567, 1
    %p571 = scmp.eq.s32.totalorder %s113, 1
    %p572 = scmp.ne.s32.totalorder %s567, %s569
    %p573 = scmp.eq.s32.totalorder %s113, 0
    %p574 = por %p572, %p573
    %p575 = scmp.ne.s32.totalorder %s567, %s569
    %p576 = scmp.eq.s32.totalorder %s118, 1
    %p577 = por %p575, %p576
    %p578 = scmp.ne.s32.totalorder %s569, %s570
    %p579 = scmp.eq.s32.totalorder %s118, 0
    %p580 = por %p578, %p579
    %p581 = scmp.ne.s32.totalorder %s569, %s570
    %p582 = scmp.eq.s32.totalorder %s119, 1
    %p583 = por %p581, %p582
    %p585 = scmp.ne.s32.totalorder %s570, %s584
    %p586 = scmp.eq.s32.totalorder %s119, 0
    %p587 = por %p585, %p586
    %s589 = sadd.s32 %s588, 1
    %p592 = scmp.eq.s32.totalorder %s113, 1
    %p593 = scmp.ne.s32.totalorder %s588, %s590
    %p594 = scmp.eq.s32.totalorder %s113, 0
    %p595 = por %p593, %p594
    %p596 = scmp.ne.s32.totalorder %s588, %s590
    %p597 = scmp.eq.s32.totalorder %s118, 1
    %p598 = por %p596, %p597
    %p599 = scmp.ne.s32.totalorder %s590, %s591
    %p600 = scmp.eq.s32.totalorder %s118, 0
    %p601 = por %p599, %p600
    %p602 = scmp.ne.s32.totalorder %s590, %s591
    %p603 = scmp.eq.s32.totalorder %s119, 1
    %p604 = por %p602, %p603
    %p606 = scmp.ne.s32.totalorder %s591, %s605
    %p607 = scmp.eq.s32.totalorder %s119, 0
    %p608 = por %p606, %p607
    %s610 = sadd.s32 %s609, 1
    %p613 = scmp.eq.s32.totalorder %s113, 1
    %p614 = scmp.ne.s32.totalorder %s609, %s611
    %p615 = scmp.eq.s32.totalorder %s113, 0
    %p616 = por %p614, %p615
    %p617 = scmp.ne.s32.totalorder %s609, %s611
    %p618 = scmp.eq.s32.totalorder %s118, 1
    %p619 = por %p617, %p618
    %p620 = scmp.ne.s32.totalorder %s611, %s612
    %p621 = scmp.eq.s32.totalorder %s118, 0
    %p622 = por %p620, %p621
    %p623 = scmp.ne.s32.totalorder %s611, %s612
    %p624 = scmp.eq.s32.totalorder %s119, 1
    %p625 = por %p623, %p624
    %p627 = scmp.ne.s32.totalorder %s612, %s626
    %p628 = scmp.eq.s32.totalorder %s119, 0
    %p629 = por %p627, %p628
    %s631 = sadd.s32 %s630, 1
    %p634 = scmp.eq.s32.totalorder %s113, 1
    %p635 = scmp.ne.s32.totalorder %s630, %s632
    %p636 = scmp.eq.s32.totalorder %s113, 0
    %p637 = por %p635, %p636
    %p638 = scmp.ne.s32.totalorder %s630, %s632
    %p639 = scmp.eq.s32.totalorder %s118, 1
    %p640 = por %p638, %p639
    %p641 = scmp.ne.s32.totalorder %s632, %s633
    %p642 = scmp.eq.s32.totalorder %s118, 0
    %p643 = por %p641, %p642
    %p644 = scmp.ne.s32.totalorder %s632, %s633
    %p645 = scmp.eq.s32.totalorder %s119, 1
    %p646 = por %p644, %p645
    %p648 = scmp.ne.s32.totalorder %s633, %s647
    %p649 = scmp.eq.s32.totalorder %s119, 0
    %p650 = por %p648, %p649
    %s652 = sadd.s32 %s651, 1
    %p655 = scmp.eq.s32.totalorder %s113, 1
    %p656 = scmp.ne.s32.totalorder %s651, %s653
    %p657 = scmp.eq.s32.totalorder %s113, 0
    %p658 = por %p656, %p657
    %p659 = scmp.ne.s32.totalorder %s651, %s653
    %p660 = scmp.eq.s32.totalorder %s118, 1
    %p661 = por %p659, %p660
    %p662 = scmp.ne.s32.totalorder %s653, %s654
    %p663 = scmp.eq.s32.totalorder %s118, 0
    %p664 = por %p662, %p663
    %p665 = scmp.ne.s32.totalorder %s653, %s654
    %p666 = scmp.eq.s32.totalorder %s119, 1
    %p667 = por %p665, %p666
    %p669 = scmp.ne.s32.totalorder %s654, %s668
    %p670 = scmp.eq.s32.totalorder %s119, 0
    %p671 = por %p669, %p670
    %s673 = sadd.s32 %s672, 1
    %p676 = scmp.eq.s32.totalorder %s113, 1
    %p677 = scmp.ne.s32.totalorder %s672, %s674
    %p678 = scmp.eq.s32.totalorder %s113, 0
    %p679 = por %p677, %p678
    %p680 = scmp.ne.s32.totalorder %s672, %s674
    %p681 = scmp.eq.s32.totalorder %s118, 1
    %p682 = por %p680, %p681
    %p683 = scmp.ne.s32.totalorder %s674, %s675
    %p684 = scmp.eq.s32.totalorder %s118, 0
    %p685 = por %p683, %p684
    %p686 = scmp.ne.s32.totalorder %s674, %s675
    %p687 = scmp.eq.s32.totalorder %s119, 1
    %p688 = por %p686, %p687
    %p690 = scmp.ne.s32.totalorder %s675, %s689
    %p691 = scmp.eq.s32.totalorder %s119, 0
    %p692 = por %p690, %p691
    %s694 = sadd.s32 %s693, 1
    %p697 = scmp.eq.s32.totalorder %s113, 1
    %p698 = scmp.ne.s32.totalorder %s693, %s695
    %p699 = scmp.eq.s32.totalorder %s113, 0
    %p700 = por %p698, %p699
    %p701 = scmp.ne.s32.totalorder %s693, %s695
    %p702 = scmp.eq.s32.totalorder %s118, 1
    %p703 = por %p701, %p702
    %p704 = scmp.ne.s32.totalorder %s695, %s696
    %p705 = scmp.eq.s32.totalorder %s118, 0
    %p706 = por %p704, %p705
    %p707 = scmp.ne.s32.totalorder %s695, %s696
    %p708 = scmp.eq.s32.totalorder %s119, 1
    %p709 = por %p707, %p708
    %p711 = scmp.ne.s32.totalorder %s696, %s710
    %p712 = scmp.eq.s32.totalorder %s119, 0
    %p713 = por %p711, %p712
    %s715 = sadd.s32 %s714, 1
    %p718 = scmp.eq.s32.totalorder %s113, 1
    %p719 = scmp.ne.s32.totalorder %s714, %s716
    %p720 = scmp.eq.s32.totalorder %s113, 0
    %p721 = por %p719, %p720
    %p722 = scmp.ne.s32.totalorder %s714, %s716
    %p723 = scmp.eq.s32.totalorder %s118, 1
    %p724 = por %p722, %p723
    %p725 = scmp.ne.s32.totalorder %s716, %s717
    %p726 = scmp.eq.s32.totalorder %s118, 0
    %p727 = por %p725, %p726
    %p728 = scmp.ne.s32.totalorder %s716, %s717
    %p729 = scmp.eq.s32.totalorder %s119, 1
    %p730 = por %p728, %p729
    %p732 = scmp.ne.s32.totalorder %s717, %s731
    %p733 = scmp.eq.s32.totalorder %s119, 0
    %p734 = por %p732, %p733
    %s736 = sadd.s32 %s735, 1
    %p739 = scmp.eq.s32.totalorder %s113, 1
    %p740 = scmp.ne.s32.totalorder %s735, %s737
    %p741 = scmp.eq.s32.totalorder %s113, 0
    %p742 = por %p740, %p741
    %p743 = scmp.ne.s32.totalorder %s735, %s737
    %p744 = scmp.eq.s32.totalorder %s118, 1
    %p745 = por %p743, %p744
    %p746 = scmp.ne.s32.totalorder %s737, %s738
    %p747 = scmp.eq.s32.totalorder %s118, 0
    %p748 = por %p746, %p747
    %p749 = scmp.ne.s32.totalorder %s737, %s738
    %p750 = scmp.eq.s32.totalorder %s119, 1
    %p751 = por %p749, %p750
    %p753 = scmp.ne.s32.totalorder %s738, %s752
    %p754 = scmp.eq.s32.totalorder %s119, 0
    %p755 = por %p753, %p754
    %s757 = sadd.s32 %s756, 1
    %p760 = scmp.eq.s32.totalorder %s113, 1
    %p761 = scmp.ne.s32.totalorder %s756, %s758
    %p762 = scmp.eq.s32.totalorder %s113, 0
    %p763 = por %p761, %p762
    %p764 = scmp.ne.s32.totalorder %s756, %s758
    %p765 = scmp.eq.s32.totalorder %s118, 1
    %p766 = por %p764, %p765
    %p767 = scmp.ne.s32.totalorder %s758, %s759
    %p768 = scmp.eq.s32.totalorder %s118, 0
    %p769 = por %p767, %p768
    %p770 = scmp.ne.s32.totalorder %s758, %s759
    %p771 = scmp.eq.s32.totalorder %s119, 1
    %p772 = por %p770, %p771
    %p774 = scmp.ne.s32.totalorder %s759, %s773
    %p775 = scmp.eq.s32.totalorder %s119, 0
    %p776 = por %p774, %p775
    %s778 = sadd.s32 %s777, 1
    %p781 = scmp.eq.s32.totalorder %s113, 1
    %p782 = scmp.ne.s32.totalorder %s777, %s779
    %p783 = scmp.eq.s32.totalorder %s113, 0
    %p784 = por %p782, %p783
    %p785 = scmp.ne.s32.totalorder %s777, %s779
    %p786 = scmp.eq.s32.totalorder %s118, 1
    %p787 = por %p785, %p786
    %p788 = scmp.ne.s32.totalorder %s779, %s780
    %p789 = scmp.eq.s32.totalorder %s118, 0
    %p790 = por %p788, %p789
    %p791 = scmp.ne.s32.totalorder %s779, %s780
    %p792 = scmp.eq.s32.totalorder %s119, 1
    %p793 = por %p791, %p792
    %p795 = scmp.ne.s32.totalorder %s780, %s794
    %p796 = scmp.eq.s32.totalorder %s119, 0
    %p797 = por %p795, %p796
    %s799 = sadd.s32 %s798, 1
    %p802 = scmp.eq.s32.totalorder %s113, 1
    %p803 = scmp.ne.s32.totalorder %s798, %s800
    %p804 = scmp.eq.s32.totalorder %s113, 0
    %p805 = por %p803, %p804
    %p806 = scmp.ne.s32.totalorder %s798, %s800
    %p807 = scmp.eq.s32.totalorder %s118, 1
    %p808 = por %p806, %p807
    %p809 = scmp.ne.s32.totalorder %s800, %s801
    %p810 = scmp.eq.s32.totalorder %s118, 0
    %p811 = por %p809, %p810
    %p812 = scmp.ne.s32.totalorder %s800, %s801
    %p813 = scmp.eq.s32.totalorder %s119, 1
    %p814 = por %p812, %p813
    %p816 = scmp.ne.s32.totalorder %s801, %s815
    %p817 = scmp.eq.s32.totalorder %s119, 0
    %p818 = por %p816, %p817
    %s820 = sadd.s32 %s819, 1
    %p823 = scmp.eq.s32.totalorder %s113, 1
    %p824 = scmp.ne.s32.totalorder %s819, %s821
    %p825 = scmp.eq.s32.totalorder %s113, 0
    %p826 = por %p824, %p825
    %p827 = scmp.ne.s32.totalorder %s819, %s821
    %p828 = scmp.eq.s32.totalorder %s118, 1
    %p829 = por %p827, %p828
    %p830 = scmp.ne.s32.totalorder %s821, %s822
    %p831 = scmp.eq.s32.totalorder %s118, 0
    %p832 = por %p830, %p831
    %p833 = scmp.ne.s32.totalorder %s821, %s822
    %p834 = scmp.eq.s32.totalorder %s119, 1
    %p835 = por %p833, %p834
    %p837 = scmp.ne.s32.totalorder %s822, %s836
    %p838 = scmp.eq.s32.totalorder %s119, 0
    %p839 = por %p837, %p838
    %s841 = sadd.s32 %s840, 1
    %p844 = scmp.eq.s32.totalorder %s113, 1
    %p845 = scmp.ne.s32.totalorder %s840, %s842
    %p846 = scmp.eq.s32.totalorder %s113, 0
    %p847 = por %p845, %p846
    %p848 = scmp.ne.s32.totalorder %s840, %s842
    %p849 = scmp.eq.s32.totalorder %s118, 1
    %p850 = por %p848, %p849
    %p851 = scmp.ne.s32.totalorder %s842, %s843
    %p852 = scmp.eq.s32.totalorder %s118, 0
    %p853 = por %p851, %p852
    %p854 = scmp.ne.s32.totalorder %s842, %s843
    %p855 = scmp.eq.s32.totalorder %s119, 1
    %p856 = por %p854, %p855
    %p858 = scmp.ne.s32.totalorder %s843, %s857
    %p859 = scmp.eq.s32.totalorder %s119, 0
    %p860 = por %p858, %p859
    %s862 = sadd.s32 %s861, 1
    %p865 = scmp.eq.s32.totalorder %s113, 1
    %p866 = scmp.ne.s32.totalorder %s861, %s863
    %p867 = scmp.eq.s32.totalorder %s113, 0
    %p868 = por %p866, %p867
    %p869 = scmp.ne.s32.totalorder %s861, %s863
    %p870 = scmp.eq.s32.totalorder %s118, 1
    %p871 = por %p869, %p870
    %p872 = scmp.ne.s32.totalorder %s863, %s864
    %p873 = scmp.eq.s32.totalorder %s118, 0
    %p874 = por %p872, %p873
    %p875 = scmp.ne.s32.totalorder %s863, %s864
    %p876 = scmp.eq.s32.totalorder %s119, 1
    %p877 = por %p875, %p876
    %p879 = scmp.ne.s32.totalorder %s864, %s878
    %p880 = scmp.eq.s32.totalorder %s119, 0
    %p881 = por %p879, %p880
    %s883 = sadd.s32 %s882, 1
    %p886 = scmp.eq.s32.totalorder %s113, 1
    %p887 = scmp.ne.s32.totalorder %s882, %s884
    %p888 = scmp.eq.s32.totalorder %s113, 0
    %p889 = por %p887, %p888
    %p890 = scmp.ne.s32.totalorder %s882, %s884
    %p891 = scmp.eq.s32.totalorder %s118, 1
    %p892 = por %p890, %p891
    %p893 = scmp.ne.s32.totalorder %s884, %s885
    %p894 = scmp.eq.s32.totalorder %s118, 0
    %p895 = por %p893, %p894
    %p896 = scmp.ne.s32.totalorder %s884, %s885
    %p897 = scmp.eq.s32.totalorder %s119, 1
    %p898 = por %p896, %p897
    %p900 = scmp.ne.s32.totalorder %s885, %s899
    %p901 = scmp.eq.s32.totalorder %s119, 0
    %p902 = por %p900, %p901
    %s904 = sadd.s32 %s903, 1
    %p907 = scmp.eq.s32.totalorder %s113, 1
    %p908 = scmp.ne.s32.totalorder %s903, %s905
    %p909 = scmp.eq.s32.totalorder %s113, 0
    %p910 = por %p908, %p909
    %p911 = scmp.ne.s32.totalorder %s903, %s905
    %p912 = scmp.eq.s32.totalorder %s118, 1
    %p913 = por %p911, %p912
    %p914 = scmp.ne.s32.totalorder %s905, %s906
    %p915 = scmp.eq.s32.totalorder %s118, 0
    %p916 = por %p914, %p915
    %p917 = scmp.ne.s32.totalorder %s905, %s906
    %p918 = scmp.eq.s32.totalorder %s119, 1
    %p919 = por %p917, %p918
    %p921 = scmp.ne.s32.totalorder %s906, %s920
    %p922 = scmp.eq.s32.totalorder %s119, 0
    %p923 = por %p921, %p922
    %s925 = sadd.s32 %s924, 1
    %p928 = scmp.eq.s32.totalorder %s113, 1
    %p929 = scmp.ne.s32.totalorder %s924, %s926
    %p930 = scmp.eq.s32.totalorder %s113, 0
    %p931 = por %p929, %p930
    %p932 = scmp.ne.s32.totalorder %s924, %s926
    %p933 = scmp.eq.s32.totalorder %s118, 1
    %p934 = por %p932, %p933
    %p935 = scmp.ne.s32.totalorder %s926, %s927
    %p936 = scmp.eq.s32.totalorder %s118, 0
    %p937 = por %p935, %p936
    %p938 = scmp.ne.s32.totalorder %s926, %s927
    %p939 = scmp.eq.s32.totalorder %s119, 1
    %p940 = por %p938, %p939
    %p942 = scmp.ne.s32.totalorder %s927, %s941
    %p943 = scmp.eq.s32.totalorder %s119, 0
    %p944 = por %p942, %p943
    %s946 = sadd.s32 %s945, 1
    %p949 = scmp.eq.s32.totalorder %s113, 1
    %p950 = scmp.ne.s32.totalorder %s945, %s947
    %p951 = scmp.eq.s32.totalorder %s113, 0
    %p952 = por %p950, %p951
    %p953 = scmp.ne.s32.totalorder %s945, %s947
    %p954 = scmp.eq.s32.totalorder %s118, 1
    %p955 = por %p953, %p954
    %p956 = scmp.ne.s32.totalorder %s947, %s948
    %p957 = scmp.eq.s32.totalorder %s118, 0
    %p958 = por %p956, %p957
    %p959 = scmp.ne.s32.totalorder %s947, %s948
    %p960 = scmp.eq.s32.totalorder %s119, 1
    %p961 = por %p959, %p960
    %p963 = scmp.ne.s32.totalorder %s948, %s962
    %p964 = scmp.eq.s32.totalorder %s119, 0
    %p965 = por %p963, %p964
    %s967 = sadd.s32 %s966, 1
    %p970 = scmp.eq.s32.totalorder %s113, 1
    %p971 = scmp.ne.s32.totalorder %s966, %s968
    %p972 = scmp.eq.s32.totalorder %s113, 0
    %p973 = por %p971, %p972
    %p974 = scmp.ne.s32.totalorder %s966, %s968
    %p975 = scmp.eq.s32.totalorder %s118, 1
    %p976 = por %p974, %p975
    %p977 = scmp.ne.s32.totalorder %s968, %s969
    %p978 = scmp.eq.s32.totalorder %s118, 0
    %p979 = por %p977, %p978
    %p980 = scmp.ne.s32.totalorder %s968, %s969
    %p981 = scmp.eq.s32.totalorder %s119, 1
    %p982 = por %p980, %p981
    %p984 = scmp.ne.s32.totalorder %s969, %s983
    %p985 = scmp.eq.s32.totalorder %s119, 0
    %p986 = por %p984, %p985
    %s988 = sadd.s32 %s987, 1
    %p991 = scmp.eq.s32.totalorder %s113, 1
    %p992 = scmp.ne.s32.totalorder %s987, %s989
    %p993 = scmp.eq.s32.totalorder %s113, 0
    %p994 = por %p992, %p993
    %p995 = scmp.ne.s32.totalorder %s987, %s989
    %p996 = scmp.eq.s32.totalorder %s118, 1
    %p997 = por %p995, %p996
    %p998 = scmp.ne.s32.totalorder %s989, %s990
    %p999 = scmp.eq.s32.totalorder %s118, 0
    %p1000 = por %p998, %p999
    %p1001 = scmp.ne.s32.totalorder %s989, %s990
    %p1002 = scmp.eq.s32.totalorder %s119, 1
    %p1003 = por %p1001, %p1002
    %p1005 = scmp.ne.s32.totalorder %s990, %s1004
    %p1006 = scmp.eq.s32.totalorder %s119, 0
    %p1007 = por %p1005, %p1006
    %s1009 = sadd.s32 %s1008, 1
    %p1012 = scmp.eq.s32.totalorder %s113, 1
    %p1013 = scmp.ne.s32.totalorder %s1008, %s1010
    %p1014 = scmp.eq.s32.totalorder %s113, 0
    %p1015 = por %p1013, %p1014
    %p1016 = scmp.ne.s32.totalorder %s1008, %s1010
    %p1017 = scmp.eq.s32.totalorder %s118, 1
    %p1018 = por %p1016, %p1017
    %p1019 = scmp.ne.s32.totalorder %s1010, %s1011
    %p1020 = scmp.eq.s32.totalorder %s118, 0
    %p1021 = por %p1019, %p1020
    %p1022 = scmp.ne.s32.totalorder %s1010, %s1011
    %p1023 = scmp.eq.s32.totalorder %s119, 1
    %p1024 = por %p1022, %p1023
    %p1026 = scmp.ne.s32.totalorder %s1011, %s1025
    %p1027 = scmp.eq.s32.totalorder %s119, 0
    %p1028 = por %p1026, %p1027
    %s1030 = sadd.s32 %s1029, 1
    %p1033 = scmp.eq.s32.totalorder %s113, 1
    %p1034 = scmp.ne.s32.totalorder %s1029, %s1031
    %p1035 = scmp.eq.s32.totalorder %s113, 0
    %p1036 = por %p1034, %p1035
    %p1037 = scmp.ne.s32.totalorder %s1029, %s1031
    %p1038 = scmp.eq.s32.totalorder %s118, 1
    %p1039 = por %p1037, %p1038
    %p1040 = scmp.ne.s32.totalorder %s1031, %s1032
    %p1041 = scmp.eq.s32.totalorder %s118, 0
    %p1042 = por %p1040, %p1041
    %p1043 = scmp.ne.s32.totalorder %s1031, %s1032
    %p1044 = scmp.eq.s32.totalorder %s119, 1
    %p1045 = por %p1043, %p1044
    %p1047 = scmp.ne.s32.totalorder %s1032, %s1046
    %p1048 = scmp.eq.s32.totalorder %s119, 0
    %p1049 = por %p1047, %p1048
    %s1051 = sadd.s32 %s1050, 1
    %p1054 = scmp.eq.s32.totalorder %s113, 1
    %p1055 = scmp.ne.s32.totalorder %s1050, %s1052
    %p1056 = scmp.eq.s32.totalorder %s113, 0
    %p1057 = por %p1055, %p1056
    %p1058 = scmp.ne.s32.totalorder %s1050, %s1052
    %p1059 = scmp.eq.s32.totalorder %s118, 1
    %p1060 = por %p1058, %p1059
    %p1061 = scmp.ne.s32.totalorder %s1052, %s1053
    %p1062 = scmp.eq.s32.totalorder %s118, 0
    %p1063 = por %p1061, %p1062
    %p1064 = scmp.ne.s32.totalorder %s1052, %s1053
    %p1065 = scmp.eq.s32.totalorder %s119, 1
    %p1066 = por %p1064, %p1065
    %p1068 = scmp.ne.s32.totalorder %s1053, %s1067
    %p1069 = scmp.eq.s32.totalorder %s119, 0
    %p1070 = por %p1068, %p1069
    %s1072 = sadd.s32 %s1071, 1
    %p1075 = scmp.eq.s32.totalorder %s113, 1
    %p1076 = scmp.ne.s32.totalorder %s1071, %s1073
    %p1077 = scmp.eq.s32.totalorder %s113, 0
    %p1078 = por %p1076, %p1077
    %p1079 = scmp.ne.s32.totalorder %s1071, %s1073
    %p1080 = scmp.eq.s32.totalorder %s118, 1
    %p1081 = por %p1079, %p1080
    %p1082 = scmp.ne.s32.totalorder %s1073, %s1074
    %p1083 = scmp.eq.s32.totalorder %s118, 0
    %p1084 = por %p1082, %p1083
    %p1085 = scmp.ne.s32.totalorder %s1073, %s1074
    %p1086 = scmp.eq.s32.totalorder %s119, 1
    %p1087 = por %p1085, %p1086
    %p1089 = scmp.ne.s32.totalorder %s1074, %s1088
    %p1090 = scmp.eq.s32.totalorder %s119, 0
    %p1091 = por %p1089, %p1090
    %s1093 = sadd.s32 %s1092, 1
    %p1096 = scmp.eq.s32.totalorder %s113, 1
    %p1097 = scmp.ne.s32.totalorder %s1092, %s1094
    %p1098 = scmp.eq.s32.totalorder %s113, 0
    %p1099 = por %p1097, %p1098
    %p1100 = scmp.ne.s32.totalorder %s1092, %s1094
    %p1101 = scmp.eq.s32.totalorder %s118, 1
    %p1102 = por %p1100, %p1101
    %p1103 = scmp.ne.s32.totalorder %s1094, %s1095
    %p1104 = scmp.eq.s32.totalorder %s118, 0
    %p1105 = por %p1103, %p1104
    %p1106 = scmp.ne.s32.totalorder %s1094, %s1095
    %p1107 = scmp.eq.s32.totalorder %s119, 1
    %p1108 = por %p1106, %p1107
    %p1110 = scmp.ne.s32.totalorder %s1095, %s1109
    %p1111 = scmp.eq.s32.totalorder %s119, 0
    %p1112 = por %p1110, %p1111
    %s1114 = sadd.s32 %s1113, 1
    %p1117 = scmp.eq.s32.totalorder %s113, 1
    %p1118 = scmp.ne.s32.totalorder %s1113, %s1115
    %p1119 = scmp.eq.s32.totalorder %s113, 0
    %p1120 = por %p1118, %p1119
    %p1121 = scmp.ne.s32.totalorder %s1113, %s1115
    %p1122 = scmp.eq.s32.totalorder %s118, 1
    %p1123 = por %p1121, %p1122
    %p1124 = scmp.ne.s32.totalorder %s1115, %s1116
    %p1125 = scmp.eq.s32.totalorder %s118, 0
    %p1126 = por %p1124, %p1125
    %p1127 = scmp.ne.s32.totalorder %s1115, %s1116
    %p1128 = scmp.eq.s32.totalorder %s119, 1
    %p1129 = por %p1127, %p1128
    %p1131 = scmp.ne.s32.totalorder %s1116, %s1130
    %p1132 = scmp.eq.s32.totalorder %s119, 0
    %p1133 = por %p1131, %p1132
    %s1135 = sadd.s32 %s1134, 1
    %p1138 = scmp.eq.s32.totalorder %s113, 1
    %p1139 = scmp.ne.s32.totalorder %s1134, %s1136
    %p1140 = scmp.eq.s32.totalorder %s113, 0
    %p1141 = por %p1139, %p1140
    %p1142 = scmp.ne.s32.totalorder %s1134, %s1136
    %p1143 = scmp.eq.s32.totalorder %s118, 1
    %p1144 = por %p1142, %p1143
    %p1145 = scmp.ne.s32.totalorder %s1136, %s1137
    %p1146 = scmp.eq.s32.totalorder %s118, 0
    %p1147 = por %p1145, %p1146
    %p1148 = scmp.ne.s32.totalorder %s1136, %s1137
    %p1149 = scmp.eq.s32.totalorder %s119, 1
    %p1150 = por %p1148, %p1149
    %p1152 = scmp.ne.s32.totalorder %s1137, %s1151
    %p1153 = scmp.eq.s32.totalorder %s119, 0
    %p1154 = por %p1152, %p1153
    %s1156 = sadd.s32 %s1155, 1
    %p1159 = scmp.eq.s32.totalorder %s113, 1
    %p1160 = scmp.ne.s32.totalorder %s1155, %s1157
    %p1161 = scmp.eq.s32.totalorder %s113, 0
    %p1162 = por %p1160, %p1161
    %p1163 = scmp.ne.s32.totalorder %s1155, %s1157
    %p1164 = scmp.eq.s32.totalorder %s118, 1
    %p1165 = por %p1163, %p1164
    %p1166 = scmp.ne.s32.totalorder %s1157, %s1158
    %p1167 = scmp.eq.s32.totalorder %s118, 0
    %p1168 = por %p1166, %p1167
    %p1169 = scmp.ne.s32.totalorder %s1157, %s1158
    %p1170 = scmp.eq.s32.totalorder %s119, 1
    %p1171 = por %p1169, %p1170
    %p1173 = scmp.ne.s32.totalorder %s1158, %s1172
    %p1174 = scmp.eq.s32.totalorder %s119, 0
    %p1175 = por %p1173, %p1174
    %s1177 = sadd.s32 %s1176, 1
    %p1180 = scmp.eq.s32.totalorder %s113, 1
    %p1181 = scmp.ne.s32.totalorder %s1176, %s1178
    %p1182 = scmp.eq.s32.totalorder %s113, 0
    %p1183 = por %p1181, %p1182
    %p1184 = scmp.ne.s32.totalorder %s1176, %s1178
    %p1185 = scmp.eq.s32.totalorder %s118, 1
    %p1186 = por %p1184, %p1185
    %p1187 = scmp.ne.s32.totalorder %s1178, %s1179
    %p1188 = scmp.eq.s32.totalorder %s118, 0
    %p1189 = por %p1187, %p1188
    %p1190 = scmp.ne.s32.totalorder %s1178, %s1179
    %p1191 = scmp.eq.s32.totalorder %s119, 1
    %p1192 = por %p1190, %p1191
    %p1194 = scmp.ne.s32.totalorder %s1179, %s1193
    %p1195 = scmp.eq.s32.totalorder %s119, 0
    %p1196 = por %p1194, %p1195
    %s1198 = sadd.s32 %s1197, 1
    %p1201 = scmp.eq.s32.totalorder %s113, 1
    %p1202 = scmp.ne.s32.totalorder %s1197, %s1199
    %p1203 = scmp.eq.s32.totalorder %s113, 0
    %p1204 = por %p1202, %p1203
    %p1205 = scmp.ne.s32.totalorder %s1197, %s1199
    %p1206 = scmp.eq.s32.totalorder %s118, 1
    %p1207 = por %p1205, %p1206
    %p1208 = scmp.ne.s32.totalorder %s1199, %s1200
    %p1209 = scmp.eq.s32.totalorder %s118, 0
    %p1210 = por %p1208, %p1209
    %p1211 = scmp.ne.s32.totalorder %s1199, %s1200
    %p1212 = scmp.eq.s32.totalorder %s119, 1
    %p1213 = por %p1211, %p1212
    %p1215 = scmp.ne.s32.totalorder %s1200, %s1214
    %p1216 = scmp.eq.s32.totalorder %s119, 0
    %p1217 = por %p1215, %p1216
    %s1219 = sadd.s32 %s1218, 1
    %p1222 = scmp.eq.s32.totalorder %s113, 1
    %p1223 = scmp.ne.s32.totalorder %s1218, %s1220
    %p1224 = scmp.eq.s32.totalorder %s113, 0
    %p1225 = por %p1223, %p1224
    %p1226 = scmp.ne.s32.totalorder %s1218, %s1220
    %p1227 = scmp.eq.s32.totalorder %s118, 1
    %p1228 = por %p1226, %p1227
    %p1229 = scmp.ne.s32.totalorder %s1220, %s1221
    %p1230 = scmp.eq.s32.totalorder %s118, 0
    %p1231 = por %p1229, %p1230
    %p1232 = scmp.ne.s32.totalorder %s1220, %s1221
    %p1233 = scmp.eq.s32.totalorder %s119, 1
    %p1234 = por %p1232, %p1233
    %p1236 = scmp.ne.s32.totalorder %s1221, %s1235
    %p1237 = scmp.eq.s32.totalorder %s119, 0
    %p1238 = por %p1236, %p1237
    %s1239 = ssub.s32 %s113, %s120
    %p1240 = scmp.eq.s32.totalorder %s1239, 0
    %s1242 = sadd.s32 %s1241, 1
    %s1243 = scalar_select %p1240, %s1241, %s1242
    %p1246 = pneg %p1240
    %p1247 = scmp.eq.s32.totalorder %s113, 1
    %p1248 = por %p1246, %p1247
    %p1249 = scmp.ne.s32.totalorder %s1241, %s1244
    %p1250 = scmp.eq.s32.totalorder %s113, 0
    %p1251 = por %p1249, %p1250
    %p1252 = scmp.ne.s32.totalorder %s1241, %s1244
    %p1253 = scmp.eq.s32.totalorder %s118, 1
    %p1254 = por %p1252, %p1253
    %p1255 = scmp.ne.s32.totalorder %s1244, %s1245
    %p1256 = scmp.eq.s32.totalorder %s118, 0
    %p1257 = por %p1255, %p1256
    %p1258 = scmp.ne.s32.totalorder %s1244, %s1245
    %p1259 = scmp.eq.s32.totalorder %s119, 1
    %p1260 = por %p1258, %p1259
    %p1262 = scmp.ne.s32.totalorder %s1245, %s1261
    %p1263 = scmp.eq.s32.totalorder %s119, 0
    %p1264 = por %p1262, %p1263
    %p1265 = scmp.le.s32.totalorder 1, %s113
    %p1266 = scmp.lt.s32.totalorder %s113, 3
    %p1267 = pnand %p1265, %p1266
    %p1268 = pneg %p1267
    // Predicated region
    $region9: #{tpu_custom_call.1} parent=5 // pred_check
      _
    $region10: #{tpu_custom_call.1} parent=5 // pred_check_branch
      %1270 = sbr.rel (%p1267) target = $region12
    $region11: #{tpu_custom_call.1} parent=5 // pred_region
      %s1271 = ssub.s32 %s113, 1
      // Predicated region
      $region13: #{tpu_custom_call.1} parent=11 // pred_check
        %p1272 = pneg %p134
      $region14: #{tpu_custom_call.1} parent=11 // pred_check_branch
        %1274 = sbr.rel (%p1272) target = $region16
      $region15: #{tpu_custom_call.1} parent=11 // pred_region
        _
      $region16: #{tpu_custom_call.1} parent=11 // pred_fallthru
        _
      // Predicated region
      $region17: #{tpu_custom_call.1} parent=11 // pred_check
        %p1275 = pneg %p181
      $region18: #{tpu_custom_call.1} parent=11 // pred_check_branch
        %1277 = sbr.rel (%p1275) target = $region20
      $region19: #{tpu_custom_call.1} parent=11 // pred_region
        _
      $region20: #{tpu_custom_call.1} parent=11 // pred_fallthru
        _
      // Predicated region
      $region21: #{tpu_custom_call.1} parent=11 // pred_check
        %p1278 = pneg %p202
      $region22: #{tpu_custom_call.1} parent=11 // pred_check_branch
        %1280 = sbr.rel (%p1278) target = $region24
      $region23: #{tpu_custom_call.1} parent=11 // pred_region
        _
      $region24: #{tpu_custom_call.1} parent=11 // pred_fallthru
        _
      // Predicated region
      $region25: #{tpu_custom_call.1} parent=11 // pred_check
        %p1281 = pneg %p223
      $region26: #{tpu_custom_call.1} parent=11 // pred_check_branch
        %1283 = sbr.rel (%p1281) target = $region28
      $region27: #{tpu_custom_call.1} parent=11 // pred_region
        _
      $region28: #{tpu_custom_call.1} parent=11 // pred_fallthru
        _
      // Predicated region
      $region29: #{tpu_custom_call.1} parent=11 // pred_check
        %p1284 = pneg %p244
      $region30: #{tpu_custom_call.1} parent=11 // pred_check_branch
        %1286 = sbr.rel (%p1284) target = $region32
      $region31: #{tpu_custom_call.1} parent=11 // pred_region
        _
      $region32: #{tpu_custom_call.1} parent=11 // pred_fallthru
        _
      // Predicated region
      $region33: #{tpu_custom_call.1} parent=11 // pred_check
        %p1287 = pneg %p265
      $region34: #{tpu_custom_call.1} parent=11 // pred_check_branch
        %1289 = sbr.rel (%p1287) target = $region36
      $region35: #{tpu_custom_call.1} parent=11 // pred_region
        _
      $region36: #{tpu_custom_call.1} parent=11 // pred_fallthru
        _
      // Predicated region
      $region37: #{tpu_custom_call.1} parent=11 // pred_check
        %p1290 = pneg %p286
      $region38: #{tpu_custom_call.1} parent=11 // pred_check_branch
        %1292 = sbr.rel (%p1290) target = $region40
      $region39: #{tpu_custom_call.1} parent=11 // pred_region
        _
      $region40: #{tpu_custom_call.1} parent=11 // pred_fallthru
        _
      // Predicated region
      $region41: #{tpu_custom_call.1} parent=11 // pred_check
        %p1293 = pneg %p307
      $region42: #{tpu_custom_call.1} parent=11 // pred_check_branch
        %1295 = sbr.rel (%p1293) target = $region44
      $region43: #{tpu_custom_call.1} parent=11 // pred_region
        _
      $region44: #{tpu_custom_call.1} parent=11 // pred_fallthru
        _
      // Predicated region
      $region45: #{tpu_custom_call.1} parent=11 // pred_check
        %p1296 = pneg %p328
      $region46: #{tpu_custom_call.1} parent=11 // pred_check_branch
        %1298 = sbr.rel (%p1296) target = $region48
      $region47: #{tpu_custom_call.1} parent=11 // pred_region
        _
      $region48: #{tpu_custom_call.1} parent=11 // pred_fallthru
        _
      // Predicated region
      $region49: #{tpu_custom_call.1} parent=11 // pred_check
        %p1299 = pneg %p349
      $region50: #{tpu_custom_call.1} parent=11 // pred_check_branch
        %1301 = sbr.rel (%p1299) target = $region52
      $region51: #{tpu_custom_call.1} parent=11 // pred_region
        _
      $region52: #{tpu_custom_call.1} parent=11 // pred_fallthru
        _
      // Predicated region
      $region53: #{tpu_custom_call.1} parent=11 // pred_check
        %p1302 = pneg %p370
      $region54: #{tpu_custom_call.1} parent=11 // pred_check_branch
        %1304 = sbr.rel (%p1302) target = $region56
      $region55: #{tpu_custom_call.1} parent=11 // pred_region
        _
      $region56: #{tpu_custom_call.1} parent=11 // pred_fallthru
        _
      // Predicated region
      $region57: #{tpu_custom_call.1} parent=11 // pred_check
        %p1305 = pneg %p391
      $region58: #{tpu_custom_call.1} parent=11 // pred_check_branch
        %1307 = sbr.rel (%p1305) target = $region60
      $region59: #{tpu_custom_call.1} parent=11 // pred_region
        _
      $region60: #{tpu_custom_call.1} parent=11 // pred_fallthru
        _
      // Predicated region
      $region61: #{tpu_custom_call.1} parent=11 // pred_check
        %p1308 = pneg %p412
      $region62: #{tpu_custom_call.1} parent=11 // pred_check_branch
        %1310 = sbr.rel (%p1308) target = $region64
      $region63: #{tpu_custom_call.1} parent=11 // pred_region
        _
      $region64: #{tpu_custom_call.1} parent=11 // pred_fallthru
        _
      // Predicated region
      $region65: #{tpu_custom_call.1} parent=11 // pred_check
        %p1311 = pneg %p433
      $region66: #{tpu_custom_call.1} parent=11 // pred_check_branch
        %1313 = sbr.rel (%p1311) target = $region68
      $region67: #{tpu_custom_call.1} parent=11 // pred_region
        _
      $region68: #{tpu_custom_call.1} parent=11 // pred_fallthru
        _
      // Predicated region
      $region69: #{tpu_custom_call.1} parent=11 // pred_check
        %p1314 = pneg %p454
      $region70: #{tpu_custom_call.1} parent=11 // pred_check_branch
        %1316 = sbr.rel (%p1314) target = $region72
      $region71: #{tpu_custom_call.1} parent=11 // pred_region
        _
      $region72: #{tpu_custom_call.1} parent=11 // pred_fallthru
        _
      // Predicated region
      $region73: #{tpu_custom_call.1} parent=11 // pred_check
        %p1317 = pneg %p475
      $region74: #{tpu_custom_call.1} parent=11 // pred_check_branch
        %1319 = sbr.rel (%p1317) target = $region76
      $region75: #{tpu_custom_call.1} parent=11 // pred_region
        _
      $region76: #{tpu_custom_call.1} parent=11 // pred_fallthru
        _
      // Predicated region
      $region77: #{tpu_custom_call.1} parent=11 // pred_check
        %p1320 = pneg %p496
      $region78: #{tpu_custom_call.1} parent=11 // pred_check_branch
        %1322 = sbr.rel (%p1320) target = $region80
      $region79: #{tpu_custom_call.1} parent=11 // pred_region
        _
      $region80: #{tpu_custom_call.1} parent=11 // pred_fallthru
        _
      // Predicated region
      $region81: #{tpu_custom_call.1} parent=11 // pred_check
        %p1323 = pneg %p517
      $region82: #{tpu_custom_call.1} parent=11 // pred_check_branch
        %1325 = sbr.rel (%p1323) target = $region84
      $region83: #{tpu_custom_call.1} parent=11 // pred_region
        _
      $region84: #{tpu_custom_call.1} parent=11 // pred_fallthru
        _
      // Predicated region
      $region85: #{tpu_custom_call.1} parent=11 // pred_check
        %p1326 = pneg %p538
      $region86: #{tpu_custom_call.1} parent=11 // pred_check_branch
        %1328 = sbr.rel (%p1326) target = $region88
      $region87: #{tpu_custom_call.1} parent=11 // pred_region
        _
      $region88: #{tpu_custom_call.1} parent=11 // pred_fallthru
        _
      // Predicated region
      $region89: #{tpu_custom_call.1} parent=11 // pred_check
        %p1329 = pneg %p559
      $region90: #{tpu_custom_call.1} parent=11 // pred_check_branch
        %1331 = sbr.rel (%p1329) target = $region92
      $region91: #{tpu_custom_call.1} parent=11 // pred_region
        _
      $region92: #{tpu_custom_call.1} parent=11 // pred_fallthru
        _
      // Predicated region
      $region93: #{tpu_custom_call.1} parent=11 // pred_check
        %p1332 = pneg %p580
      $region94: #{tpu_custom_call.1} parent=11 // pred_check_branch
        %1334 = sbr.rel (%p1332) target = $region96
      $region95: #{tpu_custom_call.1} parent=11 // pred_region
        _
      $region96: #{tpu_custom_call.1} parent=11 // pred_fallthru
        _
      // Predicated region
      $region97: #{tpu_custom_call.1} parent=11 // pred_check
        %p1335 = pneg %p601
      $region98: #{tpu_custom_call.1} parent=11 // pred_check_branch
        %1337 = sbr.rel (%p1335) target = $region100
      $region99: #{tpu_custom_call.1} parent=11 // pred_region
        _
      $region100: #{tpu_custom_call.1} parent=11 // pred_fallthru
        _
      // Predicated region
      $region101: #{tpu_custom_call.1} parent=11 // pred_check
        %p1338 = pneg %p622
      $region102: #{tpu_custom_call.1} parent=11 // pred_check_branch
        %1340 = sbr.rel (%p1338) target = $region104
      $region103: #{tpu_custom_call.1} parent=11 // pred_region
        _
      $region104: #{tpu_custom_call.1} parent=11 // pred_fallthru
        _
      // Predicated region
      $region105: #{tpu_custom_call.1} parent=11 // pred_check
        %p1341 = pneg %p643
      $region106: #{tpu_custom_call.1} parent=11 // pred_check_branch
        %1343 = sbr.rel (%p1341) target = $region108
      $region107: #{tpu_custom_call.1} parent=11 // pred_region
        _
      $region108: #{tpu_custom_call.1} parent=11 // pred_fallthru
        _
      // Predicated region
      $region109: #{tpu_custom_call.1} parent=11 // pred_check
        %p1344 = pneg %p664
      $region110: #{tpu_custom_call.1} parent=11 // pred_check_branch
        %1346 = sbr.rel (%p1344) target = $region112
      $region111: #{tpu_custom_call.1} parent=11 // pred_region
        _
      $region112: #{tpu_custom_call.1} parent=11 // pred_fallthru
        _
      // Predicated region
      $region113: #{tpu_custom_call.1} parent=11 // pred_check
        %p1347 = pneg %p685
      $region114: #{tpu_custom_call.1} parent=11 // pred_check_branch
        %1349 = sbr.rel (%p1347) target = $region116
      $region115: #{tpu_custom_call.1} parent=11 // pred_region
        _
      $region116: #{tpu_custom_call.1} parent=11 // pred_fallthru
        _
      // Predicated region
      $region117: #{tpu_custom_call.1} parent=11 // pred_check
        %p1350 = pneg %p706
      $region118: #{tpu_custom_call.1} parent=11 // pred_check_branch
        %1352 = sbr.rel (%p1350) target = $region120
      $region119: #{tpu_custom_call.1} parent=11 // pred_region
        _
      $region120: #{tpu_custom_call.1} parent=11 // pred_fallthru
        _
      // Predicated region
      $region121: #{tpu_custom_call.1} parent=11 // pred_check
        %p1353 = pneg %p727
      $region122: #{tpu_custom_call.1} parent=11 // pred_check_branch
        %1355 = sbr.rel (%p1353) target = $region124
      $region123: #{tpu_custom_call.1} parent=11 // pred_region
        _
      $region124: #{tpu_custom_call.1} parent=11 // pred_fallthru
        _
      // Predicated region
      $region125: #{tpu_custom_call.1} parent=11 // pred_check
        %p1356 = pneg %p748
      $region126: #{tpu_custom_call.1} parent=11 // pred_check_branch
        %1358 = sbr.rel (%p1356) target = $region128
      $region127: #{tpu_custom_call.1} parent=11 // pred_region
        _
      $region128: #{tpu_custom_call.1} parent=11 // pred_fallthru
        _
      // Predicated region
      $region129: #{tpu_custom_call.1} parent=11 // pred_check
        %p1359 = pneg %p769
      $region130: #{tpu_custom_call.1} parent=11 // pred_check_branch
        %1361 = sbr.rel (%p1359) target = $region132
      $region131: #{tpu_custom_call.1} parent=11 // pred_region
        _
      $region132: #{tpu_custom_call.1} parent=11 // pred_fallthru
        _
      // Predicated region
      $region133: #{tpu_custom_call.1} parent=11 // pred_check
        %p1362 = pneg %p790
      $region134: #{tpu_custom_call.1} parent=11 // pred_check_branch
        %1364 = sbr.rel (%p1362) target = $region136
      $region135: #{tpu_custom_call.1} parent=11 // pred_region
        _
      $region136: #{tpu_custom_call.1} parent=11 // pred_fallthru
        _
      // Predicated region
      $region137: #{tpu_custom_call.1} parent=11 // pred_check
        %p1365 = pneg %p811
      $region138: #{tpu_custom_call.1} parent=11 // pred_check_branch
        %1367 = sbr.rel (%p1365) target = $region140
      $region139: #{tpu_custom_call.1} parent=11 // pred_region
        _
      $region140: #{tpu_custom_call.1} parent=11 // pred_fallthru
        _
      // Predicated region
      $region141: #{tpu_custom_call.1} parent=11 // pred_check
        %p1368 = pneg %p832
      $region142: #{tpu_custom_call.1} parent=11 // pred_check_branch
        %1370 = sbr.rel (%p1368) target = $region144
      $region143: #{tpu_custom_call.1} parent=11 // pred_region
        _
      $region144: #{tpu_custom_call.1} parent=11 // pred_fallthru
        _
      // Predicated region
      $region145: #{tpu_custom_call.1} parent=11 // pred_check
        %p1371 = pneg %p853
      $region146: #{tpu_custom_call.1} parent=11 // pred_check_branch
        %1373 = sbr.rel (%p1371) target = $region148
      $region147: #{tpu_custom_call.1} parent=11 // pred_region
        _
      $region148: #{tpu_custom_call.1} parent=11 // pred_fallthru
        _
      // Predicated region
      $region149: #{tpu_custom_call.1} parent=11 // pred_check
        %p1374 = pneg %p874
      $region150: #{tpu_custom_call.1} parent=11 // pred_check_branch
        %1376 = sbr.rel (%p1374) target = $region152
      $region151: #{tpu_custom_call.1} parent=11 // pred_region
        _
      $region152: #{tpu_custom_call.1} parent=11 // pred_fallthru
        _
      // Predicated region
      $region153: #{tpu_custom_call.1} parent=11 // pred_check
        %p1377 = pneg %p895
      $region154: #{tpu_custom_call.1} parent=11 // pred_check_branch
        %1379 = sbr.rel (%p1377) target = $region156
      $region155: #{tpu_custom_call.1} parent=11 // pred_region
        _
      $region156: #{tpu_custom_call.1} parent=11 // pred_fallthru
        _
      // Predicated region
      $region157: #{tpu_custom_call.1} parent=11 // pred_check
        %p1380 = pneg %p916
      $region158: #{tpu_custom_call.1} parent=11 // pred_check_branch
        %1382 = sbr.rel (%p1380) target = $region160
      $region159: #{tpu_custom_call.1} parent=11 // pred_region
        _
      $region160: #{tpu_custom_call.1} parent=11 // pred_fallthru
        _
      // Predicated region
      $region161: #{tpu_custom_call.1} parent=11 // pred_check
        %p1383 = pneg %p937
      $region162: #{tpu_custom_call.1} parent=11 // pred_check_branch
        %1385 = sbr.rel (%p1383) target = $region164
      $region163: #{tpu_custom_call.1} parent=11 // pred_region
        _
      $region164: #{tpu_custom_call.1} parent=11 // pred_fallthru
        _
      // Predicated region
      $region165: #{tpu_custom_call.1} parent=11 // pred_check
        %p1386 = pneg %p958
      $region166: #{tpu_custom_call.1} parent=11 // pred_check_branch
        %1388 = sbr.rel (%p1386) target = $region168
      $region167: #{tpu_custom_call.1} parent=11 // pred_region
        _
      $region168: #{tpu_custom_call.1} parent=11 // pred_fallthru
        _
      // Predicated region
      $region169: #{tpu_custom_call.1} parent=11 // pred_check
        %p1389 = pneg %p979
      $region170: #{tpu_custom_call.1} parent=11 // pred_check_branch
        %1391 = sbr.rel (%p1389) target = $region172
      $region171: #{tpu_custom_call.1} parent=11 // pred_region
        _
      $region172: #{tpu_custom_call.1} parent=11 // pred_fallthru
        _
      // Predicated region
      $region173: #{tpu_custom_call.1} parent=11 // pred_check
        %p1392 = pneg %p1000
      $region174: #{tpu_custom_call.1} parent=11 // pred_check_branch
        %1394 = sbr.rel (%p1392) target = $region176
      $region175: #{tpu_custom_call.1} parent=11 // pred_region
        _
      $region176: #{tpu_custom_call.1} parent=11 // pred_fallthru
        _
      // Predicated region
      $region177: #{tpu_custom_call.1} parent=11 // pred_check
        %p1395 = pneg %p1021
      $region178: #{tpu_custom_call.1} parent=11 // pred_check_branch
        %1397 = sbr.rel (%p1395) target = $region180
      $region179: #{tpu_custom_call.1} parent=11 // pred_region
        _
      $region180: #{tpu_custom_call.1} parent=11 // pred_fallthru
        _
      // Predicated region
      $region181: #{tpu_custom_call.1} parent=11 // pred_check
        %p1398 = pneg %p1042
      $region182: #{tpu_custom_call.1} parent=11 // pred_check_branch
        %1400 = sbr.rel (%p1398) target = $region184
      $region183: #{tpu_custom_call.1} parent=11 // pred_region
        _
      $region184: #{tpu_custom_call.1} parent=11 // pred_fallthru
        _
      // Predicated region
      $region185: #{tpu_custom_call.1} parent=11 // pred_check
        %p1401 = pneg %p1063
      $region186: #{tpu_custom_call.1} parent=11 // pred_check_branch
        %1403 = sbr.rel (%p1401) target = $region188
      $region187: #{tpu_custom_call.1} parent=11 // pred_region
        _
      $region188: #{tpu_custom_call.1} parent=11 // pred_fallthru
        _
      // Predicated region
      $region189: #{tpu_custom_call.1} parent=11 // pred_check
        %p1404 = pneg %p1084
      $region190: #{tpu_custom_call.1} parent=11 // pred_check_branch
        %1406 = sbr.rel (%p1404) target = $region192
      $region191: #{tpu_custom_call.1} parent=11 // pred_region
        _
      $region192: #{tpu_custom_call.1} parent=11 // pred_fallthru
        _
      // Predicated region
      $region193: #{tpu_custom_call.1} parent=11 // pred_check
        %p1407 = pneg %p1105
      $region194: #{tpu_custom_call.1} parent=11 // pred_check_branch
        %1409 = sbr.rel (%p1407) target = $region196
      $region195: #{tpu_custom_call.1} parent=11 // pred_region
        _
      $region196: #{tpu_custom_call.1} parent=11 // pred_fallthru
        _
      // Predicated region
      $region197: #{tpu_custom_call.1} parent=11 // pred_check
        %p1410 = pneg %p1126
      $region198: #{tpu_custom_call.1} parent=11 // pred_check_branch
        %1412 = sbr.rel (%p1410) target = $region200
      $region199: #{tpu_custom_call.1} parent=11 // pred_region
        _
      $region200: #{tpu_custom_call.1} parent=11 // pred_fallthru
        _
      // Predicated region
      $region201: #{tpu_custom_call.1} parent=11 // pred_check
        %p1413 = pneg %p1147
      $region202: #{tpu_custom_call.1} parent=11 // pred_check_branch
        %1415 = sbr.rel (%p1413) target = $region204
      $region203: #{tpu_custom_call.1} parent=11 // pred_region
        _
      $region204: #{tpu_custom_call.1} parent=11 // pred_fallthru
        _
      // Predicated region
      $region205: #{tpu_custom_call.1} parent=11 // pred_check
        %p1416 = pneg %p1168
      $region206: #{tpu_custom_call.1} parent=11 // pred_check_branch
        %1418 = sbr.rel (%p1416) target = $region208
      $region207: #{tpu_custom_call.1} parent=11 // pred_region
        _
      $region208: #{tpu_custom_call.1} parent=11 // pred_fallthru
        _
      // Predicated region
      $region209: #{tpu_custom_call.1} parent=11 // pred_check
        %p1419 = pneg %p1189
      $region210: #{tpu_custom_call.1} parent=11 // pred_check_branch
        %1421 = sbr.rel (%p1419) target = $region212
      $region211: #{tpu_custom_call.1} parent=11 // pred_region
        _
      $region212: #{tpu_custom_call.1} parent=11 // pred_fallthru
        _
      // Predicated region
      $region213: #{tpu_custom_call.1} parent=11 // pred_check
        %p1422 = pneg %p1210
      $region214: #{tpu_custom_call.1} parent=11 // pred_check_branch
        %1424 = sbr.rel (%p1422) target = $region216
      $region215: #{tpu_custom_call.1} parent=11 // pred_region
        _
      $region216: #{tpu_custom_call.1} parent=11 // pred_fallthru
        _
      // Predicated region
      $region217: #{tpu_custom_call.1} parent=11 // pred_check
        %p1425 = pneg %p1231
      $region218: #{tpu_custom_call.1} parent=11 // pred_check_branch
        %1427 = sbr.rel (%p1425) target = $region220
      $region219: #{tpu_custom_call.1} parent=11 // pred_region
        _
      $region220: #{tpu_custom_call.1} parent=11 // pred_fallthru
        _
    $region12: #{tpu_custom_call.1} parent=5 // pred_fallthru
      _
    %p1428 = scmp.lt.s32.totalorder %s113, 2
    // Predicated region
    $region221: #{tpu_custom_call.1} parent=5 // pred_check
      %p1429 = pneg %p1428
    $region222: #{tpu_custom_call.1} parent=5 // pred_check_branch
      %1431 = sbr.rel (%p1429) target = $region224
    $region223: #{tpu_custom_call.1} parent=5 // pred_region
      // Predicated region
      $region225: #{tpu_custom_call.1} parent=223 // pred_check
        %p1432 = pneg %p154
      $region226: #{tpu_custom_call.1} parent=223 // pred_check_branch
        %1434 = sbr.rel (%p1432) target = $region228
      $region227: #{tpu_custom_call.1} parent=223 // pred_region
        %p1435 = scmp.lt.s32.totalorder %s113, 1
        %s1436 = scalar_select %p1435, %s113, 1
        %s1437 = smul.addr %s1436, 3
        %s1438 = smul.addr %s1437, 8
        %s1439 = scalar_lea.vmem %s3, %s1438
      $region228: #{tpu_custom_call.1} parent=223 // pred_fallthru
        _
    $region224: #{tpu_custom_call.1} parent=5 // pred_fallthru
      _
    %p1440 = scmp.le.s32.totalorder 1, %s113
    %p1441 = scmp.lt.s32.totalorder %s113, 3
    %p1442 = pnand %p1440, %p1441
    %p1443 = pneg %p1442
    // Predicated region
    $region229: #{tpu_custom_call.1} parent=5 // pred_check
      _
    $region230: #{tpu_custom_call.1} parent=5 // pred_check_branch
      %1445 = sbr.rel (%p1442) target = $region232
    $region231: #{tpu_custom_call.1} parent=5 // pred_region
      %s1446 = ssub.s32 %s113, 1
      %p1447 = pneg %p134
      %p1448 = pneg %p131
      %p1449 = scmp.lt.s32.totalorder %s118, 1
      %s1450 = scalar_select %p1449, %s118, 1
      %s1451 = smul.addr %s1450, 3
      %s1452 = smul.addr %s1451, 8
      %s1453 = scalar_lea.vmem %s3, %s1452
      %p1454 = pneg %p160
      %p1455 = pneg %p157
      %p1456 = pneg %p181
      %p1457 = pneg %p178
      %p1458 = pneg %p202
      %p1459 = pneg %p199
      %p1460 = pneg %p223
      %p1461 = pneg %p220
      %p1462 = pneg %p244
      %p1463 = pneg %p241
      %p1464 = pneg %p265
      %p1465 = pneg %p262
      %p1466 = pneg %p286
      %p1467 = pneg %p283
      %p1468 = pneg %p307
      %p1469 = pneg %p304
      %p1470 = pneg %p328
      %p1471 = pneg %p325
      %p1472 = pneg %p349
      %p1473 = pneg %p346
      %p1474 = pneg %p370
      %p1475 = pneg %p367
      %p1476 = pneg %p391
      %p1477 = pneg %p388
      %p1478 = pneg %p412
      %p1479 = pneg %p409
      %p1480 = pneg %p433
      %p1481 = pneg %p430
      %p1482 = pneg %p454
      %p1483 = pneg %p451
      %p1484 = pneg %p475
      %p1485 = pneg %p472
      %p1486 = pneg %p496
      %p1487 = pneg %p493
      %p1488 = pneg %p517
      %p1489 = pneg %p514
      %p1490 = pneg %p538
      %p1491 = pneg %p535
      %p1492 = pneg %p559
      %p1493 = pneg %p556
      %p1494 = pneg %p580
      %p1495 = pneg %p577
      %p1496 = pneg %p601
      %p1497 = pneg %p598
      %p1498 = pneg %p622
      %p1499 = pneg %p619
      %p1500 = pneg %p643
      %p1501 = pneg %p640
      %p1502 = pneg %p664
      %p1503 = pneg %p661
      %p1504 = pneg %p685
      %p1505 = pneg %p682
      %p1506 = pneg %p706
      %p1507 = pneg %p703
      %p1508 = pneg %p727
      %p1509 = pneg %p724
      %p1510 = pneg %p748
      %p1511 = pneg %p745
      %p1512 = pneg %p769
      %p1513 = pneg %p766
      %p1514 = pneg %p790
      %p1515 = pneg %p787
      %p1516 = pneg %p811
      %p1517 = pneg %p808
      %p1518 = pneg %p832
      %p1519 = pneg %p829
      %p1520 = pneg %p853
      %p1521 = pneg %p850
      %p1522 = pneg %p874
      %p1523 = pneg %p871
      %p1524 = pneg %p895
      %p1525 = pneg %p892
      %p1526 = pneg %p916
      %p1527 = pneg %p913
      %p1528 = pneg %p937
      %p1529 = pneg %p934
      %p1530 = pneg %p958
      %p1531 = pneg %p955
      %p1532 = pneg %p979
      %p1533 = pneg %p976
      %p1534 = pneg %p1000
      %p1535 = pneg %p997
      %p1536 = pneg %p1021
      %p1537 = pneg %p1018
      %p1538 = pneg %p1042
      %p1539 = pneg %p1039
      %p1540 = pneg %p1063
      %p1541 = pneg %p1060
      %p1542 = pneg %p1084
      %p1543 = pneg %p1081
      %p1544 = pneg %p1105
      %p1545 = pneg %p1102
      %p1546 = pneg %p1126
      %p1547 = pneg %p1123
      %p1548 = pneg %p1147
      %p1549 = pneg %p1144
      %p1550 = pneg %p1168
      %p1551 = pneg %p1165
      %p1552 = pneg %p1189
      %p1553 = pneg %p1186
      %p1554 = pneg %p1210
      %p1555 = pneg %p1207
      %p1556 = pneg %p1231
      %p1557 = pneg %p1228
      %p1558 = pneg %p1257
      %p1559 = pneg %p1254
      %p1560 = scmp.lt.s32.totalorder %s118, 1
      %s1561 = scalar_select %p1560, %s118, 1
      %s1562 = smul.addr %s1561, 3
      %s1563 = smul.addr %s1562, 8
      %s1564 = scalar_lea.vmem %s107, %s1563
      %p1565 = scmp.lt.s32.totalorder %s118, 1
      %s1566 = scalar_select %p1565, %s118, 1
      %s1567 = smul.addr %s1566, 3
      %s1568 = smul.addr %s1567, 8
      %s1569 = scalar_lea.vmem %s3, %s1568
      %p1570 = scmp.lt.s32.totalorder %s118, 1
      %s1571 = scalar_select %p1570, %s118, 1
      %s1572 = smul.addr %s1571, 3
      %s1573 = smul.addr %s1572, 8
      %s1574 = scalar_lea.vmem %s107, %s1573
      %v1575 = vld [vmem:[%s1] sm:$0xff]
      %v1576 = vld [vmem:[%s1 + $0x8] sm:$0xff]
      %v1577 = vld [vmem:[%s1 + $0x10] sm:$0xff]
      %v1578 = vld [vmem:[%s1 + $0x18] sm:$0xff]
      %v1579 = vld [vmem:[%s1 + $0x20] sm:$0xff]
      %v1580 = vld [vmem:[%s1 + $0x28] sm:$0xff]
      %v1581 = vld [vmem:[%s1 + $0x30] sm:$0xff]
      %v1582 = vld [vmem:[%s1 + $0x38] sm:$0xff]
      %v1583 = vld [vmem:[%s1 + $0x40] sm:$0xff]
      %v1584 = vld [vmem:[%s1 + $0x48] sm:$0xff]
      %v1585 = vld [vmem:[%s1 + $0x50] sm:$0xff]
      %v1586 = vld [vmem:[%s1 + $0x58] sm:$0xff]
      %v1587 = vld [vmem:[%s1569] sm:$0xff]
      %v1588 = vld [vmem:[%s1569 + $0x8] sm:$0xff]
      %v1589 = vld [vmem:[%s1569 + $0x10] sm:$0xff]
      %v1590 = vld [vmem:[%s5] sm:$0xff]
      %v1591 = vld [vmem:[%s5 + $0x8] sm:$0xff]
      %v1592 = vld [vmem:[%s5 + $0x10] sm:$0xff]
      %v1593 = vld [vmem:[%s5 + $0x18] sm:$0xff]
      %vm1594 = vcmask 261120
      %v1596 = vsel %vm1594, %v1587, 0
      %v1599 = vsel %vm1594, %v1588, 0
      %v1602 = vsel %vm1594, %v1589, 0
      %1604 = vmatpush.msra.mxu0 0.0
      %1605 = vmatpush.msra.mxu0 0.0
      %1606 = vmatpush.msra.mxu0 0.0
      %1607 = vmatpush.msra.mxu0 0.0
      %1608 = vmatpush.msra.mxu0 0.0
      %1609 = vmatpush.msra.mxu0 0.0
      %1610 = vmatpush.msra.mxu0 0.0
      %1611 = vmatpush.msra.mxu0 0.0
      %1612 = vmatpush.msra.mxu0 0.0
      %1613 = vmatpush.msra.mxu0 0.0
      %1614 = vmatpush.msra.mxu0 0.0
      %1615 = vmatpush.msra.mxu0 0.0
      %1616 = vmatpush.msra.mxu0 %v1593
      %1617 = vmatpush.msra.mxu0 %v1592
      %1618 = vmatpush.msra.mxu0 %v1591
      %1619 = vmatpush.msra.mxu0 %v1590
      %1620 = vmatmul.f32.gmra.mxu0 %v1596
      %v1621 = vpop.f32.mrf.mxu0
      %v1622 = vadd.f32 0.0, %v1621
      %1623 = vmatmul.f32.gmra.mxu0 %v1599
      %v1624 = vpop.f32.mrf.mxu0
      %v1625 = vadd.f32 0.0, %v1624
      %1626 = vmatmul.f32.gmra.mxu0 %v1602
      %v1627 = vpop.f32.mrf.mxu0
      %v1628 = vadd.f32 0.0, %v1627
      %1629 = vdwg.mxu0
      %v1630 = vld [vmem:[%s7] sm:$0xff]
      %v1631 = vld [vmem:[%s7 + $0x8] sm:$0xff]
      %v1632 = vld [vmem:[%s7 + $0x10] sm:$0xff]
      %v1633 = vld [vmem:[%s7 + $0x18] sm:$0xff]
      %v1634 = vld [vmem:[%s9] sm:$0x1]
      %v1636 = vperm.slane %v1634, 0
      %1638 = vmatpush.msra.mxu0 0.0
      %1639 = vmatpush.msra.mxu0 0.0
      %1640 = vmatpush.msra.mxu0 0.0
      %1641 = vmatpush.msra.mxu0 0.0
      %1642 = vmatpush.msra.mxu0 0.0
      %1643 = vmatpush.msra.mxu0 0.0
      %1644 = vmatpush.msra.mxu0 0.0
      %1645 = vmatpush.msra.mxu0 0.0
      %1646 = vmatpush.msra.mxu0 0.0
      %1647 = vmatpush.msra.mxu0 0.0
      %1648 = vmatpush.msra.mxu0 0.0
      %1649 = vmatpush.msra.mxu0 0.0
      %1650 = vmatpush.msra.mxu0 %v1633
      %1651 = vmatpush.msra.mxu0 %v1632
      %1652 = vmatpush.msra.mxu0 %v1631
      %1653 = vmatpush.msra.mxu0 %v1630
      %1654 = vmatmul.f32.gmra.mxu0 %v1596
      %v1655 = vpop.f32.mrf.mxu0
      %v1656 = vadd.f32 %v1636, %v1655
      %1657 = vmatmul.f32.gmra.mxu0 %v1599
      %v1658 = vpop.f32.mrf.mxu0
      %v1659 = vadd.f32 %v1636, %v1658
      %1660 = vmatmul.f32.gmra.mxu0 %v1602
      %v1661 = vpop.f32.mrf.mxu0
      %v1662 = vadd.f32 %v1636, %v1661
      %1663 = vdwg.mxu0
      %vm1664 = vcmask 195584
      %v1666 = vsel %vm1664, %v1575, 0
      %v1669 = vsel %vm1664, %v1576, 0
      %v1672 = vsel %vm1664, %v1577, 0
      %v1675 = vsel %vm1664, %v1578, 0
      %v1678 = vsel %vm1664, %v1579, 0
      %v1681 = vsel %vm1664, %v1580, 0
      %v1684 = vsel %vm1664, %v1581, 0
      %v1687 = vsel %vm1664, %v1582, 0
      %v1690 = vsel %vm1664, %v1583, 0
      %v1693 = vsel %vm1664, %v1584, 0
      %v1696 = vsel %vm1664, %v1585, 0
      %v1699 = vsel %vm1664, %v1586, 0
      %1701 = vmatpush.msra.mxu0 0.0
      %1702 = vmatpush.msra.mxu0 0.0
      %1703 = vmatpush.msra.mxu0 0.0
      %1704 = vmatpush.msra.mxu0 0.0
      %1705 = vmatpush.msra.mxu0 0.0
      %1706 = vmatpush.msra.mxu0 0.0
      %1707 = vmatpush.msra.mxu0 0.0
      %1708 = vmatpush.msra.mxu0 0.0
      %1709 = vmatpush.msra.mxu0 0.0
      %1710 = vmatpush.msra.mxu0 0.0
      %1711 = vmatpush.msra.mxu0 0.0
      %1712 = vmatpush.msra.mxu0 0.0
      %1713 = vmatpush.msra.mxu0 0.0
      %1714 = vmatpush.msra.mxu0 %v1628
      %1715 = vmatpush.msra.mxu0 %v1625
      %1716 = vmatpush.msra.mxu0 %v1622
      %1717 = vmatmul.f32.gmra.mxu0 %v1666
      %v1718 = vpop.f32.mrf.mxu0
      %v1719 = vadd.f32 0.0, %v1718
      %1720 = vmatmul.f32.gmra.mxu0 %v1669
      %v1721 = vpop.f32.mrf.mxu0
      %v1722 = vadd.f32 0.0, %v1721
      %1723 = vmatmul.f32.gmra.mxu0 %v1672
      %v1724 = vpop.f32.mrf.mxu0
      %v1725 = vadd.f32 0.0, %v1724
      %1726 = vmatmul.f32.gmra.mxu0 %v1675
      %v1727 = vpop.f32.mrf.mxu0
      %v1728 = vadd.f32 0.0, %v1727
      %1729 = vmatmul.f32.gmra.mxu0 %v1678
      %v1730 = vpop.f32.mrf.mxu0
      %v1731 = vadd.f32 0.0, %v1730
      %1732 = vmatmul.f32.gmra.mxu0 %v1681
      %v1733 = vpop.f32.mrf.mxu0
      %v1734 = vadd.f32 0.0, %v1733
      %1735 = vmatmul.f32.gmra.mxu0 %v1684
      %v1736 = vpop.f32.mrf.mxu0
      %v1737 = vadd.f32 0.0, %v1736
      %1738 = vmatmul.f32.gmra.mxu0 %v1687
      %v1739 = vpop.f32.mrf.mxu0
      %v1740 = vadd.f32 0.0, %v1739
      %1741 = vmatmul.f32.gmra.mxu0 %v1690
      %v1742 = vpop.f32.mrf.mxu0
      %v1743 = vadd.f32 0.0, %v1742
      %1744 = vmatmul.f32.gmra.mxu0 %v1693
      %v1745 = vpop.f32.mrf.mxu0
      %v1746 = vadd.f32 0.0, %v1745
      %1747 = vmatmul.f32.gmra.mxu0 %v1696
      %v1748 = vpop.f32.mrf.mxu0
      %v1749 = vadd.f32 0.0, %v1748
      %1750 = vmatmul.f32.gmra.mxu0 %v1699
      %v1751 = vpop.f32.mrf.mxu0
      %v1752 = vadd.f32 0.0, %v1751
      %1753 = vdwg.mxu0
      %v1754 = vmax.f32 %v1719, %v1728
      %v1755 = vmax.f32 %v1722, %v1731
      %v1756 = vmax.f32 %v1725, %v1734
      %v1757 = vmax.f32 %v1754, %v1737
      %v1758 = vmax.f32 %v1755, %v1740
      %v1759 = vmax.f32 %v1756, %v1743
      %v1760 = vmax.f32 %v1757, %v1746
      %v1761 = vmax.f32 %v1758, %v1749
      %v1762 = vmax.f32 %v1759, %v1752
      %v1763 = vadd.f32 %v1760, %v1656
      %v1764 = vadd.f32 %v1761, %v1659
      %v1765 = vadd.f32 %v1762, %v1662
      %v1766 = vmul.f32 %v1763, 0.2
      %v1767 = vmul.f32 %v1764, 0.2
      %v1768 = vmul.f32 %v1765, 0.2
      %v1769 = vmax.f32 %v1763, %v1766
      %v1770 = vmax.f32 %v1764, %v1767
      %v1771 = vmax.f32 %v1765, %v1768
      %v1772 = vld [vmem:[%s11] sm:$0xff]
      %v1773 = vld [vmem:[%s11 + $0x8] sm:$0xff]
      %vm1774 = vcmask 130048
      %v1776 = vsel %vm1774, %v1769, 0
      %v1779 = vsel %vm1774, %v1770, 0
      %v1782 = vsel %vm1774, %v1771, 0
      %1784 = vmatpush.msra.mxu0 0.0
      %1785 = vmatpush.msra.mxu0 0.0
      %1786 = vmatpush.msra.mxu0 0.0
      %1787 = vmatpush.msra.mxu0 0.0
      %1788 = vmatpush.msra.mxu0 0.0
      %1789 = vmatpush.msra.mxu0 0.0
      %1790 = vmatpush.msra.mxu0 0.0
      %1791 = vmatpush.msra.mxu0 0.0
      %1792 = vmatpush.msra.mxu0 0.0
      %1793 = vmatpush.msra.mxu0 0.0
      %1794 = vmatpush.msra.mxu0 0.0
      %1795 = vmatpush.msra.mxu0 0.0
      %1796 = vmatpush.msra.mxu0 0.0
      %1797 = vmatpush.msra.mxu0 0.0
      %1798 = vmatpush.msra.mxu0 %v1773
      %1799 = vmatpush.msra.mxu0 %v1772
      %1800 = vmatmul.f32.gmra.mxu0 %v1776
      %v1801 = vpop.f32.mrf.mxu0
      %v1802 = vadd.f32 0.0, %v1801
      %1803 = vmatmul.f32.gmra.mxu0 %v1779
      %v1804 = vpop.f32.mrf.mxu0
      %v1805 = vadd.f32 0.0, %v1804
      %1806 = vmatmul.f32.gmra.mxu0 %v1782
      %v1807 = vpop.f32.mrf.mxu0
      %v1808 = vadd.f32 0.0, %v1807
      %1809 = vdwg.mxu0
      %v1810 = vld [vmem:[%s13] sm:$0xff]
      %v1811 = vld [vmem:[%s13 + $0x8] sm:$0xff]
      %v1812 = vld [vmem:[%s15] sm:$0x1]
      %v1814 = vperm.slane %v1812, 0
      %1816 = vmatpush.msra.mxu0 0.0
      %1817 = vmatpush.msra.mxu0 0.0
      %1818 = vmatpush.msra.mxu0 0.0
      %1819 = vmatpush.msra.mxu0 0.0
      %1820 = vmatpush.msra.mxu0 0.0
      %1821 = vmatpush.msra.mxu0 0.0
      %1822 = vmatpush.msra.mxu0 0.0
      %1823 = vmatpush.msra.mxu0 0.0
      %1824 = vmatpush.msra.mxu0 0.0
      %1825 = vmatpush.msra.mxu0 0.0
      %1826 = vmatpush.msra.mxu0 0.0
      %1827 = vmatpush.msra.mxu0 0.0
      %1828 = vmatpush.msra.mxu0 0.0
      %1829 = vmatpush.msra.mxu0 0.0
      %1830 = vmatpush.msra.mxu0 %v1811
      %1831 = vmatpush.msra.mxu0 %v1810
      %1832 = vmatmul.f32.gmra.mxu0 %v1776
      %v1833 = vpop.f32.mrf.mxu0
      %v1834 = vadd.f32 %v1814, %v1833
      %1835 = vmatmul.f32.gmra.mxu0 %v1779
      %v1836 = vpop.f32.mrf.mxu0
      %v1837 = vadd.f32 %v1814, %v1836
      %1838 = vmatmul.f32.gmra.mxu0 %v1782
      %v1839 = vpop.f32.mrf.mxu0
      %v1840 = vadd.f32 %v1814, %v1839
      %1841 = vdwg.mxu0
      %1842 = vmatpush.msra.mxu0 0.0
      %1843 = vmatpush.msra.mxu0 0.0
      %1844 = vmatpush.msra.mxu0 0.0
      %1845 = vmatpush.msra.mxu0 0.0
      %1846 = vmatpush.msra.mxu0 0.0
      %1847 = vmatpush.msra.mxu0 0.0
      %1848 = vmatpush.msra.mxu0 0.0
      %1849 = vmatpush.msra.mxu0 0.0
      %1850 = vmatpush.msra.mxu0 0.0
      %1851 = vmatpush.msra.mxu0 0.0
      %1852 = vmatpush.msra.mxu0 0.0
      %1853 = vmatpush.msra.mxu0 0.0
      %1854 = vmatpush.msra.mxu0 0.0
      %1855 = vmatpush.msra.mxu0 %v1808
      %1856 = vmatpush.msra.mxu0 %v1805
      %1857 = vmatpush.msra.mxu0 %v1802
      %1858 = vmatmul.f32.gmra.mxu0 %v1666
      %v1859 = vpop.f32.mrf.mxu0
      %v1860 = vadd.f32 0.0, %v1859
      %1861 = vmatmul.f32.gmra.mxu0 %v1669
      %v1862 = vpop.f32.mrf.mxu0
      %v1863 = vadd.f32 0.0, %v1862
      %1864 = vmatmul.f32.gmra.mxu0 %v1672
      %v1865 = vpop.f32.mrf.mxu0
      %v1866 = vadd.f32 0.0, %v1865
      %1867 = vmatmul.f32.gmra.mxu0 %v1675
      %v1868 = vpop.f32.mrf.mxu0
      %v1869 = vadd.f32 0.0, %v1868
      %1870 = vmatmul.f32.gmra.mxu0 %v1678
      %v1871 = vpop.f32.mrf.mxu0
      %v1872 = vadd.f32 0.0, %v1871
      %1873 = vmatmul.f32.gmra.mxu0 %v1681
      %v1874 = vpop.f32.mrf.mxu0
      %v1875 = vadd.f32 0.0, %v1874
      %1876 = vmatmul.f32.gmra.mxu0 %v1684
      %v1877 = vpop.f32.mrf.mxu0
      %v1878 = vadd.f32 0.0, %v1877
      %1879 = vmatmul.f32.gmra.mxu0 %v1687
      %v1880 = vpop.f32.mrf.mxu0
      %v1881 = vadd.f32 0.0, %v1880
      %1882 = vmatmul.f32.gmra.mxu0 %v1690
      %v1883 = vpop.f32.mrf.mxu0
      %v1884 = vadd.f32 0.0, %v1883
      %1885 = vmatmul.f32.gmra.mxu0 %v1693
      %v1886 = vpop.f32.mrf.mxu0
      %v1887 = vadd.f32 0.0, %v1886
      %1888 = vmatmul.f32.gmra.mxu0 %v1696
      %v1889 = vpop.f32.mrf.mxu0
      %v1890 = vadd.f32 0.0, %v1889
      %1891 = vmatmul.f32.gmra.mxu0 %v1699
      %v1892 = vpop.f32.mrf.mxu0
      %v1893 = vadd.f32 0.0, %v1892
      %1894 = vdwg.mxu0
      %v1895 = vmax.f32 %v1860, %v1869
      %v1896 = vmax.f32 %v1863, %v1872
      %v1897 = vmax.f32 %v1866, %v1875
      %v1898 = vmax.f32 %v1895, %v1878
      %v1899 = vmax.f32 %v1896, %v1881
      %v1900 = vmax.f32 %v1897, %v1884
      %v1901 = vmax.f32 %v1898, %v1887
      %v1902 = vmax.f32 %v1899, %v1890
      %v1903 = vmax.f32 %v1900, %v1893
      %v1904 = vadd.f32 %v1901, %v1834
      %v1905 = vadd.f32 %v1902, %v1837
      %v1906 = vadd.f32 %v1903, %v1840
      %v1907 = vmul.f32 %v1904, 0.2
      %v1908 = vmul.f32 %v1905, 0.2
      %v1909 = vmul.f32 %v1906, 0.2
      %v1910 = vmax.f32 %v1904, %v1907
      %v1911 = vmax.f32 %v1905, %v1908
      %v1912 = vmax.f32 %v1906, %v1909
      %v1913 = vld [vmem:[%s17] sm:$0xff]
      %vm1914 = vcmask 64512
      %v1916 = vsel %vm1914, %v1910, 0
      %v1919 = vsel %vm1914, %v1911, 0
      %v1922 = vsel %vm1914, %v1912, 0
      %1924 = vmatpush.msra.mxu0 0.0
      %1925 = vmatpush.msra.mxu0 0.0
      %1926 = vmatpush.msra.mxu0 0.0
      %1927 = vmatpush.msra.mxu0 0.0
      %1928 = vmatpush.msra.mxu0 0.0
      %1929 = vmatpush.msra.mxu0 0.0
      %1930 = vmatpush.msra.mxu0 0.0
      %1931 = vmatpush.msra.mxu0 0.0
      %1932 = vmatpush.msra.mxu0 0.0
      %1933 = vmatpush.msra.mxu0 0.0
      %1934 = vmatpush.msra.mxu0 0.0
      %1935 = vmatpush.msra.mxu0 0.0
      %1936 = vmatpush.msra.mxu0 0.0
      %1937 = vmatpush.msra.mxu0 0.0
      %1938 = vmatpush.msra.mxu0 0.0
      %1939 = vmatpush.msra.mxu0 %v1913
      %1940 = vmatmul.f32.gmra.mxu0 %v1916
      %v1941 = vpop.f32.mrf.mxu0
      %v1942 = vadd.f32 0.0, %v1941
      %1943 = vmatmul.f32.gmra.mxu0 %v1919
      %v1944 = vpop.f32.mrf.mxu0
      %v1945 = vadd.f32 0.0, %v1944
      %1946 = vmatmul.f32.gmra.mxu0 %v1922
      %v1947 = vpop.f32.mrf.mxu0
      %v1948 = vadd.f32 0.0, %v1947
      %1949 = vdwg.mxu0
      %v1950 = vld [vmem:[%s19] sm:$0xff]
      %v1951 = vld [vmem:[%s21] sm:$0x1]
      %v1953 = vperm.slane %v1951, 0
      %1955 = vmatpush.msra.mxu0 0.0
      %1956 = vmatpush.msra.mxu0 0.0
      %1957 = vmatpush.msra.mxu0 0.0
      %1958 = vmatpush.msra.mxu0 0.0
      %1959 = vmatpush.msra.mxu0 0.0
      %1960 = vmatpush.msra.mxu0 0.0
      %1961 = vmatpush.msra.mxu0 0.0
      %1962 = vmatpush.msra.mxu0 0.0
      %1963 = vmatpush.msra.mxu0 0.0
      %1964 = vmatpush.msra.mxu0 0.0
      %1965 = vmatpush.msra.mxu0 0.0
      %1966 = vmatpush.msra.mxu0 0.0
      %1967 = vmatpush.msra.mxu0 0.0
      %1968 = vmatpush.msra.mxu0 0.0
      %1969 = vmatpush.msra.mxu0 0.0
      %1970 = vmatpush.msra.mxu0 %v1950
      %1971 = vmatmul.f32.gmra.mxu0 %v1916
      %v1972 = vpop.f32.mrf.mxu0
      %v1973 = vadd.f32 %v1953, %v1972
      %1974 = vmatmul.f32.gmra.mxu0 %v1919
      %v1975 = vpop.f32.mrf.mxu0
      %v1976 = vadd.f32 %v1953, %v1975
      %1977 = vmatmul.f32.gmra.mxu0 %v1922
      %v1978 = vpop.f32.mrf.mxu0
      %v1979 = vadd.f32 %v1953, %v1978
      %1980 = vdwg.mxu0
      %1981 = vmatpush.msra.mxu0 0.0
      %1982 = vmatpush.msra.mxu0 0.0
      %1983 = vmatpush.msra.mxu0 0.0
      %1984 = vmatpush.msra.mxu0 0.0
      %1985 = vmatpush.msra.mxu0 0.0
      %1986 = vmatpush.msra.mxu0 0.0
      %1987 = vmatpush.msra.mxu0 0.0
      %1988 = vmatpush.msra.mxu0 0.0
      %1989 = vmatpush.msra.mxu0 0.0
      %1990 = vmatpush.msra.mxu0 0.0
      %1991 = vmatpush.msra.mxu0 0.0
      %1992 = vmatpush.msra.mxu0 0.0
      %1993 = vmatpush.msra.mxu0 0.0
      %1994 = vmatpush.msra.mxu0 %v1948
      %1995 = vmatpush.msra.mxu0 %v1945
      %1996 = vmatpush.msra.mxu0 %v1942
      %1997 = vmatmul.f32.gmra.mxu0 %v1666
      %v1998 = vpop.f32.mrf.mxu0
      %v1999 = vadd.f32 0.0, %v1998
      %2000 = vmatmul.f32.gmra.mxu0 %v1669
      %v2001 = vpop.f32.mrf.mxu0
      %v2002 = vadd.f32 0.0, %v2001
      %2003 = vmatmul.f32.gmra.mxu0 %v1672
      %v2004 = vpop.f32.mrf.mxu0
      %v2005 = vadd.f32 0.0, %v2004
      %2006 = vmatmul.f32.gmra.mxu0 %v1675
      %v2007 = vpop.f32.mrf.mxu0
      %v2008 = vadd.f32 0.0, %v2007
      %2009 = vmatmul.f32.gmra.mxu0 %v1678
      %v2010 = vpop.f32.mrf.mxu0
      %v2011 = vadd.f32 0.0, %v2010
      %2012 = vmatmul.f32.gmra.mxu0 %v1681
      %v2013 = vpop.f32.mrf.mxu0
      %v2014 = vadd.f32 0.0, %v2013
      %2015 = vmatmul.f32.gmra.mxu0 %v1684
      %v2016 = vpop.f32.mrf.mxu0
      %v2017 = vadd.f32 0.0, %v2016
      %2018 = vmatmul.f32.gmra.mxu0 %v1687
      %v2019 = vpop.f32.mrf.mxu0
      %v2020 = vadd.f32 0.0, %v2019
      %2021 = vmatmul.f32.gmra.mxu0 %v1690
      %v2022 = vpop.f32.mrf.mxu0
      %v2023 = vadd.f32 0.0, %v2022
      %2024 = vmatmul.f32.gmra.mxu0 %v1693
      %v2025 = vpop.f32.mrf.mxu0
      %v2026 = vadd.f32 0.0, %v2025
      %2027 = vmatmul.f32.gmra.mxu0 %v1696
      %v2028 = vpop.f32.mrf.mxu0
      %v2029 = vadd.f32 0.0, %v2028
      %2030 = vmatmul.f32.gmra.mxu0 %v1699
      %v2031 = vpop.f32.mrf.mxu0
      %v2032 = vadd.f32 0.0, %v2031
      %2033 = vdwg.mxu0
      %v2034 = vmax.f32 %v1999, %v2008
      %v2035 = vmax.f32 %v2002, %v2011
      %v2036 = vmax.f32 %v2005, %v2014
      %v2037 = vmax.f32 %v2034, %v2017
      %v2038 = vmax.f32 %v2035, %v2020
      %v2039 = vmax.f32 %v2036, %v2023
      %v2040 = vmax.f32 %v2037, %v2026
      %v2041 = vmax.f32 %v2038, %v2029
      %v2042 = vmax.f32 %v2039, %v2032
      %v2043 = vadd.f32 %v2040, %v1973
      %v2044 = vadd.f32 %v2041, %v1976
      %v2045 = vadd.f32 %v2042, %v1979
      %v2046 = vmul.f32 %v2043, 0.2
      %v2047 = vmul.f32 %v2044, 0.2
      %v2048 = vmul.f32 %v2045, 0.2
      %v2049 = vmax.f32 %v2043, %v2046
      %v2050 = vmax.f32 %v2044, %v2047
      %v2051 = vmax.f32 %v2045, %v2048
      %v2052 = vld [vmem:[%s29] sm:$0x1]
      %v2053 = vld [vmem:[%s23] sm:$0xff]
      %v2054 = vld [vmem:[%s23 + $0x8] sm:$0xff]
      %2055 = vmatpush.msra.mxu0 0.0
      %2056 = vmatpush.msra.mxu0 0.0
      %2057 = vmatpush.msra.mxu0 0.0
      %2058 = vmatpush.msra.mxu0 0.0
      %2059 = vmatpush.msra.mxu0 0.0
      %2060 = vmatpush.msra.mxu0 0.0
      %2061 = vmatpush.msra.mxu0 0.0
      %2062 = vmatpush.msra.mxu0 0.0
      %2063 = vmatpush.msra.mxu0 0.0
      %2064 = vmatpush.msra.mxu0 0.0
      %2065 = vmatpush.msra.mxu0 0.0
      %2066 = vmatpush.msra.mxu0 0.0
      %2067 = vmatpush.msra.mxu0 0.0
      %2068 = vmatpush.msra.mxu0 0.0
      %2069 = vmatpush.msra.mxu0 %v2054
      %2070 = vmatpush.msra.mxu0 %v2053
      %2071 = vmatmul.f32.gmra.mxu0 %v1776
      %v2072 = vpop.f32.mrf.mxu0
      %v2073 = vadd.f32 0.0, %v2072
      %2074 = vmatmul.f32.gmra.mxu0 %v1779
      %v2075 = vpop.f32.mrf.mxu0
      %v2076 = vadd.f32 0.0, %v2075
      %2077 = vmatmul.f32.gmra.mxu0 %v1782
      %v2078 = vpop.f32.mrf.mxu0
      %v2079 = vadd.f32 0.0, %v2078
      %2080 = vdwg.mxu0
      %v2082 = vperm.slane %v2052, 0
      %v2084 = vadd.f32 %v2082, %v2073
      %v2085 = vadd.f32 %v2082, %v2076
      %v2086 = vadd.f32 %v2082, %v2079
      %v2087 = vld [vmem:[%s25] sm:$0xff]
      %2088 = vmatpush.msra.mxu0 0.0
      %2089 = vmatpush.msra.mxu0 0.0
      %2090 = vmatpush.msra.mxu0 0.0
      %2091 = vmatpush.msra.mxu0 0.0
      %2092 = vmatpush.msra.mxu0 0.0
      %2093 = vmatpush.msra.mxu0 0.0
      %2094 = vmatpush.msra.mxu0 0.0
      %2095 = vmatpush.msra.mxu0 0.0
      %2096 = vmatpush.msra.mxu0 0.0
      %2097 = vmatpush.msra.mxu0 0.0
      %2098 = vmatpush.msra.mxu0 0.0
      %2099 = vmatpush.msra.mxu0 0.0
      %2100 = vmatpush.msra.mxu0 0.0
      %2101 = vmatpush.msra.mxu0 0.0
      %2102 = vmatpush.msra.mxu0 0.0
      %2103 = vmatpush.msra.mxu0 %v2087
      %2104 = vmatmul.f32.gmra.mxu0 %v1916
      %v2105 = vpop.f32.mrf.mxu0
      %v2106 = vadd.f32 0.0, %v2105
      %2107 = vmatmul.f32.gmra.mxu0 %v1919
      %v2108 = vpop.f32.mrf.mxu0
      %v2109 = vadd.f32 0.0, %v2108
      %2110 = vmatmul.f32.gmra.mxu0 %v1922
      %v2111 = vpop.f32.mrf.mxu0
      %v2112 = vadd.f32 0.0, %v2111
      %2113 = vdwg.mxu0
      %v2114 = vadd.f32 %v2084, %v2106
      %v2115 = vadd.f32 %v2085, %v2109
      %v2116 = vadd.f32 %v2086, %v2112
      %v2117 = vld [vmem:[%s27] sm:$0xff]
      %v2119 = vsel %vm1914, %v2049, 0
      %v2122 = vsel %vm1914, %v2050, 0
      %v2125 = vsel %vm1914, %v2051, 0
      %2127 = vmatpush.msra.mxu0 0.0
      %2128 = vmatpush.msra.mxu0 0.0
      %2129 = vmatpush.msra.mxu0 0.0
      %2130 = vmatpush.msra.mxu0 0.0
      %2131 = vmatpush.msra.mxu0 0.0
      %2132 = vmatpush.msra.mxu0 0.0
      %2133 = vmatpush.msra.mxu0 0.0
      %2134 = vmatpush.msra.mxu0 0.0
      %2135 = vmatpush.msra.mxu0 0.0
      %2136 = vmatpush.msra.mxu0 0.0
      %2137 = vmatpush.msra.mxu0 0.0
      %2138 = vmatpush.msra.mxu0 0.0
      %2139 = vmatpush.msra.mxu0 0.0
      %2140 = vmatpush.msra.mxu0 0.0
      %2141 = vmatpush.msra.mxu0 0.0
      %2142 = vmatpush.msra.mxu0 %v2117
      %2143 = vmatmul.f32.gmra.mxu0 %v2119
      %v2144 = vpop.f32.mrf.mxu0
      %v2145 = vadd.f32 0.0, %v2144
      %2146 = vmatmul.f32.gmra.mxu0 %v2122
      %v2147 = vpop.f32.mrf.mxu0
      %v2148 = vadd.f32 0.0, %v2147
      %2149 = vmatmul.f32.gmra.mxu0 %v2125
      %v2150 = vpop.f32.mrf.mxu0
      %v2151 = vadd.f32 0.0, %v2150
      %2152 = vdwg.mxu0
      %v2153 = vadd.f32 %v2114, %v2145
      %v2154 = vadd.f32 %v2115, %v2148
      %v2155 = vadd.f32 %v2116, %v2151
      %v2156 = vmul.f32 %v2153, 0.2
      %v2157 = vmul.f32 %v2154, 0.2
      %v2158 = vmul.f32 %v2155, 0.2
      %v2159 = vmax.f32 %v2153, %v2156
      %v2160 = vmax.f32 %v2154, %v2157
      %v2161 = vmax.f32 %v2155, %v2158
      %v2162 = vld [vmem:[%s31] sm:$0xff]
      %v2163 = vld [vmem:[%s31 + $0x8] sm:$0xff]
      %v2164 = vld [vmem:[%s31 + $0x10] sm:$0xff]
      %v2165 = vld [vmem:[%s31 + $0x18] sm:$0xff]
      %v2166 = vld [vmem:[%s31 + $0x20] sm:$0xff]
      %v2167 = vld [vmem:[%s31 + $0x28] sm:$0xff]
      %v2168 = vld [vmem:[%s31 + $0x30] sm:$0xff]
      %v2169 = vld [vmem:[%s31 + $0x38] sm:$0xff]
      %v2170 = vld [vmem:[%s33] sm:$0x1]
      %v2172 = vperm.slane %v2170, 0
      %vm2174 = vcmask 523264
      %v2176 = vsel %vm2174, %v2159, 0
      %v2179 = vsel %vm2174, %v2160, 0
      %v2182 = vsel %vm2174, %v2161, 0
      %2184 = vmatpush.msra.mxu0 0.0
      %2185 = vmatpush.msra.mxu0 0.0
      %2186 = vmatpush.msra.mxu0 0.0
      %2187 = vmatpush.msra.mxu0 0.0
      %2188 = vmatpush.msra.mxu0 0.0
      %2189 = vmatpush.msra.mxu0 0.0
      %2190 = vmatpush.msra.mxu0 0.0
      %2191 = vmatpush.msra.mxu0 0.0
      %2192 = vmatpush.msra.mxu0 %v2169
      %2193 = vmatpush.msra.mxu0 %v2168
      %2194 = vmatpush.msra.mxu0 %v2167
      %2195 = vmatpush.msra.mxu0 %v2166
      %2196 = vmatpush.msra.mxu0 %v2165
      %2197 = vmatpush.msra.mxu0 %v2164
      %2198 = vmatpush.msra.mxu0 %v2163
      %2199 = vmatpush.msra.mxu0 %v2162
      %2200 = vmatmul.f32.gmra.mxu0 %v2176
      %v2201 = vpop.f32.mrf.mxu0
      %v2202 = vadd.f32 %v2172, %v2201
      %2203 = vmatmul.f32.gmra.mxu0 %v2179
      %v2204 = vpop.f32.mrf.mxu0
      %v2205 = vadd.f32 %v2172, %v2204
      %2206 = vmatmul.f32.gmra.mxu0 %v2182
      %v2207 = vpop.f32.mrf.mxu0
      %v2208 = vadd.f32 %v2172, %v2207
      %2209 = vdwg.mxu0
      %v2210 = vmul.f32 %v2202, 0.2
      %v2211 = vmul.f32 %v2205, 0.2
      %v2212 = vmul.f32 %v2208, 0.2
      %v2213 = vmax.f32 %v2202, %v2210
      %v2214 = vmax.f32 %v2205, %v2211
      %v2215 = vmax.f32 %v2208, %v2212
      %v2216 = vld [vmem:[%s35] sm:$0xff]
      %v2217 = vld [vmem:[%s35 + $0x8] sm:$0xff]
      %v2218 = vld [vmem:[%s35 + $0x10] sm:$0xff]
      %v2219 = vld [vmem:[%s35 + $0x18] sm:$0xff]
      %v2220 = vld [vmem:[%s35 + $0x20] sm:$0xff]
      %v2221 = vld [vmem:[%s35 + $0x28] sm:$0xff]
      %v2222 = vld [vmem:[%s37] sm:$0x1]
      %v2224 = vperm.slane %v2222, 0
      %vm2226 = vcmask 392192
      %v2228 = vsel %vm2226, %v2213, 0
      %v2231 = vsel %vm2226, %v2214, 0
      %v2234 = vsel %vm2226, %v2215, 0
      %2236 = vmatpush.msra.mxu0 0.0
      %2237 = vmatpush.msra.mxu0 0.0
      %2238 = vmatpush.msra.mxu0 0.0
      %2239 = vmatpush.msra.mxu0 0.0
      %2240 = vmatpush.msra.mxu0 0.0
      %2241 = vmatpush.msra.mxu0 0.0
      %2242 = vmatpush.msra.mxu0 0.0
      %2243 = vmatpush.msra.mxu0 0.0
      %2244 = vmatpush.msra.mxu0 0.0
      %2245 = vmatpush.msra.mxu0 0.0
      %2246 = vmatpush.msra.mxu0 %v2221
      %2247 = vmatpush.msra.mxu0 %v2220
      %2248 = vmatpush.msra.mxu0 %v2219
      %2249 = vmatpush.msra.mxu0 %v2218
      %2250 = vmatpush.msra.mxu0 %v2217
      %2251 = vmatpush.msra.mxu0 %v2216
      %2252 = vmatmul.f32.gmra.mxu0 %v2228
      %v2253 = vpop.f32.mrf.mxu0
      %v2254 = vadd.f32 %v2224, %v2253
      %2255 = vmatmul.f32.gmra.mxu0 %v2231
      %v2256 = vpop.f32.mrf.mxu0
      %v2257 = vadd.f32 %v2224, %v2256
      %2258 = vmatmul.f32.gmra.mxu0 %v2234
      %v2259 = vpop.f32.mrf.mxu0
      %v2260 = vadd.f32 %v2224, %v2259
      %2261 = vdwg.mxu0
      %v2262 = vadd.f32 %v1587, %v2254
      %v2263 = vadd.f32 %v1588, %v2257
      %v2264 = vadd.f32 %v1589, %v2260
      %v2265 = vld [vmem:[%s39] sm:$0xff]
      %v2266 = vld [vmem:[%s39 + $0x8] sm:$0xff]
      %v2267 = vld [vmem:[%s39 + $0x10] sm:$0xff]
      %v2268 = vld [vmem:[%s39 + $0x18] sm:$0xff]
      %v2270 = vsel %vm1594, %v2262, 0
      %v2273 = vsel %vm1594, %v2263, 0
      %v2276 = vsel %vm1594, %v2264, 0
      %2278 = vmatpush.msra.mxu0 0.0
      %2279 = vmatpush.msra.mxu0 0.0
      %2280 = vmatpush.msra.mxu0 0.0
      %2281 = vmatpush.msra.mxu0 0.0
      %2282 = vmatpush.msra.mxu0 0.0
      %2283 = vmatpush.msra.mxu0 0.0
      %2284 = vmatpush.msra.mxu0 0.0
      %2285 = vmatpush.msra.mxu0 0.0
      %2286 = vmatpush.msra.mxu0 0.0
      %2287 = vmatpush.msra.mxu0 0.0
      %2288 = vmatpush.msra.mxu0 0.0
      %2289 = vmatpush.msra.mxu0 0.0
      %2290 = vmatpush.msra.mxu0 %v2268
      %2291 = vmatpush.msra.mxu0 %v2267
      %2292 = vmatpush.msra.mxu0 %v2266
      %2293 = vmatpush.msra.mxu0 %v2265
      %2294 = vmatmul.f32.gmra.mxu0 %v2270
      %v2295 = vpop.f32.mrf.mxu0
      %v2296 = vadd.f32 0.0, %v2295
      %2297 = vmatmul.f32.gmra.mxu0 %v2273
      %v2298 = vpop.f32.mrf.mxu0
      %v2299 = vadd.f32 0.0, %v2298
      %2300 = vmatmul.f32.gmra.mxu0 %v2276
      %v2301 = vpop.f32.mrf.mxu0
      %v2302 = vadd.f32 0.0, %v2301
      %2303 = vdwg.mxu0
      %v2304 = vld [vmem:[%s41] sm:$0xff]
      %v2305 = vld [vmem:[%s41 + $0x8] sm:$0xff]
      %v2306 = vld [vmem:[%s41 + $0x10] sm:$0xff]
      %v2307 = vld [vmem:[%s41 + $0x18] sm:$0xff]
      %v2308 = vld [vmem:[%s43] sm:$0x1]
      %v2310 = vperm.slane %v2308, 0
      %2312 = vmatpush.msra.mxu0 0.0
      %2313 = vmatpush.msra.mxu0 0.0
      %2314 = vmatpush.msra.mxu0 0.0
      %2315 = vmatpush.msra.mxu0 0.0
      %2316 = vmatpush.msra.mxu0 0.0
      %2317 = vmatpush.msra.mxu0 0.0
      %2318 = vmatpush.msra.mxu0 0.0
      %2319 = vmatpush.msra.mxu0 0.0
      %2320 = vmatpush.msra.mxu0 0.0
      %2321 = vmatpush.msra.mxu0 0.0
      %2322 = vmatpush.msra.mxu0 0.0
      %2323 = vmatpush.msra.mxu0 0.0
      %2324 = vmatpush.msra.mxu0 %v2307
      %2325 = vmatpush.msra.mxu0 %v2306
      %2326 = vmatpush.msra.mxu0 %v2305
      %2327 = vmatpush.msra.mxu0 %v2304
      %2328 = vmatmul.f32.gmra.mxu0 %v2270
      %v2329 = vpop.f32.mrf.mxu0
      %v2330 = vadd.f32 %v2310, %v2329
      %2331 = vmatmul.f32.gmra.mxu0 %v2273
      %v2332 = vpop.f32.mrf.mxu0
      %v2333 = vadd.f32 %v2310, %v2332
      %2334 = vmatmul.f32.gmra.mxu0 %v2276
      %v2335 = vpop.f32.mrf.mxu0
      %v2336 = vadd.f32 %v2310, %v2335
      %2337 = vdwg.mxu0
      %2338 = vmatpush.msra.mxu0 0.0
      %2339 = vmatpush.msra.mxu0 0.0
      %2340 = vmatpush.msra.mxu0 0.0
      %2341 = vmatpush.msra.mxu0 0.0
      %2342 = vmatpush.msra.mxu0 0.0
      %2343 = vmatpush.msra.mxu0 0.0
      %2344 = vmatpush.msra.mxu0 0.0
      %2345 = vmatpush.msra.mxu0 0.0
      %2346 = vmatpush.msra.mxu0 0.0
      %2347 = vmatpush.msra.mxu0 0.0
      %2348 = vmatpush.msra.mxu0 0.0
      %2349 = vmatpush.msra.mxu0 0.0
      %2350 = vmatpush.msra.mxu0 0.0
      %2351 = vmatpush.msra.mxu0 %v2302
      %2352 = vmatpush.msra.mxu0 %v2299
      %2353 = vmatpush.msra.mxu0 %v2296
      %2354 = vmatmul.f32.gmra.mxu0 %v1666
      %v2355 = vpop.f32.mrf.mxu0
      %v2356 = vadd.f32 0.0, %v2355
      %2357 = vmatmul.f32.gmra.mxu0 %v1669
      %v2358 = vpop.f32.mrf.mxu0
      %v2359 = vadd.f32 0.0, %v2358
      %2360 = vmatmul.f32.gmra.mxu0 %v1672
      %v2361 = vpop.f32.mrf.mxu0
      %v2362 = vadd.f32 0.0, %v2361
      %2363 = vmatmul.f32.gmra.mxu0 %v1675
      %v2364 = vpop.f32.mrf.mxu0
      %v2365 = vadd.f32 0.0, %v2364
      %2366 = vmatmul.f32.gmra.mxu0 %v1678
      %v2367 = vpop.f32.mrf.mxu0
      %v2368 = vadd.f32 0.0, %v2367
      %2369 = vmatmul.f32.gmra.mxu0 %v1681
      %v2370 = vpop.f32.mrf.mxu0
      %v2371 = vadd.f32 0.0, %v2370
      %2372 = vmatmul.f32.gmra.mxu0 %v1684
      %v2373 = vpop.f32.mrf.mxu0
      %v2374 = vadd.f32 0.0, %v2373
      %2375 = vmatmul.f32.gmra.mxu0 %v1687
      %v2376 = vpop.f32.mrf.mxu0
      %v2377 = vadd.f32 0.0, %v2376
      %2378 = vmatmul.f32.gmra.mxu0 %v1690
      %v2379 = vpop.f32.mrf.mxu0
      %v2380 = vadd.f32 0.0, %v2379
      %2381 = vmatmul.f32.gmra.mxu0 %v1693
      %v2382 = vpop.f32.mrf.mxu0
      %v2383 = vadd.f32 0.0, %v2382
      %2384 = vmatmul.f32.gmra.mxu0 %v1696
      %v2385 = vpop.f32.mrf.mxu0
      %v2386 = vadd.f32 0.0, %v2385
      %2387 = vmatmul.f32.gmra.mxu0 %v1699
      %v2388 = vpop.f32.mrf.mxu0
      %v2389 = vadd.f32 0.0, %v2388
      %2390 = vdwg.mxu0
      %v2391 = vmax.f32 %v2356, %v2365
      %v2392 = vmax.f32 %v2359, %v2368
      %v2393 = vmax.f32 %v2362, %v2371
      %v2394 = vmax.f32 %v2391, %v2374
      %v2395 = vmax.f32 %v2392, %v2377
      %v2396 = vmax.f32 %v2393, %v2380
      %v2397 = vmax.f32 %v2394, %v2383
      %v2398 = vmax.f32 %v2395, %v2386
      %v2399 = vmax.f32 %v2396, %v2389
      %v2400 = vadd.f32 %v2397, %v2330
      %v2401 = vadd.f32 %v2398, %v2333
      %v2402 = vadd.f32 %v2399, %v2336
      %v2403 = vmul.f32 %v2400, 0.2
      %v2404 = vmul.f32 %v2401, 0.2
      %v2405 = vmul.f32 %v2402, 0.2
      %v2406 = vmax.f32 %v2400, %v2403
      %v2407 = vmax.f32 %v2401, %v2404
      %v2408 = vmax.f32 %v2402, %v2405
      %v2409 = vld [vmem:[%s45] sm:$0xff]
      %v2410 = vld [vmem:[%s45 + $0x8] sm:$0xff]
      %v2412 = vsel %vm1774, %v2406, 0
      %v2415 = vsel %vm1774, %v2407, 0
      %v2418 = vsel %vm1774, %v2408, 0
      %2420 = vmatpush.msra.mxu0 0.0
      %2421 = vmatpush.msra.mxu0 0.0
      %2422 = vmatpush.msra.mxu0 0.0
      %2423 = vmatpush.msra.mxu0 0.0
      %2424 = vmatpush.msra.mxu0 0.0
      %2425 = vmatpush.msra.mxu0 0.0
      %2426 = vmatpush.msra.mxu0 0.0
      %2427 = vmatpush.msra.mxu0 0.0
      %2428 = vmatpush.msra.mxu0 0.0
      %2429 = vmatpush.msra.mxu0 0.0
      %2430 = vmatpush.msra.mxu0 0.0
      %2431 = vmatpush.msra.mxu0 0.0
      %2432 = vmatpush.msra.mxu0 0.0
      %2433 = vmatpush.msra.mxu0 0.0
      %2434 = vmatpush.msra.mxu0 %v2410
      %2435 = vmatpush.msra.mxu0 %v2409
      %2436 = vmatmul.f32.gmra.mxu0 %v2412
      %v2437 = vpop.f32.mrf.mxu0
      %v2438 = vadd.f32 0.0, %v2437
      %2439 = vmatmul.f32.gmra.mxu0 %v2415
      %v2440 = vpop.f32.mrf.mxu0
      %v2441 = vadd.f32 0.0, %v2440
      %2442 = vmatmul.f32.gmra.mxu0 %v2418
      %v2443 = vpop.f32.mrf.mxu0
      %v2444 = vadd.f32 0.0, %v2443
      %2445 = vdwg.mxu0
      %v2446 = vld [vmem:[%s47] sm:$0xff]
      %v2447 = vld [vmem:[%s47 + $0x8] sm:$0xff]
      %v2448 = vld [vmem:[%s49] sm:$0x1]
      %v2450 = vperm.slane %v2448, 0
      %2452 = vmatpush.msra.mxu0 0.0
      %2453 = vmatpush.msra.mxu0 0.0
      %2454 = vmatpush.msra.mxu0 0.0
      %2455 = vmatpush.msra.mxu0 0.0
      %2456 = vmatpush.msra.mxu0 0.0
      %2457 = vmatpush.msra.mxu0 0.0
      %2458 = vmatpush.msra.mxu0 0.0
      %2459 = vmatpush.msra.mxu0 0.0
      %2460 = vmatpush.msra.mxu0 0.0
      %2461 = vmatpush.msra.mxu0 0.0
      %2462 = vmatpush.msra.mxu0 0.0
      %2463 = vmatpush.msra.mxu0 0.0
      %2464 = vmatpush.msra.mxu0 0.0
      %2465 = vmatpush.msra.mxu0 0.0
      %2466 = vmatpush.msra.mxu0 %v2447
      %2467 = vmatpush.msra.mxu0 %v2446
      %2468 = vmatmul.f32.gmra.mxu0 %v2412
      %v2469 = vpop.f32.mrf.mxu0
      %v2470 = vadd.f32 %v2450, %v2469
      %2471 = vmatmul.f32.gmra.mxu0 %v2415
      %v2472 = vpop.f32.mrf.mxu0
      %v2473 = vadd.f32 %v2450, %v2472
      %2474 = vmatmul.f32.gmra.mxu0 %v2418
      %v2475 = vpop.f32.mrf.mxu0
      %v2476 = vadd.f32 %v2450, %v2475
      %2477 = vdwg.mxu0
      %2478 = vmatpush.msra.mxu0 0.0
      %2479 = vmatpush.msra.mxu0 0.0
      %2480 = vmatpush.msra.mxu0 0.0
      %2481 = vmatpush.msra.mxu0 0.0
      %2482 = vmatpush.msra.mxu0 0.0
      %2483 = vmatpush.msra.mxu0 0.0
      %2484 = vmatpush.msra.mxu0 0.0
      %2485 = vmatpush.msra.mxu0 0.0
      %2486 = vmatpush.msra.mxu0 0.0
      %2487 = vmatpush.msra.mxu0 0.0
      %2488 = vmatpush.msra.mxu0 0.0
      %2489 = vmatpush.msra.mxu0 0.0
      %2490 = vmatpush.msra.mxu0 0.0
      %2491 = vmatpush.msra.mxu0 %v2444
      %2492 = vmatpush.msra.mxu0 %v2441
      %2493 = vmatpush.msra.mxu0 %v2438
      %2494 = vmatmul.f32.gmra.mxu0 %v1666
      %v2495 = vpop.f32.mrf.mxu0
      %v2496 = vadd.f32 0.0, %v2495
      %2497 = vmatmul.f32.gmra.mxu0 %v1669
      %v2498 = vpop.f32.mrf.mxu0
      %v2499 = vadd.f32 0.0, %v2498
      %2500 = vmatmul.f32.gmra.mxu0 %v1672
      %v2501 = vpop.f32.mrf.mxu0
      %v2502 = vadd.f32 0.0, %v2501
      %2503 = vmatmul.f32.gmra.mxu0 %v1675
      %v2504 = vpop.f32.mrf.mxu0
      %v2505 = vadd.f32 0.0, %v2504
      %2506 = vmatmul.f32.gmra.mxu0 %v1678
      %v2507 = vpop.f32.mrf.mxu0
      %v2508 = vadd.f32 0.0, %v2507
      %2509 = vmatmul.f32.gmra.mxu0 %v1681
      %v2510 = vpop.f32.mrf.mxu0
      %v2511 = vadd.f32 0.0, %v2510
      %2512 = vmatmul.f32.gmra.mxu0 %v1684
      %v2513 = vpop.f32.mrf.mxu0
      %v2514 = vadd.f32 0.0, %v2513
      %2515 = vmatmul.f32.gmra.mxu0 %v1687
      %v2516 = vpop.f32.mrf.mxu0
      %v2517 = vadd.f32 0.0, %v2516
      %2518 = vmatmul.f32.gmra.mxu0 %v1690
      %v2519 = vpop.f32.mrf.mxu0
      %v2520 = vadd.f32 0.0, %v2519
      %2521 = vmatmul.f32.gmra.mxu0 %v1693
      %v2522 = vpop.f32.mrf.mxu0
      %v2523 = vadd.f32 0.0, %v2522
      %2524 = vmatmul.f32.gmra.mxu0 %v1696
      %v2525 = vpop.f32.mrf.mxu0
      %v2526 = vadd.f32 0.0, %v2525
      %2527 = vmatmul.f32.gmra.mxu0 %v1699
      %v2528 = vpop.f32.mrf.mxu0
      %v2529 = vadd.f32 0.0, %v2528
      %2530 = vdwg.mxu0
      %v2531 = vmax.f32 %v2496, %v2505
      %v2532 = vmax.f32 %v2499, %v2508
      %v2533 = vmax.f32 %v2502, %v2511
      %v2534 = vmax.f32 %v2531, %v2514
      %v2535 = vmax.f32 %v2532, %v2517
      %v2536 = vmax.f32 %v2533, %v2520
      %v2537 = vmax.f32 %v2534, %v2523
      %v2538 = vmax.f32 %v2535, %v2526
      %v2539 = vmax.f32 %v2536, %v2529
      %v2540 = vadd.f32 %v2537, %v2470
      %v2541 = vadd.f32 %v2538, %v2473
      %v2542 = vadd.f32 %v2539, %v2476
      %v2543 = vmul.f32 %v2540, 0.2
      %v2544 = vmul.f32 %v2541, 0.2
      %v2545 = vmul.f32 %v2542, 0.2
      %v2546 = vmax.f32 %v2540, %v2543
      %v2547 = vmax.f32 %v2541, %v2544
      %v2548 = vmax.f32 %v2542, %v2545
      %v2549 = vld [vmem:[%s51] sm:$0xff]
      %v2551 = vsel %vm1914, %v2546, 0
      %v2554 = vsel %vm1914, %v2547, 0
      %v2557 = vsel %vm1914, %v2548, 0
      %2559 = vmatpush.msra.mxu0 0.0
      %2560 = vmatpush.msra.mxu0 0.0
      %2561 = vmatpush.msra.mxu0 0.0
      %2562 = vmatpush.msra.mxu0 0.0
      %2563 = vmatpush.msra.mxu0 0.0
      %2564 = vmatpush.msra.mxu0 0.0
      %2565 = vmatpush.msra.mxu0 0.0
      %2566 = vmatpush.msra.mxu0 0.0
      %2567 = vmatpush.msra.mxu0 0.0
      %2568 = vmatpush.msra.mxu0 0.0
      %2569 = vmatpush.msra.mxu0 0.0
      %2570 = vmatpush.msra.mxu0 0.0
      %2571 = vmatpush.msra.mxu0 0.0
      %2572 = vmatpush.msra.mxu0 0.0
      %2573 = vmatpush.msra.mxu0 0.0
      %2574 = vmatpush.msra.mxu0 %v2549
      %2575 = vmatmul.f32.gmra.mxu0 %v2551
      %v2576 = vpop.f32.mrf.mxu0
      %v2577 = vadd.f32 0.0, %v2576
      %2578 = vmatmul.f32.gmra.mxu0 %v2554
      %v2579 = vpop.f32.mrf.mxu0
      %v2580 = vadd.f32 0.0, %v2579
      %2581 = vmatmul.f32.gmra.mxu0 %v2557
      %v2582 = vpop.f32.mrf.mxu0
      %v2583 = vadd.f32 0.0, %v2582
      %2584 = vdwg.mxu0
      %v2585 = vld [vmem:[%s53] sm:$0xff]
      %v2586 = vld [vmem:[%s55] sm:$0x1]
      %v2588 = vperm.slane %v2586, 0
      %2590 = vmatpush.msra.mxu0 0.0
      %2591 = vmatpush.msra.mxu0 0.0
      %2592 = vmatpush.msra.mxu0 0.0
      %2593 = vmatpush.msra.mxu0 0.0
      %2594 = vmatpush.msra.mxu0 0.0
      %2595 = vmatpush.msra.mxu0 0.0
      %2596 = vmatpush.msra.mxu0 0.0
      %2597 = vmatpush.msra.mxu0 0.0
      %2598 = vmatpush.msra.mxu0 0.0
      %2599 = vmatpush.msra.mxu0 0.0
      %2600 = vmatpush.msra.mxu0 0.0
      %2601 = vmatpush.msra.mxu0 0.0
      %2602 = vmatpush.msra.mxu0 0.0
      %2603 = vmatpush.msra.mxu0 0.0
      %2604 = vmatpush.msra.mxu0 0.0
      %2605 = vmatpush.msra.mxu0 %v2585
      %2606 = vmatmul.f32.gmra.mxu0 %v2551
      %v2607 = vpop.f32.mrf.mxu0
      %v2608 = vadd.f32 %v2588, %v2607
      %2609 = vmatmul.f32.gmra.mxu0 %v2554
      %v2610 = vpop.f32.mrf.mxu0
      %v2611 = vadd.f32 %v2588, %v2610
      %2612 = vmatmul.f32.gmra.mxu0 %v2557
      %v2613 = vpop.f32.mrf.mxu0
      %v2614 = vadd.f32 %v2588, %v2613
      %2615 = vdwg.mxu0
      %2616 = vmatpush.msra.mxu0 0.0
      %2617 = vmatpush.msra.mxu0 0.0
      %2618 = vmatpush.msra.mxu0 0.0
      %2619 = vmatpush.msra.mxu0 0.0
      %2620 = vmatpush.msra.mxu0 0.0
      %2621 = vmatpush.msra.mxu0 0.0
      %2622 = vmatpush.msra.mxu0 0.0
      %2623 = vmatpush.msra.mxu0 0.0
      %2624 = vmatpush.msra.mxu0 0.0
      %2625 = vmatpush.msra.mxu0 0.0
      %2626 = vmatpush.msra.mxu0 0.0
      %2627 = vmatpush.msra.mxu0 0.0
      %2628 = vmatpush.msra.mxu0 0.0
      %2629 = vmatpush.msra.mxu0 %v2583
      %2630 = vmatpush.msra.mxu0 %v2580
      %2631 = vmatpush.msra.mxu0 %v2577
      %2632 = vmatmul.f32.gmra.mxu0 %v1666
      %v2633 = vpop.f32.mrf.mxu0
      %v2634 = vadd.f32 0.0, %v2633
      %2635 = vmatmul.f32.gmra.mxu0 %v1669
      %v2636 = vpop.f32.mrf.mxu0
      %v2637 = vadd.f32 0.0, %v2636
      %2638 = vmatmul.f32.gmra.mxu0 %v1672
      %v2639 = vpop.f32.mrf.mxu0
      %v2640 = vadd.f32 0.0, %v2639
      %2641 = vmatmul.f32.gmra.mxu0 %v1675
      %v2642 = vpop.f32.mrf.mxu0
      %v2643 = vadd.f32 0.0, %v2642
      %2644 = vmatmul.f32.gmra.mxu0 %v1678
      %v2645 = vpop.f32.mrf.mxu0
      %v2646 = vadd.f32 0.0, %v2645
      %2647 = vmatmul.f32.gmra.mxu0 %v1681
      %v2648 = vpop.f32.mrf.mxu0
      %v2649 = vadd.f32 0.0, %v2648
      %2650 = vmatmul.f32.gmra.mxu0 %v1684
      %v2651 = vpop.f32.mrf.mxu0
      %v2652 = vadd.f32 0.0, %v2651
      %2653 = vmatmul.f32.gmra.mxu0 %v1687
      %v2654 = vpop.f32.mrf.mxu0
      %v2655 = vadd.f32 0.0, %v2654
      %2656 = vmatmul.f32.gmra.mxu0 %v1690
      %v2657 = vpop.f32.mrf.mxu0
      %v2658 = vadd.f32 0.0, %v2657
      %2659 = vmatmul.f32.gmra.mxu0 %v1693
      %v2660 = vpop.f32.mrf.mxu0
      %v2661 = vadd.f32 0.0, %v2660
      %2662 = vmatmul.f32.gmra.mxu0 %v1696
      %v2663 = vpop.f32.mrf.mxu0
      %v2664 = vadd.f32 0.0, %v2663
      %2665 = vmatmul.f32.gmra.mxu0 %v1699
      %v2666 = vpop.f32.mrf.mxu0
      %v2667 = vadd.f32 0.0, %v2666
      %2668 = vdwg.mxu0
      %v2669 = vmax.f32 %v2634, %v2643
      %v2670 = vmax.f32 %v2637, %v2646
      %v2671 = vmax.f32 %v2640, %v2649
      %v2672 = vmax.f32 %v2669, %v2652
      %v2673 = vmax.f32 %v2670, %v2655
      %v2674 = vmax.f32 %v2671, %v2658
      %v2675 = vmax.f32 %v2672, %v2661
      %v2676 = vmax.f32 %v2673, %v2664
      %v2677 = vmax.f32 %v2674, %v2667
      %v2678 = vadd.f32 %v2675, %v2608
      %v2679 = vadd.f32 %v2676, %v2611
      %v2680 = vadd.f32 %v2677, %v2614
      %v2681 = vmul.f32 %v2678, 0.2
      %v2682 = vmul.f32 %v2679, 0.2
      %v2683 = vmul.f32 %v2680, 0.2
      %v2684 = vmax.f32 %v2678, %v2681
      %v2685 = vmax.f32 %v2679, %v2682
      %v2686 = vmax.f32 %v2680, %v2683
      %v2687 = vld [vmem:[%s63] sm:$0x1]
      %v2688 = vld [vmem:[%s57] sm:$0xff]
      %v2689 = vld [vmem:[%s57 + $0x8] sm:$0xff]
      %2690 = vmatpush.msra.mxu0 0.0
      %2691 = vmatpush.msra.mxu0 0.0
      %2692 = vmatpush.msra.mxu0 0.0
      %2693 = vmatpush.msra.mxu0 0.0
      %2694 = vmatpush.msra.mxu0 0.0
      %2695 = vmatpush.msra.mxu0 0.0
      %2696 = vmatpush.msra.mxu0 0.0
      %2697 = vmatpush.msra.mxu0 0.0
      %2698 = vmatpush.msra.mxu0 0.0
      %2699 = vmatpush.msra.mxu0 0.0
      %2700 = vmatpush.msra.mxu0 0.0
      %2701 = vmatpush.msra.mxu0 0.0
      %2702 = vmatpush.msra.mxu0 0.0
      %2703 = vmatpush.msra.mxu0 0.0
      %2704 = vmatpush.msra.mxu0 %v2689
      %2705 = vmatpush.msra.mxu0 %v2688
      %2706 = vmatmul.f32.gmra.mxu0 %v2412
      %v2707 = vpop.f32.mrf.mxu0
      %v2708 = vadd.f32 0.0, %v2707
      %2709 = vmatmul.f32.gmra.mxu0 %v2415
      %v2710 = vpop.f32.mrf.mxu0
      %v2711 = vadd.f32 0.0, %v2710
      %2712 = vmatmul.f32.gmra.mxu0 %v2418
      %v2713 = vpop.f32.mrf.mxu0
      %v2714 = vadd.f32 0.0, %v2713
      %2715 = vdwg.mxu0
      %v2717 = vperm.slane %v2687, 0
      %v2719 = vadd.f32 %v2717, %v2708
      %v2720 = vadd.f32 %v2717, %v2711
      %v2721 = vadd.f32 %v2717, %v2714
      %v2722 = vld [vmem:[%s59] sm:$0xff]
      %2723 = vmatpush.msra.mxu0 0.0
      %2724 = vmatpush.msra.mxu0 0.0
      %2725 = vmatpush.msra.mxu0 0.0
      %2726 = vmatpush.msra.mxu0 0.0
      %2727 = vmatpush.msra.mxu0 0.0
      %2728 = vmatpush.msra.mxu0 0.0
      %2729 = vmatpush.msra.mxu0 0.0
      %2730 = vmatpush.msra.mxu0 0.0
      %2731 = vmatpush.msra.mxu0 0.0
      %2732 = vmatpush.msra.mxu0 0.0
      %2733 = vmatpush.msra.mxu0 0.0
      %2734 = vmatpush.msra.mxu0 0.0
      %2735 = vmatpush.msra.mxu0 0.0
      %2736 = vmatpush.msra.mxu0 0.0
      %2737 = vmatpush.msra.mxu0 0.0
      %2738 = vmatpush.msra.mxu0 %v2722
      %2739 = vmatmul.f32.gmra.mxu0 %v2551
      %v2740 = vpop.f32.mrf.mxu0
      %v2741 = vadd.f32 0.0, %v2740
      %2742 = vmatmul.f32.gmra.mxu0 %v2554
      %v2743 = vpop.f32.mrf.mxu0
      %v2744 = vadd.f32 0.0, %v2743
      %2745 = vmatmul.f32.gmra.mxu0 %v2557
      %v2746 = vpop.f32.mrf.mxu0
      %v2747 = vadd.f32 0.0, %v2746
      %2748 = vdwg.mxu0
      %v2749 = vadd.f32 %v2719, %v2741
      %v2750 = vadd.f32 %v2720, %v2744
      %v2751 = vadd.f32 %v2721, %v2747
      %v2752 = vld [vmem:[%s61] sm:$0xff]
      %v2754 = vsel %vm1914, %v2684, 0
      %v2757 = vsel %vm1914, %v2685, 0
      %v2760 = vsel %vm1914, %v2686, 0
      %2762 = vmatpush.msra.mxu0 0.0
      %2763 = vmatpush.msra.mxu0 0.0
      %2764 = vmatpush.msra.mxu0 0.0
      %2765 = vmatpush.msra.mxu0 0.0
      %2766 = vmatpush.msra.mxu0 0.0
      %2767 = vmatpush.msra.mxu0 0.0
      %2768 = vmatpush.msra.mxu0 0.0
      %2769 = vmatpush.msra.mxu0 0.0
      %2770 = vmatpush.msra.mxu0 0.0
      %2771 = vmatpush.msra.mxu0 0.0
      %2772 = vmatpush.msra.mxu0 0.0
      %2773 = vmatpush.msra.mxu0 0.0
      %2774 = vmatpush.msra.mxu0 0.0
      %2775 = vmatpush.msra.mxu0 0.0
      %2776 = vmatpush.msra.mxu0 0.0
      %2777 = vmatpush.msra.mxu0 %v2752
      %2778 = vmatmul.f32.gmra.mxu0 %v2754
      %v2779 = vpop.f32.mrf.mxu0
      %v2780 = vadd.f32 0.0, %v2779
      %2781 = vmatmul.f32.gmra.mxu0 %v2757
      %v2782 = vpop.f32.mrf.mxu0
      %v2783 = vadd.f32 0.0, %v2782
      %2784 = vmatmul.f32.gmra.mxu0 %v2760
      %v2785 = vpop.f32.mrf.mxu0
      %v2786 = vadd.f32 0.0, %v2785
      %2787 = vdwg.mxu0
      %v2788 = vadd.f32 %v2749, %v2780
      %v2789 = vadd.f32 %v2750, %v2783
      %v2790 = vadd.f32 %v2751, %v2786
      %v2791 = vmul.f32 %v2788, 0.2
      %v2792 = vmul.f32 %v2789, 0.2
      %v2793 = vmul.f32 %v2790, 0.2
      %v2794 = vmax.f32 %v2788, %v2791
      %v2795 = vmax.f32 %v2789, %v2792
      %v2796 = vmax.f32 %v2790, %v2793
      %v2797 = vld [vmem:[%s65] sm:$0xff]
      %v2798 = vld [vmem:[%s65 + $0x8] sm:$0xff]
      %v2799 = vld [vmem:[%s65 + $0x10] sm:$0xff]
      %v2800 = vld [vmem:[%s65 + $0x18] sm:$0xff]
      %v2801 = vld [vmem:[%s65 + $0x20] sm:$0xff]
      %v2802 = vld [vmem:[%s65 + $0x28] sm:$0xff]
      %v2803 = vld [vmem:[%s65 + $0x30] sm:$0xff]
      %v2804 = vld [vmem:[%s65 + $0x38] sm:$0xff]
      %v2805 = vld [vmem:[%s67] sm:$0x1]
      %v2807 = vperm.slane %v2805, 0
      %v2810 = vsel %vm2174, %v2794, 0
      %v2813 = vsel %vm2174, %v2795, 0
      %v2816 = vsel %vm2174, %v2796, 0
      %2818 = vmatpush.msra.mxu0 0.0
      %2819 = vmatpush.msra.mxu0 0.0
      %2820 = vmatpush.msra.mxu0 0.0
      %2821 = vmatpush.msra.mxu0 0.0
      %2822 = vmatpush.msra.mxu0 0.0
      %2823 = vmatpush.msra.mxu0 0.0
      %2824 = vmatpush.msra.mxu0 0.0
      %2825 = vmatpush.msra.mxu0 0.0
      %2826 = vmatpush.msra.mxu0 %v2804
      %2827 = vmatpush.msra.mxu0 %v2803
      %2828 = vmatpush.msra.mxu0 %v2802
      %2829 = vmatpush.msra.mxu0 %v2801
      %2830 = vmatpush.msra.mxu0 %v2800
      %2831 = vmatpush.msra.mxu0 %v2799
      %2832 = vmatpush.msra.mxu0 %v2798
      %2833 = vmatpush.msra.mxu0 %v2797
      %2834 = vmatmul.f32.gmra.mxu0 %v2810
      %v2835 = vpop.f32.mrf.mxu0
      %v2836 = vadd.f32 %v2807, %v2835
      %2837 = vmatmul.f32.gmra.mxu0 %v2813
      %v2838 = vpop.f32.mrf.mxu0
      %v2839 = vadd.f32 %v2807, %v2838
      %2840 = vmatmul.f32.gmra.mxu0 %v2816
      %v2841 = vpop.f32.mrf.mxu0
      %v2842 = vadd.f32 %v2807, %v2841
      %2843 = vdwg.mxu0
      %v2844 = vmul.f32 %v2836, 0.2
      %v2845 = vmul.f32 %v2839, 0.2
      %v2846 = vmul.f32 %v2842, 0.2
      %v2847 = vmax.f32 %v2836, %v2844
      %v2848 = vmax.f32 %v2839, %v2845
      %v2849 = vmax.f32 %v2842, %v2846
      %v2850 = vld [vmem:[%s69] sm:$0xff]
      %v2851 = vld [vmem:[%s69 + $0x8] sm:$0xff]
      %v2852 = vld [vmem:[%s69 + $0x10] sm:$0xff]
      %v2853 = vld [vmem:[%s69 + $0x18] sm:$0xff]
      %v2854 = vld [vmem:[%s69 + $0x20] sm:$0xff]
      %v2855 = vld [vmem:[%s69 + $0x28] sm:$0xff]
      %v2856 = vld [vmem:[%s71] sm:$0x1]
      %v2858 = vperm.slane %v2856, 0
      %v2861 = vsel %vm2226, %v2847, 0
      %v2864 = vsel %vm2226, %v2848, 0
      %v2867 = vsel %vm2226, %v2849, 0
      %2869 = vmatpush.msra.mxu0 0.0
      %2870 = vmatpush.msra.mxu0 0.0
      %2871 = vmatpush.msra.mxu0 0.0
      %2872 = vmatpush.msra.mxu0 0.0
      %2873 = vmatpush.msra.mxu0 0.0
      %2874 = vmatpush.msra.mxu0 0.0
      %2875 = vmatpush.msra.mxu0 0.0
      %2876 = vmatpush.msra.mxu0 0.0
      %2877 = vmatpush.msra.mxu0 0.0
      %2878 = vmatpush.msra.mxu0 0.0
      %2879 = vmatpush.msra.mxu0 %v2855
      %2880 = vmatpush.msra.mxu0 %v2854
      %2881 = vmatpush.msra.mxu0 %v2853
      %2882 = vmatpush.msra.mxu0 %v2852
      %2883 = vmatpush.msra.mxu0 %v2851
      %2884 = vmatpush.msra.mxu0 %v2850
      %2885 = vmatmul.f32.gmra.mxu0 %v2861
      %v2886 = vpop.f32.mrf.mxu0
      %v2887 = vadd.f32 %v2858, %v2886
      %2888 = vmatmul.f32.gmra.mxu0 %v2864
      %v2889 = vpop.f32.mrf.mxu0
      %v2890 = vadd.f32 %v2858, %v2889
      %2891 = vmatmul.f32.gmra.mxu0 %v2867
      %v2892 = vpop.f32.mrf.mxu0
      %v2893 = vadd.f32 %v2858, %v2892
      %2894 = vdwg.mxu0
      %v2895 = vadd.f32 %v2262, %v2887
      %v2896 = vadd.f32 %v2263, %v2890
      %v2897 = vadd.f32 %v2264, %v2893
      %v2898 = vld [vmem:[%s73] sm:$0xff]
      %v2899 = vld [vmem:[%s73 + $0x8] sm:$0xff]
      %v2900 = vld [vmem:[%s73 + $0x10] sm:$0xff]
      %v2901 = vld [vmem:[%s73 + $0x18] sm:$0xff]
      %v2903 = vsel %vm1594, %v2895, 0
      %v2906 = vsel %vm1594, %v2896, 0
      %v2909 = vsel %vm1594, %v2897, 0
      %2911 = vmatpush.msra.mxu0 0.0
      %2912 = vmatpush.msra.mxu0 0.0
      %2913 = vmatpush.msra.mxu0 0.0
      %2914 = vmatpush.msra.mxu0 0.0
      %2915 = vmatpush.msra.mxu0 0.0
      %2916 = vmatpush.msra.mxu0 0.0
      %2917 = vmatpush.msra.mxu0 0.0
      %2918 = vmatpush.msra.mxu0 0.0
      %2919 = vmatpush.msra.mxu0 0.0
      %2920 = vmatpush.msra.mxu0 0.0
      %2921 = vmatpush.msra.mxu0 0.0
      %2922 = vmatpush.msra.mxu0 0.0
      %2923 = vmatpush.msra.mxu0 %v2901
      %2924 = vmatpush.msra.mxu0 %v2900
      %2925 = vmatpush.msra.mxu0 %v2899
      %2926 = vmatpush.msra.mxu0 %v2898
      %2927 = vmatmul.f32.gmra.mxu0 %v2903
      %v2928 = vpop.f32.mrf.mxu0
      %v2929 = vadd.f32 0.0, %v2928
      %2930 = vmatmul.f32.gmra.mxu0 %v2906
      %v2931 = vpop.f32.mrf.mxu0
      %v2932 = vadd.f32 0.0, %v2931
      %2933 = vmatmul.f32.gmra.mxu0 %v2909
      %v2934 = vpop.f32.mrf.mxu0
      %v2935 = vadd.f32 0.0, %v2934
      %2936 = vdwg.mxu0
      %v2937 = vld [vmem:[%s75] sm:$0xff]
      %v2938 = vld [vmem:[%s75 + $0x8] sm:$0xff]
      %v2939 = vld [vmem:[%s75 + $0x10] sm:$0xff]
      %v2940 = vld [vmem:[%s75 + $0x18] sm:$0xff]
      %v2941 = vld [vmem:[%s77] sm:$0x1]
      %v2943 = vperm.slane %v2941, 0
      %2945 = vmatpush.msra.mxu0 0.0
      %2946 = vmatpush.msra.mxu0 0.0
      %2947 = vmatpush.msra.mxu0 0.0
      %2948 = vmatpush.msra.mxu0 0.0
      %2949 = vmatpush.msra.mxu0 0.0
      %2950 = vmatpush.msra.mxu0 0.0
      %2951 = vmatpush.msra.mxu0 0.0
      %2952 = vmatpush.msra.mxu0 0.0
      %2953 = vmatpush.msra.mxu0 0.0
      %2954 = vmatpush.msra.mxu0 0.0
      %2955 = vmatpush.msra.mxu0 0.0
      %2956 = vmatpush.msra.mxu0 0.0
      %2957 = vmatpush.msra.mxu0 %v2940
      %2958 = vmatpush.msra.mxu0 %v2939
      %2959 = vmatpush.msra.mxu0 %v2938
      %2960 = vmatpush.msra.mxu0 %v2937
      %2961 = vmatmul.f32.gmra.mxu0 %v2903
      %v2962 = vpop.f32.mrf.mxu0
      %v2963 = vadd.f32 %v2943, %v2962
      %2964 = vmatmul.f32.gmra.mxu0 %v2906
      %v2965 = vpop.f32.mrf.mxu0
      %v2966 = vadd.f32 %v2943, %v2965
      %2967 = vmatmul.f32.gmra.mxu0 %v2909
      %v2968 = vpop.f32.mrf.mxu0
      %v2969 = vadd.f32 %v2943, %v2968
      %2970 = vdwg.mxu0
      %2971 = vmatpush.msra.mxu0 0.0
      %2972 = vmatpush.msra.mxu0 0.0
      %2973 = vmatpush.msra.mxu0 0.0
      %2974 = vmatpush.msra.mxu0 0.0
      %2975 = vmatpush.msra.mxu0 0.0
      %2976 = vmatpush.msra.mxu0 0.0
      %2977 = vmatpush.msra.mxu0 0.0
      %2978 = vmatpush.msra.mxu0 0.0
      %2979 = vmatpush.msra.mxu0 0.0
      %2980 = vmatpush.msra.mxu0 0.0
      %2981 = vmatpush.msra.mxu0 0.0
      %2982 = vmatpush.msra.mxu0 0.0
      %2983 = vmatpush.msra.mxu0 0.0
      %2984 = vmatpush.msra.mxu0 %v2935
      %2985 = vmatpush.msra.mxu0 %v2932
      %2986 = vmatpush.msra.mxu0 %v2929
      %2987 = vmatmul.f32.gmra.mxu0 %v1666
      %v2988 = vpop.f32.mrf.mxu0
      %v2989 = vadd.f32 0.0, %v2988
      %2990 = vmatmul.f32.gmra.mxu0 %v1669
      %v2991 = vpop.f32.mrf.mxu0
      %v2992 = vadd.f32 0.0, %v2991
      %2993 = vmatmul.f32.gmra.mxu0 %v1672
      %v2994 = vpop.f32.mrf.mxu0
      %v2995 = vadd.f32 0.0, %v2994
      %2996 = vmatmul.f32.gmra.mxu0 %v1675
      %v2997 = vpop.f32.mrf.mxu0
      %v2998 = vadd.f32 0.0, %v2997
      %2999 = vmatmul.f32.gmra.mxu0 %v1678
      %v3000 = vpop.f32.mrf.mxu0
      %v3001 = vadd.f32 0.0, %v3000
      %3002 = vmatmul.f32.gmra.mxu0 %v1681
      %v3003 = vpop.f32.mrf.mxu0
      %v3004 = vadd.f32 0.0, %v3003
      %3005 = vmatmul.f32.gmra.mxu0 %v1684
      %v3006 = vpop.f32.mrf.mxu0
      %v3007 = vadd.f32 0.0, %v3006
      %3008 = vmatmul.f32.gmra.mxu0 %v1687
      %v3009 = vpop.f32.mrf.mxu0
      %v3010 = vadd.f32 0.0, %v3009
      %3011 = vmatmul.f32.gmra.mxu0 %v1690
      %v3012 = vpop.f32.mrf.mxu0
      %v3013 = vadd.f32 0.0, %v3012
      %3014 = vmatmul.f32.gmra.mxu0 %v1693
      %v3015 = vpop.f32.mrf.mxu0
      %v3016 = vadd.f32 0.0, %v3015
      %3017 = vmatmul.f32.gmra.mxu0 %v1696
      %v3018 = vpop.f32.mrf.mxu0
      %v3019 = vadd.f32 0.0, %v3018
      %3020 = vmatmul.f32.gmra.mxu0 %v1699
      %v3021 = vpop.f32.mrf.mxu0
      %v3022 = vadd.f32 0.0, %v3021
      %3023 = vdwg.mxu0
      %v3024 = vmax.f32 %v2989, %v2998
      %v3025 = vmax.f32 %v2992, %v3001
      %v3026 = vmax.f32 %v2995, %v3004
      %v3027 = vmax.f32 %v3024, %v3007
      %v3028 = vmax.f32 %v3025, %v3010
      %v3029 = vmax.f32 %v3026, %v3013
      %v3030 = vmax.f32 %v3027, %v3016
      %v3031 = vmax.f32 %v3028, %v3019
      %v3032 = vmax.f32 %v3029, %v3022
      %v3033 = vadd.f32 %v3030, %v2963
      %v3034 = vadd.f32 %v3031, %v2966
      %v3035 = vadd.f32 %v3032, %v2969
      %v3036 = vmul.f32 %v3033, 0.2
      %v3037 = vmul.f32 %v3034, 0.2
      %v3038 = vmul.f32 %v3035, 0.2
      %v3039 = vmax.f32 %v3033, %v3036
      %v3040 = vmax.f32 %v3034, %v3037
      %v3041 = vmax.f32 %v3035, %v3038
      %v3042 = vld [vmem:[%s79] sm:$0xff]
      %v3043 = vld [vmem:[%s79 + $0x8] sm:$0xff]
      %v3045 = vsel %vm1774, %v3039, 0
      %v3048 = vsel %vm1774, %v3040, 0
      %v3051 = vsel %vm1774, %v3041, 0
      %3053 = vmatpush.msra.mxu0 0.0
      %3054 = vmatpush.msra.mxu0 0.0
      %3055 = vmatpush.msra.mxu0 0.0
      %3056 = vmatpush.msra.mxu0 0.0
      %3057 = vmatpush.msra.mxu0 0.0
      %3058 = vmatpush.msra.mxu0 0.0
      %3059 = vmatpush.msra.mxu0 0.0
      %3060 = vmatpush.msra.mxu0 0.0
      %3061 = vmatpush.msra.mxu0 0.0
      %3062 = vmatpush.msra.mxu0 0.0
      %3063 = vmatpush.msra.mxu0 0.0
      %3064 = vmatpush.msra.mxu0 0.0
      %3065 = vmatpush.msra.mxu0 0.0
      %3066 = vmatpush.msra.mxu0 0.0
      %3067 = vmatpush.msra.mxu0 %v3043
      %3068 = vmatpush.msra.mxu0 %v3042
      %3069 = vmatmul.f32.gmra.mxu0 %v3045
      %v3070 = vpop.f32.mrf.mxu0
      %v3071 = vadd.f32 0.0, %v3070
      %3072 = vmatmul.f32.gmra.mxu0 %v3048
      %v3073 = vpop.f32.mrf.mxu0
      %v3074 = vadd.f32 0.0, %v3073
      %3075 = vmatmul.f32.gmra.mxu0 %v3051
      %v3076 = vpop.f32.mrf.mxu0
      %v3077 = vadd.f32 0.0, %v3076
      %3078 = vdwg.mxu0
      %v3079 = vld [vmem:[%s81] sm:$0xff]
      %v3080 = vld [vmem:[%s81 + $0x8] sm:$0xff]
      %v3081 = vld [vmem:[%s83] sm:$0x1]
      %v3083 = vperm.slane %v3081, 0
      %3085 = vmatpush.msra.mxu0 0.0
      %3086 = vmatpush.msra.mxu0 0.0
      %3087 = vmatpush.msra.mxu0 0.0
      %3088 = vmatpush.msra.mxu0 0.0
      %3089 = vmatpush.msra.mxu0 0.0
      %3090 = vmatpush.msra.mxu0 0.0
      %3091 = vmatpush.msra.mxu0 0.0
      %3092 = vmatpush.msra.mxu0 0.0
      %3093 = vmatpush.msra.mxu0 0.0
      %3094 = vmatpush.msra.mxu0 0.0
      %3095 = vmatpush.msra.mxu0 0.0
      %3096 = vmatpush.msra.mxu0 0.0
      %3097 = vmatpush.msra.mxu0 0.0
      %3098 = vmatpush.msra.mxu0 0.0
      %3099 = vmatpush.msra.mxu0 %v3080
      %3100 = vmatpush.msra.mxu0 %v3079
      %3101 = vmatmul.f32.gmra.mxu0 %v3045
      %v3102 = vpop.f32.mrf.mxu0
      %v3103 = vadd.f32 %v3083, %v3102
      %3104 = vmatmul.f32.gmra.mxu0 %v3048
      %v3105 = vpop.f32.mrf.mxu0
      %v3106 = vadd.f32 %v3083, %v3105
      %3107 = vmatmul.f32.gmra.mxu0 %v3051
      %v3108 = vpop.f32.mrf.mxu0
      %v3109 = vadd.f32 %v3083, %v3108
      %3110 = vdwg.mxu0
      %3111 = vmatpush.msra.mxu0 0.0
      %3112 = vmatpush.msra.mxu0 0.0
      %3113 = vmatpush.msra.mxu0 0.0
      %3114 = vmatpush.msra.mxu0 0.0
      %3115 = vmatpush.msra.mxu0 0.0
      %3116 = vmatpush.msra.mxu0 0.0
      %3117 = vmatpush.msra.mxu0 0.0
      %3118 = vmatpush.msra.mxu0 0.0
      %3119 = vmatpush.msra.mxu0 0.0
      %3120 = vmatpush.msra.mxu0 0.0
      %3121 = vmatpush.msra.mxu0 0.0
      %3122 = vmatpush.msra.mxu0 0.0
      %3123 = vmatpush.msra.mxu0 0.0
      %3124 = vmatpush.msra.mxu0 %v3077
      %3125 = vmatpush.msra.mxu0 %v3074
      %3126 = vmatpush.msra.mxu0 %v3071
      %3127 = vmatmul.f32.gmra.mxu0 %v1666
      %v3128 = vpop.f32.mrf.mxu0
      %v3129 = vadd.f32 0.0, %v3128
      %3130 = vmatmul.f32.gmra.mxu0 %v1669
      %v3131 = vpop.f32.mrf.mxu0
      %v3132 = vadd.f32 0.0, %v3131
      %3133 = vmatmul.f32.gmra.mxu0 %v1672
      %v3134 = vpop.f32.mrf.mxu0
      %v3135 = vadd.f32 0.0, %v3134
      %3136 = vmatmul.f32.gmra.mxu0 %v1675
      %v3137 = vpop.f32.mrf.mxu0
      %v3138 = vadd.f32 0.0, %v3137
      %3139 = vmatmul.f32.gmra.mxu0 %v1678
      %v3140 = vpop.f32.mrf.mxu0
      %v3141 = vadd.f32 0.0, %v3140
      %3142 = vmatmul.f32.gmra.mxu0 %v1681
      %v3143 = vpop.f32.mrf.mxu0
      %v3144 = vadd.f32 0.0, %v3143
      %3145 = vmatmul.f32.gmra.mxu0 %v1684
      %v3146 = vpop.f32.mrf.mxu0
      %v3147 = vadd.f32 0.0, %v3146
      %3148 = vmatmul.f32.gmra.mxu0 %v1687
      %v3149 = vpop.f32.mrf.mxu0
      %v3150 = vadd.f32 0.0, %v3149
      %3151 = vmatmul.f32.gmra.mxu0 %v1690
      %v3152 = vpop.f32.mrf.mxu0
      %v3153 = vadd.f32 0.0, %v3152
      %3154 = vmatmul.f32.gmra.mxu0 %v1693
      %v3155 = vpop.f32.mrf.mxu0
      %v3156 = vadd.f32 0.0, %v3155
      %3157 = vmatmul.f32.gmra.mxu0 %v1696
      %v3158 = vpop.f32.mrf.mxu0
      %v3159 = vadd.f32 0.0, %v3158
      %3160 = vmatmul.f32.gmra.mxu0 %v1699
      %v3161 = vpop.f32.mrf.mxu0
      %v3162 = vadd.f32 0.0, %v3161
      %3163 = vdwg.mxu0
      %v3164 = vmax.f32 %v3129, %v3138
      %v3165 = vmax.f32 %v3132, %v3141
      %v3166 = vmax.f32 %v3135, %v3144
      %v3167 = vmax.f32 %v3164, %v3147
      %v3168 = vmax.f32 %v3165, %v3150
      %v3169 = vmax.f32 %v3166, %v3153
      %v3170 = vmax.f32 %v3167, %v3156
      %v3171 = vmax.f32 %v3168, %v3159
      %v3172 = vmax.f32 %v3169, %v3162
      %v3173 = vadd.f32 %v3170, %v3103
      %v3174 = vadd.f32 %v3171, %v3106
      %v3175 = vadd.f32 %v3172, %v3109
      %v3176 = vmul.f32 %v3173, 0.2
      %v3177 = vmul.f32 %v3174, 0.2
      %v3178 = vmul.f32 %v3175, 0.2
      %v3179 = vmax.f32 %v3173, %v3176
      %v3180 = vmax.f32 %v3174, %v3177
      %v3181 = vmax.f32 %v3175, %v3178
      %v3182 = vld [vmem:[%s85] sm:$0xff]
      %v3184 = vsel %vm1914, %v3179, 0
      %v3187 = vsel %vm1914, %v3180, 0
      %v3190 = vsel %vm1914, %v3181, 0
      %3192 = vmatpush.msra.mxu0 0.0
      %3193 = vmatpush.msra.mxu0 0.0
      %3194 = vmatpush.msra.mxu0 0.0
      %3195 = vmatpush.msra.mxu0 0.0
      %3196 = vmatpush.msra.mxu0 0.0
      %3197 = vmatpush.msra.mxu0 0.0
      %3198 = vmatpush.msra.mxu0 0.0
      %3199 = vmatpush.msra.mxu0 0.0
      %3200 = vmatpush.msra.mxu0 0.0
      %3201 = vmatpush.msra.mxu0 0.0
      %3202 = vmatpush.msra.mxu0 0.0
      %3203 = vmatpush.msra.mxu0 0.0
      %3204 = vmatpush.msra.mxu0 0.0
      %3205 = vmatpush.msra.mxu0 0.0
      %3206 = vmatpush.msra.mxu0 0.0
      %3207 = vmatpush.msra.mxu0 %v3182
      %3208 = vmatmul.f32.gmra.mxu0 %v3184
      %v3209 = vpop.f32.mrf.mxu0
      %v3210 = vadd.f32 0.0, %v3209
      %3211 = vmatmul.f32.gmra.mxu0 %v3187
      %v3212 = vpop.f32.mrf.mxu0
      %v3213 = vadd.f32 0.0, %v3212
      %3214 = vmatmul.f32.gmra.mxu0 %v3190
      %v3215 = vpop.f32.mrf.mxu0
      %v3216 = vadd.f32 0.0, %v3215
      %3217 = vdwg.mxu0
      %v3218 = vld [vmem:[%s87] sm:$0xff]
      %v3219 = vld [vmem:[%s89] sm:$0x1]
      %v3221 = vperm.slane %v3219, 0
      %3223 = vmatpush.msra.mxu0 0.0
      %3224 = vmatpush.msra.mxu0 0.0
      %3225 = vmatpush.msra.mxu0 0.0
      %3226 = vmatpush.msra.mxu0 0.0
      %3227 = vmatpush.msra.mxu0 0.0
      %3228 = vmatpush.msra.mxu0 0.0
      %3229 = vmatpush.msra.mxu0 0.0
      %3230 = vmatpush.msra.mxu0 0.0
      %3231 = vmatpush.msra.mxu0 0.0
      %3232 = vmatpush.msra.mxu0 0.0
      %3233 = vmatpush.msra.mxu0 0.0
      %3234 = vmatpush.msra.mxu0 0.0
      %3235 = vmatpush.msra.mxu0 0.0
      %3236 = vmatpush.msra.mxu0 0.0
      %3237 = vmatpush.msra.mxu0 0.0
      %3238 = vmatpush.msra.mxu0 %v3218
      %3239 = vmatmul.f32.gmra.mxu0 %v3184
      %v3240 = vpop.f32.mrf.mxu0
      %v3241 = vadd.f32 %v3221, %v3240
      %3242 = vmatmul.f32.gmra.mxu0 %v3187
      %v3243 = vpop.f32.mrf.mxu0
      %v3244 = vadd.f32 %v3221, %v3243
      %3245 = vmatmul.f32.gmra.mxu0 %v3190
      %v3246 = vpop.f32.mrf.mxu0
      %v3247 = vadd.f32 %v3221, %v3246
      %3248 = vdwg.mxu0
      %3249 = vmatpush.msra.mxu0 0.0
      %3250 = vmatpush.msra.mxu0 0.0
      %3251 = vmatpush.msra.mxu0 0.0
      %3252 = vmatpush.msra.mxu0 0.0
      %3253 = vmatpush.msra.mxu0 0.0
      %3254 = vmatpush.msra.mxu0 0.0
      %3255 = vmatpush.msra.mxu0 0.0
      %3256 = vmatpush.msra.mxu0 0.0
      %3257 = vmatpush.msra.mxu0 0.0
      %3258 = vmatpush.msra.mxu0 0.0
      %3259 = vmatpush.msra.mxu0 0.0
      %3260 = vmatpush.msra.mxu0 0.0
      %3261 = vmatpush.msra.mxu0 0.0
      %3262 = vmatpush.msra.mxu0 %v3216
      %3263 = vmatpush.msra.mxu0 %v3213
      %3264 = vmatpush.msra.mxu0 %v3210
      %3265 = vmatmul.f32.gmra.mxu0 %v1666
      %v3266 = vpop.f32.mrf.mxu0
      %v3267 = vadd.f32 0.0, %v3266
      %3268 = vmatmul.f32.gmra.mxu0 %v1669
      %v3269 = vpop.f32.mrf.mxu0
      %v3270 = vadd.f32 0.0, %v3269
      %3271 = vmatmul.f32.gmra.mxu0 %v1672
      %v3272 = vpop.f32.mrf.mxu0
      %v3273 = vadd.f32 0.0, %v3272
      %3274 = vmatmul.f32.gmra.mxu0 %v1675
      %v3275 = vpop.f32.mrf.mxu0
      %v3276 = vadd.f32 0.0, %v3275
      %3277 = vmatmul.f32.gmra.mxu0 %v1678
      %v3278 = vpop.f32.mrf.mxu0
      %v3279 = vadd.f32 0.0, %v3278
      %3280 = vmatmul.f32.gmra.mxu0 %v1681
      %v3281 = vpop.f32.mrf.mxu0
      %v3282 = vadd.f32 0.0, %v3281
      %3283 = vmatmul.f32.gmra.mxu0 %v1684
      %v3284 = vpop.f32.mrf.mxu0
      %v3285 = vadd.f32 0.0, %v3284
      %3286 = vmatmul.f32.gmra.mxu0 %v1687
      %v3287 = vpop.f32.mrf.mxu0
      %v3288 = vadd.f32 0.0, %v3287
      %3289 = vmatmul.f32.gmra.mxu0 %v1690
      %v3290 = vpop.f32.mrf.mxu0
      %v3291 = vadd.f32 0.0, %v3290
      %3292 = vmatmul.f32.gmra.mxu0 %v1693
      %v3293 = vpop.f32.mrf.mxu0
      %v3294 = vadd.f32 0.0, %v3293
      %3295 = vmatmul.f32.gmra.mxu0 %v1696
      %v3296 = vpop.f32.mrf.mxu0
      %v3297 = vadd.f32 0.0, %v3296
      %3298 = vmatmul.f32.gmra.mxu0 %v1699
      %v3299 = vpop.f32.mrf.mxu0
      %v3300 = vadd.f32 0.0, %v3299
      %3301 = vdwg.mxu0
      %v3302 = vmax.f32 %v3267, %v3276
      %v3303 = vmax.f32 %v3270, %v3279
      %v3304 = vmax.f32 %v3273, %v3282
      %v3305 = vmax.f32 %v3302, %v3285
      %v3306 = vmax.f32 %v3303, %v3288
      %v3307 = vmax.f32 %v3304, %v3291
      %v3308 = vmax.f32 %v3305, %v3294
      %v3309 = vmax.f32 %v3306, %v3297
      %v3310 = vmax.f32 %v3307, %v3300
      %v3311 = vadd.f32 %v3308, %v3241
      %v3312 = vadd.f32 %v3309, %v3244
      %v3313 = vadd.f32 %v3310, %v3247
      %v3314 = vmul.f32 %v3311, 0.2
      %v3315 = vmul.f32 %v3312, 0.2
      %v3316 = vmul.f32 %v3313, 0.2
      %v3317 = vmax.f32 %v3311, %v3314
      %v3318 = vmax.f32 %v3312, %v3315
      %v3319 = vmax.f32 %v3313, %v3316
      %v3320 = vld [vmem:[%s97] sm:$0x1]
      %v3321 = vld [vmem:[%s91] sm:$0xff]
      %v3322 = vld [vmem:[%s91 + $0x8] sm:$0xff]
      %3323 = vmatpush.msra.mxu0 0.0
      %3324 = vmatpush.msra.mxu0 0.0
      %3325 = vmatpush.msra.mxu0 0.0
      %3326 = vmatpush.msra.mxu0 0.0
      %3327 = vmatpush.msra.mxu0 0.0
      %3328 = vmatpush.msra.mxu0 0.0
      %3329 = vmatpush.msra.mxu0 0.0
      %3330 = vmatpush.msra.mxu0 0.0
      %3331 = vmatpush.msra.mxu0 0.0
      %3332 = vmatpush.msra.mxu0 0.0
      %3333 = vmatpush.msra.mxu0 0.0
      %3334 = vmatpush.msra.mxu0 0.0
      %3335 = vmatpush.msra.mxu0 0.0
      %3336 = vmatpush.msra.mxu0 0.0
      %3337 = vmatpush.msra.mxu0 %v3322
      %3338 = vmatpush.msra.mxu0 %v3321
      %3339 = vmatmul.f32.gmra.mxu0 %v3045
      %v3340 = vpop.f32.mrf.mxu0
      %v3341 = vadd.f32 0.0, %v3340
      %3342 = vmatmul.f32.gmra.mxu0 %v3048
      %v3343 = vpop.f32.mrf.mxu0
      %v3344 = vadd.f32 0.0, %v3343
      %3345 = vmatmul.f32.gmra.mxu0 %v3051
      %v3346 = vpop.f32.mrf.mxu0
      %v3347 = vadd.f32 0.0, %v3346
      %3348 = vdwg.mxu0
      %v3350 = vperm.slane %v3320, 0
      %v3352 = vadd.f32 %v3350, %v3341
      %v3353 = vadd.f32 %v3350, %v3344
      %v3354 = vadd.f32 %v3350, %v3347
      %v3355 = vld [vmem:[%s93] sm:$0xff]
      %3356 = vmatpush.msra.mxu0 0.0
      %3357 = vmatpush.msra.mxu0 0.0
      %3358 = vmatpush.msra.mxu0 0.0
      %3359 = vmatpush.msra.mxu0 0.0
      %3360 = vmatpush.msra.mxu0 0.0
      %3361 = vmatpush.msra.mxu0 0.0
      %3362 = vmatpush.msra.mxu0 0.0
      %3363 = vmatpush.msra.mxu0 0.0
      %3364 = vmatpush.msra.mxu0 0.0
      %3365 = vmatpush.msra.mxu0 0.0
      %3366 = vmatpush.msra.mxu0 0.0
      %3367 = vmatpush.msra.mxu0 0.0
      %3368 = vmatpush.msra.mxu0 0.0
      %3369 = vmatpush.msra.mxu0 0.0
      %3370 = vmatpush.msra.mxu0 0.0
      %3371 = vmatpush.msra.mxu0 %v3355
      %3372 = vmatmul.f32.gmra.mxu0 %v3184
      %v3373 = vpop.f32.mrf.mxu0
      %v3374 = vadd.f32 0.0, %v3373
      %3375 = vmatmul.f32.gmra.mxu0 %v3187
      %v3376 = vpop.f32.mrf.mxu0
      %v3377 = vadd.f32 0.0, %v3376
      %3378 = vmatmul.f32.gmra.mxu0 %v3190
      %v3379 = vpop.f32.mrf.mxu0
      %v3380 = vadd.f32 0.0, %v3379
      %3381 = vdwg.mxu0
      %v3382 = vadd.f32 %v3352, %v3374
      %v3383 = vadd.f32 %v3353, %v3377
      %v3384 = vadd.f32 %v3354, %v3380
      %v3385 = vld [vmem:[%s95] sm:$0xff]
      %v3387 = vsel %vm1914, %v3317, 0
      %v3390 = vsel %vm1914, %v3318, 0
      %v3393 = vsel %vm1914, %v3319, 0
      %3395 = vmatpush.msra.mxu0 0.0
      %3396 = vmatpush.msra.mxu0 0.0
      %3397 = vmatpush.msra.mxu0 0.0
      %3398 = vmatpush.msra.mxu0 0.0
      %3399 = vmatpush.msra.mxu0 0.0
      %3400 = vmatpush.msra.mxu0 0.0
      %3401 = vmatpush.msra.mxu0 0.0
      %3402 = vmatpush.msra.mxu0 0.0
      %3403 = vmatpush.msra.mxu0 0.0
      %3404 = vmatpush.msra.mxu0 0.0
      %3405 = vmatpush.msra.mxu0 0.0
      %3406 = vmatpush.msra.mxu0 0.0
      %3407 = vmatpush.msra.mxu0 0.0
      %3408 = vmatpush.msra.mxu0 0.0
      %3409 = vmatpush.msra.mxu0 0.0
      %3410 = vmatpush.msra.mxu0 %v3385
      %3411 = vmatmul.f32.gmra.mxu0 %v3387
      %v3412 = vpop.f32.mrf.mxu0
      %v3413 = vadd.f32 0.0, %v3412
      %3414 = vmatmul.f32.gmra.mxu0 %v3390
      %v3415 = vpop.f32.mrf.mxu0
      %v3416 = vadd.f32 0.0, %v3415
      %3417 = vmatmul.f32.gmra.mxu0 %v3393
      %v3418 = vpop.f32.mrf.mxu0
      %v3419 = vadd.f32 0.0, %v3418
      %3420 = vdwg.mxu0
      %v3421 = vadd.f32 %v3382, %v3413
      %v3422 = vadd.f32 %v3383, %v3416
      %v3423 = vadd.f32 %v3384, %v3419
      %v3424 = vmul.f32 %v3421, 0.2
      %v3425 = vmul.f32 %v3422, 0.2
      %v3426 = vmul.f32 %v3423, 0.2
      %v3427 = vmax.f32 %v3421, %v3424
      %v3428 = vmax.f32 %v3422, %v3425
      %v3429 = vmax.f32 %v3423, %v3426
      %v3430 = vld [vmem:[%s99] sm:$0xff]
      %v3431 = vld [vmem:[%s99 + $0x8] sm:$0xff]
      %v3432 = vld [vmem:[%s99 + $0x10] sm:$0xff]
      %v3433 = vld [vmem:[%s99 + $0x18] sm:$0xff]
      %v3434 = vld [vmem:[%s99 + $0x20] sm:$0xff]
      %v3435 = vld [vmem:[%s99 + $0x28] sm:$0xff]
      %v3436 = vld [vmem:[%s101] sm:$0x1]
      %v3438 = vperm.slane %v3436, 0
      %v3441 = vsel %vm2226, %v3427, 0
      %v3444 = vsel %vm2226, %v3428, 0
      %v3447 = vsel %vm2226, %v3429, 0
      %3449 = vmatpush.msra.mxu0 0.0
      %3450 = vmatpush.msra.mxu0 0.0
      %3451 = vmatpush.msra.mxu0 0.0
      %3452 = vmatpush.msra.mxu0 0.0
      %3453 = vmatpush.msra.mxu0 0.0
      %3454 = vmatpush.msra.mxu0 0.0
      %3455 = vmatpush.msra.mxu0 0.0
      %3456 = vmatpush.msra.mxu0 0.0
      %3457 = vmatpush.msra.mxu0 0.0
      %3458 = vmatpush.msra.mxu0 0.0
      %3459 = vmatpush.msra.mxu0 %v3435
      %3460 = vmatpush.msra.mxu0 %v3434
      %3461 = vmatpush.msra.mxu0 %v3433
      %3462 = vmatpush.msra.mxu0 %v3432
      %3463 = vmatpush.msra.mxu0 %v3431
      %3464 = vmatpush.msra.mxu0 %v3430
      %3465 = vmatmul.f32.gmra.mxu0 %v3441
      %v3466 = vpop.f32.mrf.mxu0
      %v3467 = vadd.f32 %v3438, %v3466
      %3468 = vmatmul.f32.gmra.mxu0 %v3444
      %v3469 = vpop.f32.mrf.mxu0
      %v3470 = vadd.f32 %v3438, %v3469
      %3471 = vmatmul.f32.gmra.mxu0 %v3447
      %v3472 = vpop.f32.mrf.mxu0
      %v3473 = vadd.f32 %v3438, %v3472
      %3474 = vdwg.mxu0
      %v3475 = vmul.f32 %v3467, 0.2
      %v3476 = vmul.f32 %v3470, 0.2
      %v3477 = vmul.f32 %v3473, 0.2
      %v3478 = vmax.f32 %v3467, %v3475
      %v3479 = vmax.f32 %v3470, %v3476
      %v3480 = vmax.f32 %v3473, %v3477
      %v3481 = vld [vmem:[%s103] sm:$0xff]
      %v3482 = vld [vmem:[%s103 + $0x8] sm:$0xff]
      %v3483 = vld [vmem:[%s103 + $0x10] sm:$0xff]
      %v3484 = vld [vmem:[%s103 + $0x18] sm:$0xff]
      %v3485 = vld [vmem:[%s105] sm:$0x1]
      %v3487 = vperm.slane %v3485, 0
      %v3490 = vsel %vm1594, %v3478, 0
      %v3493 = vsel %vm1594, %v3479, 0
      %v3496 = vsel %vm1594, %v3480, 0
      %3498 = vmatpush.msra.mxu0 0.0
      %3499 = vmatpush.msra.mxu0 0.0
      %3500 = vmatpush.msra.mxu0 0.0
      %3501 = vmatpush.msra.mxu0 0.0
      %3502 = vmatpush.msra.mxu0 0.0
      %3503 = vmatpush.msra.mxu0 0.0
      %3504 = vmatpush.msra.mxu0 0.0
      %3505 = vmatpush.msra.mxu0 0.0
      %3506 = vmatpush.msra.mxu0 0.0
      %3507 = vmatpush.msra.mxu0 0.0
      %3508 = vmatpush.msra.mxu0 0.0
      %3509 = vmatpush.msra.mxu0 0.0
      %3510 = vmatpush.msra.mxu0 %v3484
      %3511 = vmatpush.msra.mxu0 %v3483
      %3512 = vmatpush.msra.mxu0 %v3482
      %3513 = vmatpush.msra.mxu0 %v3481
      %3514 = vmatmul.f32.gmra.mxu0 %v3490
      %v3515 = vpop.f32.mrf.mxu0
      %v3516 = vadd.f32 %v3487, %v3515
      %3517 = vmatmul.f32.gmra.mxu0 %v3493
      %v3518 = vpop.f32.mrf.mxu0
      %v3519 = vadd.f32 %v3487, %v3518
      %3520 = vmatmul.f32.gmra.mxu0 %v3496
      %v3521 = vpop.f32.mrf.mxu0
      %v3522 = vadd.f32 %v3487, %v3521
      %3523 = vdwg.mxu0
      %vm3524 = vcmask 23552
      %3525 = vst.msk [vmem:[%s1574] sm:$0xff] %vm3524, %v3516
      %3526 = vst.msk [vmem:[%s1574 + $0x8] sm:$0xff] %vm3524, %v3519
      %3527 = vst.msk [vmem:[%s1574 + $0x10] sm:$0xff] %vm3524, %v3522
      %p3528 = scmp.lt.s32.totalorder %s118, 1
      %s3529 = scalar_select %p3528, %s118, 1
      %s3530 = smul.addr %s3529, 3
      %s3531 = smul.addr %s3530, 8
      %s3532 = scalar_lea.vmem %s107, %s3531
      // Predicated region
      $region233: #{tpu_custom_call.1} parent=231 // pred_check
        %p3533 = pneg %p1254
      $region234: #{tpu_custom_call.1} parent=231 // pred_check_branch
        %3535 = sbr.rel (%p3533) target = $region236
      $region235: #{tpu_custom_call.1} parent=231 // pred_region
        _
      $region236: #{tpu_custom_call.1} parent=231 // pred_fallthru
        _
    $region232: #{tpu_custom_call.1} parent=5 // pred_fallthru
      _
    %p3536 = scmp.le.s32.totalorder 2, %s113
    // Predicated region
    $region237: #{tpu_custom_call.1} parent=5 // pred_check
      %p3537 = pneg %p3536
    $region238: #{tpu_custom_call.1} parent=5 // pred_check_branch
      %3539 = sbr.rel (%p3537) target = $region240
    $region239: #{tpu_custom_call.1} parent=5 // pred_region
      %s3540 = ssub.s32 %s113, 2
      // Predicated region
      $region241: #{tpu_custom_call.1} parent=239 // pred_check
        %p3541 = pneg %p1260
      $region242: #{tpu_custom_call.1} parent=239 // pred_check_branch
        %3543 = sbr.rel (%p3541) target = $region244
      $region243: #{tpu_custom_call.1} parent=239 // pred_region
        %p3544 = scmp.lt.s32.totalorder %s119, 1
        %s3545 = scalar_select %p3544, %s119, 1
        %s3546 = smul.addr %s3545, 3
        %s3547 = smul.addr %s3546, 8
        %s3548 = scalar_lea.vmem %s107, %s3547
      $region244: #{tpu_custom_call.1} parent=239 // pred_fallthru
        _
    $region240: #{tpu_custom_call.1} parent=5 // pred_fallthru
      _
  $region6: #{tpu_custom_call.1} parent=0 // loop_footer
    %s117 = sadd.s32 1, %s113
  $region7: #{tpu_custom_call.1} parent=0 // loop_footer_branch
    %112 = sbr.rel target = $region3
  $region8: #{tpu_custom_call.1} parent=0 // loop_exit
    _

</llo_original>
